<compile_context>
chip_gen: v5e
topology: v5e:2x2
jax: 0.10.0
libtpu: 0.0.40
codegen_flags: <defaults>
</compile_context>

<pallas_src>
import jax
import jax.numpy as jnp
import numpy as np
from jax import lax
from jax.experimental import pallas as pl
from jax.experimental.pallas import tpu as pltpu

KH, KW, STRIDE, PAD = 4, 4, 2, 1
LANES = 128  # pad every channel dim to the vreg lane width (lane-dense)


# ----------------------------------------------------------------------------
# Pallas kernel (single fused kernel for the whole loss)
# ----------------------------------------------------------------------------
def _conv_taps(y_prev, s_ref, w_ref, b_ref):
    """relu(conv(y_prev)) for both branches via per-tap gather + MXU GEMM.

    y_prev: (R_in, 128) f32  previous activation, rows=(branch, n, y, x),
                             lanes = channels (zero-padded to 128).
    s_ref:  (16*R_out, R_in) bf16 constant 0/1 gather operator; rows that hit
                             the conv zero-padding region are all-zero.
    w_ref:  (16, 128, 128) f32 per-tap weights (zero-padded to 128x128).
    b_ref:  (1, 128) f32 bias (zero-padded).
    Returns (R_out, 128) f32.
    """
    q_total = s_ref.shape[0]
    rows = q_total // (KH * KW)  # R_out = 2 * N * oh * ow
    acc = None
    for t in range(KH * KW):  # static unroll: 16 gather + 16 conv matmuls
        sel = s_ref[t * rows:(t + 1) * rows, :].astype(jnp.float32)
        g_t = jnp.dot(sel, y_prev, preferred_element_type=jnp.float32)
        p_t = jnp.dot(g_t, w_ref[t], preferred_element_type=jnp.float32)
        acc = p_t if acc is None else acc + p_t
    return jnp.maximum(acc + b_ref[...], 0.0)


def fused_loss_kernel(p1_ref, w1_ref, b1_ref,
                      s2_ref, w2_ref, b2_ref,
                      s3_ref, w3_ref, b3_ref,
                      mu_ref, lv_ref, out_ref):
    # ---- layer 1: one lane-dense GEMM for BOTH branches (rows = [x ; recon])
    y1 = jnp.maximum(
        jnp.dot(p1_ref[...], w1_ref[...], preferred_element_type=jnp.float32)
        + b1_ref[...], 0.0)                                   # (2*M1, 128)
    m1 = y1.shape[0] // 2
    d1 = y1[m1:, :] - y1[:m1, :]
    loss = jnp.sum(d1 * d1, keepdims=True)                    # (1, 1)

    # ---- layer 2 (activations stay on-chip)
    y2 = _conv_taps(y1, s2_ref, w2_ref, b2_ref)               # (2*M2, 128)
    m2 = y2.shape[0] // 2
    d2 = y2[m2:, :] - y2[:m2, :]
    loss = loss + jnp.sum(d2 * d2, keepdims=True)

    # ---- layer 3
    y3 = _conv_taps(y2, s3_ref, w3_ref, b3_ref)               # (2*M3, 128)
    m3 = y3.shape[0] // 2
    d3 = y3[m3:, :] - y3[:m3, :]
    loss = loss + jnp.sum(d3 * d3, keepdims=True)

    # ---- KLD fused into the same kernel
    mu = mu_ref[...]
    lv = lv_ref[...]
    kld = -0.5 * jnp.sum(1.0 + lv - mu * mu - jnp.exp(lv), keepdims=True)

    out_ref[...] = loss + kld


# ----------------------------------------------------------------------------
# Host-side constant builders (deterministic, shape-only)
# ----------------------------------------------------------------------------
def make_gather_onehot(n_imgs, in_hw, out_hw, dtype=jnp.bfloat16):
    """0/1 gather operator mapping (tap, out-pixel) rows -> input-pixel rows.

    Row  q = tap*(n_imgs*out_hw^2) + (img*out_hw + oy)*out_hw + ox
    Col  r = (img*in_hw + y)*in_hw + x  with (y, x) = (2*oy-1+i, 2*ox-1+j);
    the row is all-zero when the tap falls in the conv zero-padding region.
    bf16 stores 0.0/1.0 exactly, so the in-kernel gather is exact.
    """
    m_in = n_imgs * in_hw * in_hw
    m_out = n_imgs * out_hw * out_hw
    s = np.zeros((KH * KW * m_out, m_in), dtype=np.float32)
    for i in range(KH):
        for j in range(KW):
            t = i * KW + j
            for img in range(n_imgs):
                for oy in range(out_hw):
                    for ox in range(out_hw):
                        y = STRIDE * oy - PAD + i
                        x = STRIDE * ox - PAD + j
                        if 0 <= y < in_hw and 0 <= x < in_hw:
                            q = t * m_out + (img * out_hw + oy) * out_hw + ox
                            r = (img * in_hw + y) * in_hw + x
                            s[q, r] = 1.0
    return jnp.asarray(s, dtype)


def pack_dense_layer(w_flat, b):
    """Layer-1 weight (K, OC) -> (K, 128) lane-dense; bias -> (1, 128)."""
    k, oc = w_flat.shape
    w_pad = jnp.zeros((k, LANES), jnp.float32).at[:, :oc].set(w_flat)
    b_pad = jnp.zeros((1, LANES), jnp.float32).at[:, :oc].set(b.reshape(1, oc))
    return w_pad, b_pad


def pack_tap_layer(w_flat, b):
    """Per-tap weights (KH*KW*IC, OC) -> (16, 128, 128) lane/sublane padded."""
    k, oc = w_flat.shape
    ic = k // (KH * KW)
    w_taps = w_flat.reshape(KH * KW, ic, oc)
    w_pad = jnp.zeros((KH * KW, LANES, LANES), jnp.float32)
    w_pad = w_pad.at[:, :ic, :oc].set(w_taps)
    b_pad = jnp.zeros((1, LANES), jnp.float32).at[:, :oc].set(b.reshape(1, oc))
    return w_pad, b_pad


# ----------------------------------------------------------------------------
# Glue: im2col for the FIRST layer only (raw 3-channel input, done once)
# ----------------------------------------------------------------------------
def im2col_nhwc(x):
    x = jnp.pad(x, ((0, 0), (PAD, PAD), (PAD, PAD), (0, 0)))
    n, h, w, c = x.shape
    oh = (h - KH) // STRIDE + 1
    ow = (w - KW) // STRIDE + 1
    cols = []
    for i in range(KH):
        for j in range(KW):
            cols.append(
                x[:, i:i + oh * STRIDE:STRIDE, j:j + ow * STRIDE:STRIDE, :])
    p = jnp.stack(cols, axis=3)  # (N, oh, ow, KH*KW, C)
    return p.reshape(n * oh * ow, KH * KW * c), (n, oh, ow)


# ----------------------------------------------------------------------------
# Full loss (== Loss.forward) : ONE pallas_call
# ----------------------------------------------------------------------------
def loss_fn(recon_x, x, mu, logvar, params):
    n, h, _, _ = x.shape
    (w1f, b1f), (w2f, b2f), (w3f, b3f) = params

    # Both branches stacked along rows -> one GEMM per layer serves x & recon.
    xr = jnp.concatenate([x, recon_x], axis=0)     # x-branch rows come first
    p1, _ = im2col_nhwc(xr)                        # (2*N*oh1*ow1, KH*KW*IC)

    w1, b1 = pack_dense_layer(w1f, b1f)
    w2, b2 = pack_tap_layer(w2f, b2f)
    w3, b3 = pack_tap_layer(w3f, b3f)

    oh1, oh2, oh3 = h // 2, h // 4, h // 8
    s2 = make_gather_onehot(2 * n, oh1, oh2)       # gather for layer-2 patches
    s3 = make_gather_onehot(2 * n, oh2, oh3)       # gather for layer-3 patches

    vmem = pl.BlockSpec(memory_space=pltpu.MemorySpace.VMEM)
    out = pl.pallas_call(
        fused_loss_kernel,
        out_shape=jax.ShapeDtypeStruct((1, 1), jnp.float32),
        in_specs=[vmem] * 11,
        out_specs=vmem,
        compiler_params=pltpu.CompilerParams(
            vmem_limit_bytes=32 * 1024 * 1024),
    )(p1, w1, b1, s2, w2, b2, s3, w3, b3, mu, logvar)
    return out[0, 0]


# ----------------------------------------------------------------------------
# Pure-JAX reference (lax.conv based) for a sanity check.
# ----------------------------------------------------------------------------
def reference_loss(recon_x, x, mu, logvar, params):
    mse = jnp.float32(0.0)
    cx, cr = x, recon_x
    for w_flat, b in params:
        oc = w_flat.shape[1]
        ic = cx.shape[-1]
        w_hwio = w_flat.reshape(KH, KW, ic, oc)

        def conv(v):
            return lax.conv_general_dilated(
                v, w_hwio, (STRIDE, STRIDE), ((PAD, PAD), (PAD, PAD)),
                dimension_numbers=("NHWC", "HWIO", "NHWC"),
            )

        yx = jax.nn.relu(conv(cx) + b.reshape(1, 1, 1, oc))
        yr = jax.nn.relu(conv(cr) + b.reshape(1, 1, 1, oc))
        mse = mse + jnp.sum((yr - yx) ** 2)
        cx, cr = yx, yr
    k = -0.5 * jnp.sum(1.0 + logvar - mu * mu - jnp.exp(logvar))
    return mse + k


# ----------------------------------------------------------------------------
if __name__ == "__main__":
    key = jax.random.PRNGKey(0)
    k_x, k_r, k_mu, k_lv, k_w1, k_b1, k_w2, k_b2, k_w3, k_b3 = jax.random.split(key, 10)

    # Small shapes: batch=2, 3 input channels, 16x16 spatial, latent=32, conv_dim=8.
    N, H, W, IC = 2, 16, 16, 3
    CONV_DIM, LATENT = 8, 32

    x = jax.random.normal(k_x, (N, H, W, IC), dtype=jnp.float32)        # NHWC
    recon_x = x + 0.1 * jax.random.normal(k_r, (N, H, W, IC), dtype=jnp.float32)
    mu = jax.random.normal(k_mu, (N, LATENT), dtype=jnp.float32)
    logvar = 0.1 * jax.random.normal(k_lv, (N, LATENT), dtype=jnp.float32)

    # Deterministic frozen DFCNet params (conv weights flattened to (KH*KW*IC, OC)).
    def make_layer(kw_key, kb_key, ic, oc):
        w = 0.05 * jax.random.normal(kw_key, (KH * KW * ic, oc), dtype=jnp.float32)
        b = 0.05 * jax.random.normal(kb_key, (1, oc), dtype=jnp.float32)
        return w, b

    params = [
        make_layer(k_w1, k_b1, IC, CONV_DIM),
        make_layer(k_w2, k_b2, CONV_DIM, 2 * CONV_DIM),
        make_layer(k_w3, k_b3, 2 * CONV_DIM, 4 * CONV_DIM),
    ]

    out = jax.block_until_ready(loss_fn(recon_x, x, mu, logvar, params))
    ref = jax.block_until_ready(reference_loss(recon_x, x, mu, logvar, params))

    assert jnp.isfinite(out), "non-finite loss"
    assert abs(float(out) - float(ref)) <= 1e-2 + 2e-2 * abs(float(ref)), (
        f"mismatch: pallas={float(out)} ref={float(ref)}"
    )
    print("KERNEL_OK")
</pallas_src>

<mosaic_0001>
module attributes {stable_mosaic.version = 11 : i64} {
  func.func @fused_loss_kernel(%arg0: memref<256x48xf32, #tpu.memory_space<vmem>>, %arg1: memref<48x128xf32, #tpu.memory_space<vmem>>, %arg2: memref<1x128xf32, #tpu.memory_space<vmem>>, %arg3: memref<1024x256xbf16, #tpu.memory_space<vmem>>, %arg4: memref<16x128x128xf32, #tpu.memory_space<vmem>>, %arg5: memref<1x128xf32, #tpu.memory_space<vmem>>, %arg6: memref<256x64xbf16, #tpu.memory_space<vmem>>, %arg7: memref<16x128x128xf32, #tpu.memory_space<vmem>>, %arg8: memref<1x128xf32, #tpu.memory_space<vmem>>, %arg9: memref<2x32xf32, #tpu.memory_space<vmem>>, %arg10: memref<2x32xf32, #tpu.memory_space<vmem>>, %arg11: memref<1x1xf32, #tpu.memory_space<vmem>>) attributes {dimension_semantics = [], scalar_prefetch = 0 : i64, scratch_operands = 0 : i64, tpu.core_type = #tpu.core_type<tc>} {
    %c0 = arith.constant 0 : index
    %c0_0 = arith.constant 0 : index
    %0 = vector.load %arg0[%c0, %c0_0] : memref<256x48xf32, #tpu.memory_space<vmem>>, vector<256x48xf32>
    %c0_1 = arith.constant 0 : index
    %c0_2 = arith.constant 0 : index
    %1 = vector.load %arg1[%c0_1, %c0_2] : memref<48x128xf32, #tpu.memory_space<vmem>>, vector<48x128xf32>
    %cst = arith.constant dense<0.000000e+00> : vector<256x128xf32>
    %2 = tpu.matmul %0, %1, %cst {dimension_numbers = #tpu.dot_dimension_numbers<[1], [0], [0], [1], [0, 0, 1, 1], [], []>} : vector<256x48xf32>, vector<48x128xf32>, vector<256x128xf32> -> vector<256x128xf32>
    %c0_3 = arith.constant 0 : index
    %c0_4 = arith.constant 0 : index
    %3 = vector.load %arg2[%c0_3, %c0_4] : memref<1x128xf32, #tpu.memory_space<vmem>>, vector<1x128xf32>
    %4 = vector.broadcast %3 : vector<1x128xf32> to vector<256x128xf32>
    %5 = arith.addf %2, %4 : vector<256x128xf32>
    %cst_5 = arith.constant 0.000000e+00 : f32
    %6 = vector.broadcast %cst_5 : f32 to vector<256x128xf32>
    %7 = arith.maximumf %5, %6 : vector<256x128xf32>
    %8 = vector.extract_strided_slice %7 {offsets = [128, 0], sizes = [128, 128], strides = [1, 1]} : vector<256x128xf32> to vector<128x128xf32>
    %9 = vector.extract_strided_slice %7 {offsets = [0, 0], sizes = [128, 128], strides = [1, 1]} : vector<256x128xf32> to vector<128x128xf32>
    %10 = arith.subf %8, %9 : vector<128x128xf32>
    %11 = arith.mulf %10, %10 : vector<128x128xf32>
    %12 = vector.shape_cast %11 : vector<128x128xf32> to vector<1x128x128xf32>
    %cst_6 = arith.constant dense<0.000000e+00> : vector<1xf32>
    %13 = vector.multi_reduction <add>, %12, %cst_6 [1, 2] : vector<1x128x128xf32> to vector<1xf32>
    %14 = vector.shape_cast %13 : vector<1xf32> to vector<1x1x1xf32>
    %15 = vector.extract %14[0, 0, 0] : f32 from vector<1x1x1xf32>
    %16 = vector.broadcast %15 : f32 to vector<1x1xf32>
    %c0_7 = arith.constant 0 : index
    %c0_8 = arith.constant 0 : index
    %17 = vector.load %arg3[%c0_7, %c0_8] : memref<1024x256xbf16, #tpu.memory_space<vmem>>, vector<64x256xbf16>
    %18 = arith.extf %17 : vector<64x256xbf16> to vector<64x256xf32>
    %cst_9 = arith.constant dense<0.000000e+00> : vector<64x128xf32>
    %19 = tpu.matmul %18, %7, %cst_9 {dimension_numbers = #tpu.dot_dimension_numbers<[1], [0], [0], [1], [0, 0, 1, 1], [], []>} : vector<64x256xf32>, vector<256x128xf32>, vector<64x128xf32> -> vector<64x128xf32>
    %c0_10 = arith.constant 0 : index
    %c0_11 = arith.constant 0 : index
    %c0_12 = arith.constant 0 : index
    %20 = vector.load %arg4[%c0_10, %c0_11, %c0_12] : memref<16x128x128xf32, #tpu.memory_space<vmem>>, vector<1x128x128xf32>
    %21 = vector.shape_cast %20 : vector<1x128x128xf32> to vector<128x128xf32>
    %cst_13 = arith.constant dense<0.000000e+00> : vector<64x128xf32>
    %22 = tpu.matmul %19, %21, %cst_13 {dimension_numbers = #tpu.dot_dimension_numbers<[1], [0], [0], [1], [0, 0, 1, 1], [], []>} : vector<64x128xf32>, vector<128x128xf32>, vector<64x128xf32> -> vector<64x128xf32>
    %c64 = arith.constant 64 : index
    %c0_14 = arith.constant 0 : index
    %23 = vector.load %arg3[%c64, %c0_14] : memref<1024x256xbf16, #tpu.memory_space<vmem>>, vector<64x256xbf16>
    %24 = arith.extf %23 : vector<64x256xbf16> to vector<64x256xf32>
    %cst_15 = arith.constant dense<0.000000e+00> : vector<64x128xf32>
    %25 = tpu.matmul %24, %7, %cst_15 {dimension_numbers = #tpu.dot_dimension_numbers<[1], [0], [0], [1], [0, 0, 1, 1], [], []>} : vector<64x256xf32>, vector<256x128xf32>, vector<64x128xf32> -> vector<64x128xf32>
    %c1 = arith.constant 1 : index
    %c0_16 = arith.constant 0 : index
    %c0_17 = arith.constant 0 : index
    %26 = vector.load %arg4[%c1, %c0_16, %c0_17] : memref<16x128x128xf32, #tpu.memory_space<vmem>>, vector<1x128x128xf32>
    %27 = vector.shape_cast %26 : vector<1x128x128xf32> to vector<128x128xf32>
    %cst_18 = arith.constant dense<0.000000e+00> : vector<64x128xf32>
    %28 = tpu.matmul %25, %27, %cst_18 {dimension_numbers = #tpu.dot_dimension_numbers<[1], [0], [0], [1], [0, 0, 1, 1], [], []>} : vector<64x128xf32>, vector<128x128xf32>, vector<64x128xf32> -> vector<64x128xf32>
    %29 = arith.addf %22, %28 : vector<64x128xf32>
    %c128 = arith.constant 128 : index
    %c0_19 = arith.constant 0 : index
    %30 = vector.load %arg3[%c128, %c0_19] : memref<1024x256xbf16, #tpu.memory_space<vmem>>, vector<64x256xbf16>
    %31 = arith.extf %30 : vector<64x256xbf16> to vector<64x256xf32>
    %cst_20 = arith.constant dense<0.000000e+00> : vector<64x128xf32>
    %32 = tpu.matmul %31, %7, %cst_20 {dimension_numbers = #tpu.dot_dimension_numbers<[1], [0], [0], [1], [0, 0, 1, 1], [], []>} : vector<64x256xf32>, vector<256x128xf32>, vector<64x128xf32> -> vector<64x128xf32>
    %c2 = arith.constant 2 : index
    %c0_21 = arith.constant 0 : index
    %c0_22 = arith.constant 0 : index
    %33 = vector.load %arg4[%c2, %c0_21, %c0_22] : memref<16x128x128xf32, #tpu.memory_space<vmem>>, vector<1x128x128xf32>
    %34 = vector.shape_cast %33 : vector<1x128x128xf32> to vector<128x128xf32>
    %cst_23 = arith.constant dense<0.000000e+00> : vector<64x128xf32>
    %35 = tpu.matmul %32, %34, %cst_23 {dimension_numbers = #tpu.dot_dimension_numbers<[1], [0], [0], [1], [0, 0, 1, 1], [], []>} : vector<64x128xf32>, vector<128x128xf32>, vector<64x128xf32> -> vector<64x128xf32>
    %36 = arith.addf %29, %35 : vector<64x128xf32>
    %c192 = arith.constant 192 : index
    %c0_24 = arith.constant 0 : index
    %37 = vector.load %arg3[%c192, %c0_24] : memref<1024x256xbf16, #tpu.memory_space<vmem>>, vector<64x256xbf16>
    %38 = arith.extf %37 : vector<64x256xbf16> to vector<64x256xf32>
    %cst_25 = arith.constant dense<0.000000e+00> : vector<64x128xf32>
    %39 = tpu.matmul %38, %7, %cst_25 {dimension_numbers = #tpu.dot_dimension_numbers<[1], [0], [0], [1], [0, 0, 1, 1], [], []>} : vector<64x256xf32>, vector<256x128xf32>, vector<64x128xf32> -> vector<64x128xf32>
    %c3 = arith.constant 3 : index
    %c0_26 = arith.constant 0 : index
    %c0_27 = arith.constant 0 : index
    %40 = vector.load %arg4[%c3, %c0_26, %c0_27] : memref<16x128x128xf32, #tpu.memory_space<vmem>>, vector<1x128x128xf32>
    %41 = vector.shape_cast %40 : vector<1x128x128xf32> to vector<128x128xf32>
    %cst_28 = arith.constant dense<0.000000e+00> : vector<64x128xf32>
    %42 = tpu.matmul %39, %41, %cst_28 {dimension_numbers = #tpu.dot_dimension_numbers<[1], [0], [0], [1], [0, 0, 1, 1], [], []>} : vector<64x128xf32>, vector<128x128xf32>, vector<64x128xf32> -> vector<64x128xf32>
    %43 = arith.addf %36, %42 : vector<64x128xf32>
    %c256 = arith.constant 256 : index
    %c0_29 = arith.constant 0 : index
    %44 = vector.load %arg3[%c256, %c0_29] : memref<1024x256xbf16, #tpu.memory_space<vmem>>, vector<64x256xbf16>
    %45 = arith.extf %44 : vector<64x256xbf16> to vector<64x256xf32>
    %cst_30 = arith.constant dense<0.000000e+00> : vector<64x128xf32>
    %46 = tpu.matmul %45, %7, %cst_30 {dimension_numbers = #tpu.dot_dimension_numbers<[1], [0], [0], [1], [0, 0, 1, 1], [], []>} : vector<64x256xf32>, vector<256x128xf32>, vector<64x128xf32> -> vector<64x128xf32>
    %c4 = arith.constant 4 : index
    %c0_31 = arith.constant 0 : index
    %c0_32 = arith.constant 0 : index
    %47 = vector.load %arg4[%c4, %c0_31, %c0_32] : memref<16x128x128xf32, #tpu.memory_space<vmem>>, vector<1x128x128xf32>
    %48 = vector.shape_cast %47 : vector<1x128x128xf32> to vector<128x128xf32>
    %cst_33 = arith.constant dense<0.000000e+00> : vector<64x128xf32>
    %49 = tpu.matmul %46, %48, %cst_33 {dimension_numbers = #tpu.dot_dimension_numbers<[1], [0], [0], [1], [0, 0, 1, 1], [], []>} : vector<64x128xf32>, vector<128x128xf32>, vector<64x128xf32> -> vector<64x128xf32>
    %50 = arith.addf %43, %49 : vector<64x128xf32>
    %c320 = arith.constant 320 : index
    %c0_34 = arith.constant 0 : index
    %51 = vector.load %arg3[%c320, %c0_34] : memref<1024x256xbf16, #tpu.memory_space<vmem>>, vector<64x256xbf16>
    %52 = arith.extf %51 : vector<64x256xbf16> to vector<64x256xf32>
    %cst_35 = arith.constant dense<0.000000e+00> : vector<64x128xf32>
    %53 = tpu.matmul %52, %7, %cst_35 {dimension_numbers = #tpu.dot_dimension_numbers<[1], [0], [0], [1], [0, 0, 1, 1], [], []>} : vector<64x256xf32>, vector<256x128xf32>, vector<64x128xf32> -> vector<64x128xf32>
    %c5 = arith.constant 5 : index
    %c0_36 = arith.constant 0 : index
    %c0_37 = arith.constant 0 : index
    %54 = vector.load %arg4[%c5, %c0_36, %c0_37] : memref<16x128x128xf32, #tpu.memory_space<vmem>>, vector<1x128x128xf32>
    %55 = vector.shape_cast %54 : vector<1x128x128xf32> to vector<128x128xf32>
    %cst_38 = arith.constant dense<0.000000e+00> : vector<64x128xf32>
    %56 = tpu.matmul %53, %55, %cst_38 {dimension_numbers = #tpu.dot_dimension_numbers<[1], [0], [0], [1], [0, 0, 1, 1], [], []>} : vector<64x128xf32>, vector<128x128xf32>, vector<64x128xf32> -> vector<64x128xf32>
    %57 = arith.addf %50, %56 : vector<64x128xf32>
    %c384 = arith.constant 384 : index
    %c0_39 = arith.constant 0 : index
    %58 = vector.load %arg3[%c384, %c0_39] : memref<1024x256xbf16, #tpu.memory_space<vmem>>, vector<64x256xbf16>
    %59 = arith.extf %58 : vector<64x256xbf16> to vector<64x256xf32>
    %cst_40 = arith.constant dense<0.000000e+00> : vector<64x128xf32>
    %60 = tpu.matmul %59, %7, %cst_40 {dimension_numbers = #tpu.dot_dimension_numbers<[1], [0], [0], [1], [0, 0, 1, 1], [], []>} : vector<64x256xf32>, vector<256x128xf32>, vector<64x128xf32> -> vector<64x128xf32>
    %c6 = arith.constant 6 : index
    %c0_41 = arith.constant 0 : index
    %c0_42 = arith.constant 0 : index
    %61 = vector.load %arg4[%c6, %c0_41, %c0_42] : memref<16x128x128xf32, #tpu.memory_space<vmem>>, vector<1x128x128xf32>
    %62 = vector.shape_cast %61 : vector<1x128x128xf32> to vector<128x128xf32>
    %cst_43 = arith.constant dense<0.000000e+00> : vector<64x128xf32>
    %63 = tpu.matmul %60, %62, %cst_43 {dimension_numbers = #tpu.dot_dimension_numbers<[1], [0], [0], [1], [0, 0, 1, 1], [], []>} : vector<64x128xf32>, vector<128x128xf32>, vector<64x128xf32> -> vector<64x128xf32>
    %64 = arith.addf %57, %63 : vector<64x128xf32>
    %c448 = arith.constant 448 : index
    %c0_44 = arith.constant 0 : index
    %65 = vector.load %arg3[%c448, %c0_44] : memref<1024x256xbf16, #tpu.memory_space<vmem>>, vector<64x256xbf16>
    %66 = arith.extf %65 : vector<64x256xbf16> to vector<64x256xf32>
    %cst_45 = arith.constant dense<0.000000e+00> : vector<64x128xf32>
    %67 = tpu.matmul %66, %7, %cst_45 {dimension_numbers = #tpu.dot_dimension_numbers<[1], [0], [0], [1], [0, 0, 1, 1], [], []>} : vector<64x256xf32>, vector<256x128xf32>, vector<64x128xf32> -> vector<64x128xf32>
    %c7 = arith.constant 7 : index
    %c0_46 = arith.constant 0 : index
    %c0_47 = arith.constant 0 : index
    %68 = vector.load %arg4[%c7, %c0_46, %c0_47] : memref<16x128x128xf32, #tpu.memory_space<vmem>>, vector<1x128x128xf32>
    %69 = vector.shape_cast %68 : vector<1x128x128xf32> to vector<128x128xf32>
    %cst_48 = arith.constant dense<0.000000e+00> : vector<64x128xf32>
    %70 = tpu.matmul %67, %69, %cst_48 {dimension_numbers = #tpu.dot_dimension_numbers<[1], [0], [0], [1], [0, 0, 1, 1], [], []>} : vector<64x128xf32>, vector<128x128xf32>, vector<64x128xf32> -> vector<64x128xf32>
    %71 = arith.addf %64, %70 : vector<64x128xf32>
    %c512 = arith.constant 512 : index
    %c0_49 = arith.constant 0 : index
    %72 = vector.load %arg3[%c512, %c0_49] : memref<1024x256xbf16, #tpu.memory_space<vmem>>, vector<64x256xbf16>
    %73 = arith.extf %72 : vector<64x256xbf16> to vector<64x256xf32>
    %cst_50 = arith.constant dense<0.000000e+00> : vector<64x128xf32>
    %74 = tpu.matmul %73, %7, %cst_50 {dimension_numbers = #tpu.dot_dimension_numbers<[1], [0], [0], [1], [0, 0, 1, 1], [], []>} : vector<64x256xf32>, vector<256x128xf32>, vector<64x128xf32> -> vector<64x128xf32>
    %c8 = arith.constant 8 : index
    %c0_51 = arith.constant 0 : index
    %c0_52 = arith.constant 0 : index
    %75 = vector.load %arg4[%c8, %c0_51, %c0_52] : memref<16x128x128xf32, #tpu.memory_space<vmem>>, vector<1x128x128xf32>
    %76 = vector.shape_cast %75 : vector<1x128x128xf32> to vector<128x128xf32>
    %cst_53 = arith.constant dense<0.000000e+00> : vector<64x128xf32>
    %77 = tpu.matmul %74, %76, %cst_53 {dimension_numbers = #tpu.dot_dimension_numbers<[1], [0], [0], [1], [0, 0, 1, 1], [], []>} : vector<64x128xf32>, vector<128x128xf32>, vector<64x128xf32> -> vector<64x128xf32>
    %78 = arith.addf %71, %77 : vector<64x128xf32>
    %c576 = arith.constant 576 : index
    %c0_54 = arith.constant 0 : index
    %79 = vector.load %arg3[%c576, %c0_54] : memref<1024x256xbf16, #tpu.memory_space<vmem>>, vector<64x256xbf16>
    %80 = arith.extf %79 : vector<64x256xbf16> to vector<64x256xf32>
    %cst_55 = arith.constant dense<0.000000e+00> : vector<64x128xf32>
    %81 = tpu.matmul %80, %7, %cst_55 {dimension_numbers = #tpu.dot_dimension_numbers<[1], [0], [0], [1], [0, 0, 1, 1], [], []>} : vector<64x256xf32>, vector<256x128xf32>, vector<64x128xf32> -> vector<64x128xf32>
    %c9 = arith.constant 9 : index
    %c0_56 = arith.constant 0 : index
    %c0_57 = arith.constant 0 : index
    %82 = vector.load %arg4[%c9, %c0_56, %c0_57] : memref<16x128x128xf32, #tpu.memory_space<vmem>>, vector<1x128x128xf32>
    %83 = vector.shape_cast %82 : vector<1x128x128xf32> to vector<128x128xf32>
    %cst_58 = arith.constant dense<0.000000e+00> : vector<64x128xf32>
    %84 = tpu.matmul %81, %83, %cst_58 {dimension_numbers = #tpu.dot_dimension_numbers<[1], [0], [0], [1], [0, 0, 1, 1], [], []>} : vector<64x128xf32>, vector<128x128xf32>, vector<64x128xf32> -> vector<64x128xf32>
    %85 = arith.addf %78, %84 : vector<64x128xf32>
    %c640 = arith.constant 640 : index
    %c0_59 = arith.constant 0 : index
    %86 = vector.load %arg3[%c640, %c0_59] : memref<1024x256xbf16, #tpu.memory_space<vmem>>, vector<64x256xbf16>
    %87 = arith.extf %86 : vector<64x256xbf16> to vector<64x256xf32>
    %cst_60 = arith.constant dense<0.000000e+00> : vector<64x128xf32>
    %88 = tpu.matmul %87, %7, %cst_60 {dimension_numbers = #tpu.dot_dimension_numbers<[1], [0], [0], [1], [0, 0, 1, 1], [], []>} : vector<64x256xf32>, vector<256x128xf32>, vector<64x128xf32> -> vector<64x128xf32>
    %c10 = arith.constant 10 : index
    %c0_61 = arith.constant 0 : index
    %c0_62 = arith.constant 0 : index
    %89 = vector.load %arg4[%c10, %c0_61, %c0_62] : memref<16x128x128xf32, #tpu.memory_space<vmem>>, vector<1x128x128xf32>
    %90 = vector.shape_cast %89 : vector<1x128x128xf32> to vector<128x128xf32>
    %cst_63 = arith.constant dense<0.000000e+00> : vector<64x128xf32>
    %91 = tpu.matmul %88, %90, %cst_63 {dimension_numbers = #tpu.dot_dimension_numbers<[1], [0], [0], [1], [0, 0, 1, 1], [], []>} : vector<64x128xf32>, vector<128x128xf32>, vector<64x128xf32> -> vector<64x128xf32>
    %92 = arith.addf %85, %91 : vector<64x128xf32>
    %c704 = arith.constant 704 : index
    %c0_64 = arith.constant 0 : index
    %93 = vector.load %arg3[%c704, %c0_64] : memref<1024x256xbf16, #tpu.memory_space<vmem>>, vector<64x256xbf16>
    %94 = arith.extf %93 : vector<64x256xbf16> to vector<64x256xf32>
    %cst_65 = arith.constant dense<0.000000e+00> : vector<64x128xf32>
    %95 = tpu.matmul %94, %7, %cst_65 {dimension_numbers = #tpu.dot_dimension_numbers<[1], [0], [0], [1], [0, 0, 1, 1], [], []>} : vector<64x256xf32>, vector<256x128xf32>, vector<64x128xf32> -> vector<64x128xf32>
    %c11 = arith.constant 11 : index
    %c0_66 = arith.constant 0 : index
    %c0_67 = arith.constant 0 : index
    %96 = vector.load %arg4[%c11, %c0_66, %c0_67] : memref<16x128x128xf32, #tpu.memory_space<vmem>>, vector<1x128x128xf32>
    %97 = vector.shape_cast %96 : vector<1x128x128xf32> to vector<128x128xf32>
    %cst_68 = arith.constant dense<0.000000e+00> : vector<64x128xf32>
    %98 = tpu.matmul %95, %97, %cst_68 {dimension_numbers = #tpu.dot_dimension_numbers<[1], [0], [0], [1], [0, 0, 1, 1], [], []>} : vector<64x128xf32>, vector<128x128xf32>, vector<64x128xf32> -> vector<64x128xf32>
    %99 = arith.addf %92, %98 : vector<64x128xf32>
    %c768 = arith.constant 768 : index
    %c0_69 = arith.constant 0 : index
    %100 = vector.load %arg3[%c768, %c0_69] : memref<1024x256xbf16, #tpu.memory_space<vmem>>, vector<64x256xbf16>
    %101 = arith.extf %100 : vector<64x256xbf16> to vector<64x256xf32>
    %cst_70 = arith.constant dense<0.000000e+00> : vector<64x128xf32>
    %102 = tpu.matmul %101, %7, %cst_70 {dimension_numbers = #tpu.dot_dimension_numbers<[1], [0], [0], [1], [0, 0, 1, 1], [], []>} : vector<64x256xf32>, vector<256x128xf32>, vector<64x128xf32> -> vector<64x128xf32>
    %c12 = arith.constant 12 : index
    %c0_71 = arith.constant 0 : index
    %c0_72 = arith.constant 0 : index
    %103 = vector.load %arg4[%c12, %c0_71, %c0_72] : memref<16x128x128xf32, #tpu.memory_space<vmem>>, vector<1x128x128xf32>
    %104 = vector.shape_cast %103 : vector<1x128x128xf32> to vector<128x128xf32>
    %cst_73 = arith.constant dense<0.000000e+00> : vector<64x128xf32>
    %105 = tpu.matmul %102, %104, %cst_73 {dimension_numbers = #tpu.dot_dimension_numbers<[1], [0], [0], [1], [0, 0, 1, 1], [], []>} : vector<64x128xf32>, vector<128x128xf32>, vector<64x128xf32> -> vector<64x128xf32>
    %106 = arith.addf %99, %105 : vector<64x128xf32>
    %c832 = arith.constant 832 : index
    %c0_74 = arith.constant 0 : index
    %107 = vector.load %arg3[%c832, %c0_74] : memref<1024x256xbf16, #tpu.memory_space<vmem>>, vector<64x256xbf16>
    %108 = arith.extf %107 : vector<64x256xbf16> to vector<64x256xf32>
    %cst_75 = arith.constant dense<0.000000e+00> : vector<64x128xf32>
    %109 = tpu.matmul %108, %7, %cst_75 {dimension_numbers = #tpu.dot_dimension_numbers<[1], [0], [0], [1], [0, 0, 1, 1], [], []>} : vector<64x256xf32>, vector<256x128xf32>, vector<64x128xf32> -> vector<64x128xf32>
    %c13 = arith.constant 13 : index
    %c0_76 = arith.constant 0 : index
    %c0_77 = arith.constant 0 : index
    %110 = vector.load %arg4[%c13, %c0_76, %c0_77] : memref<16x128x128xf32, #tpu.memory_space<vmem>>, vector<1x128x128xf32>
    %111 = vector.shape_cast %110 : vector<1x128x128xf32> to vector<128x128xf32>
    %cst_78 = arith.constant dense<0.000000e+00> : vector<64x128xf32>
    %112 = tpu.matmul %109, %111, %cst_78 {dimension_numbers = #tpu.dot_dimension_numbers<[1], [0], [0], [1], [0, 0, 1, 1], [], []>} : vector<64x128xf32>, vector<128x128xf32>, vector<64x128xf32> -> vector<64x128xf32>
    %113 = arith.addf %106, %112 : vector<64x128xf32>
    %c896 = arith.constant 896 : index
    %c0_79 = arith.constant 0 : index
    %114 = vector.load %arg3[%c896, %c0_79] : memref<1024x256xbf16, #tpu.memory_space<vmem>>, vector<64x256xbf16>
    %115 = arith.extf %114 : vector<64x256xbf16> to vector<64x256xf32>
    %cst_80 = arith.constant dense<0.000000e+00> : vector<64x128xf32>
    %116 = tpu.matmul %115, %7, %cst_80 {dimension_numbers = #tpu.dot_dimension_numbers<[1], [0], [0], [1], [0, 0, 1, 1], [], []>} : vector<64x256xf32>, vector<256x128xf32>, vector<64x128xf32> -> vector<64x128xf32>
    %c14 = arith.constant 14 : index
    %c0_81 = arith.constant 0 : index
    %c0_82 = arith.constant 0 : index
    %117 = vector.load %arg4[%c14, %c0_81, %c0_82] : memref<16x128x128xf32, #tpu.memory_space<vmem>>, vector<1x128x128xf32>
    %118 = vector.shape_cast %117 : vector<1x128x128xf32> to vector<128x128xf32>
    %cst_83 = arith.constant dense<0.000000e+00> : vector<64x128xf32>
    %119 = tpu.matmul %116, %118, %cst_83 {dimension_numbers = #tpu.dot_dimension_numbers<[1], [0], [0], [1], [0, 0, 1, 1], [], []>} : vector<64x128xf32>, vector<128x128xf32>, vector<64x128xf32> -> vector<64x128xf32>
    %120 = arith.addf %113, %119 : vector<64x128xf32>
    %c960 = arith.constant 960 : index
    %c0_84 = arith.constant 0 : index
    %121 = vector.load %arg3[%c960, %c0_84] : memref<1024x256xbf16, #tpu.memory_space<vmem>>, vector<64x256xbf16>
    %122 = arith.extf %121 : vector<64x256xbf16> to vector<64x256xf32>
    %cst_85 = arith.constant dense<0.000000e+00> : vector<64x128xf32>
    %123 = tpu.matmul %122, %7, %cst_85 {dimension_numbers = #tpu.dot_dimension_numbers<[1], [0], [0], [1], [0, 0, 1, 1], [], []>} : vector<64x256xf32>, vector<256x128xf32>, vector<64x128xf32> -> vector<64x128xf32>
    %c15 = arith.constant 15 : index
    %c0_86 = arith.constant 0 : index
    %c0_87 = arith.constant 0 : index
    %124 = vector.load %arg4[%c15, %c0_86, %c0_87] : memref<16x128x128xf32, #tpu.memory_space<vmem>>, vector<1x128x128xf32>
    %125 = vector.shape_cast %124 : vector<1x128x128xf32> to vector<128x128xf32>
    %cst_88 = arith.constant dense<0.000000e+00> : vector<64x128xf32>
    %126 = tpu.matmul %123, %125, %cst_88 {dimension_numbers = #tpu.dot_dimension_numbers<[1], [0], [0], [1], [0, 0, 1, 1], [], []>} : vector<64x128xf32>, vector<128x128xf32>, vector<64x128xf32> -> vector<64x128xf32>
    %127 = arith.addf %120, %126 : vector<64x128xf32>
    %c0_89 = arith.constant 0 : index
    %c0_90 = arith.constant 0 : index
    %128 = vector.load %arg5[%c0_89, %c0_90] : memref<1x128xf32, #tpu.memory_space<vmem>>, vector<1x128xf32>
    %129 = vector.broadcast %128 : vector<1x128xf32> to vector<64x128xf32>
    %130 = arith.addf %127, %129 : vector<64x128xf32>
    %cst_91 = arith.constant 0.000000e+00 : f32
    %131 = vector.broadcast %cst_91 : f32 to vector<64x128xf32>
    %132 = arith.maximumf %130, %131 : vector<64x128xf32>
    %133 = vector.extract_strided_slice %132 {offsets = [32, 0], sizes = [32, 128], strides = [1, 1]} : vector<64x128xf32> to vector<32x128xf32>
    %134 = vector.extract_strided_slice %132 {offsets = [0, 0], sizes = [32, 128], strides = [1, 1]} : vector<64x128xf32> to vector<32x128xf32>
    %135 = arith.subf %133, %134 : vector<32x128xf32>
    %136 = arith.mulf %135, %135 : vector<32x128xf32>
    %137 = vector.shape_cast %136 : vector<32x128xf32> to vector<1x32x128xf32>
    %cst_92 = arith.constant dense<0.000000e+00> : vector<1xf32>
    %138 = vector.multi_reduction <add>, %137, %cst_92 [1, 2] : vector<1x32x128xf32> to vector<1xf32>
    %139 = vector.shape_cast %138 : vector<1xf32> to vector<1x1x1xf32>
    %140 = vector.extract %139[0, 0, 0] : f32 from vector<1x1x1xf32>
    %141 = vector.broadcast %140 : f32 to vector<1x1xf32>
    %142 = arith.addf %16, %141 : vector<1x1xf32>
    %c0_93 = arith.constant 0 : index
    %c0_94 = arith.constant 0 : index
    %143 = vector.load %arg6[%c0_93, %c0_94] : memref<256x64xbf16, #tpu.memory_space<vmem>>, vector<16x64xbf16>
    %144 = arith.extf %143 : vector<16x64xbf16> to vector<16x64xf32>
    %cst_95 = arith.constant dense<0.000000e+00> : vector<16x128xf32>
    %145 = tpu.matmul %144, %132, %cst_95 {dimension_numbers = #tpu.dot_dimension_numbers<[1], [0], [0], [1], [0, 0, 1, 1], [], []>} : vector<16x64xf32>, vector<64x128xf32>, vector<16x128xf32> -> vector<16x128xf32>
    %c0_96 = arith.constant 0 : index
    %c0_97 = arith.constant 0 : index
    %c0_98 = arith.constant 0 : index
    %146 = vector.load %arg7[%c0_96, %c0_97, %c0_98] : memref<16x128x128xf32, #tpu.memory_space<vmem>>, vector<1x128x128xf32>
    %147 = vector.shape_cast %146 : vector<1x128x128xf32> to vector<128x128xf32>
    %cst_99 = arith.constant dense<0.000000e+00> : vector<16x128xf32>
    %148 = tpu.matmul %145, %147, %cst_99 {dimension_numbers = #tpu.dot_dimension_numbers<[1], [0], [0], [1], [0, 0, 1, 1], [], []>} : vector<16x128xf32>, vector<128x128xf32>, vector<16x128xf32> -> vector<16x128xf32>
    %c16 = arith.constant 16 : index
    %c0_100 = arith.constant 0 : index
    %149 = vector.load %arg6[%c16, %c0_100] : memref<256x64xbf16, #tpu.memory_space<vmem>>, vector<16x64xbf16>
    %150 = arith.extf %149 : vector<16x64xbf16> to vector<16x64xf32>
    %cst_101 = arith.constant dense<0.000000e+00> : vector<16x128xf32>
    %151 = tpu.matmul %150, %132, %cst_101 {dimension_numbers = #tpu.dot_dimension_numbers<[1], [0], [0], [1], [0, 0, 1, 1], [], []>} : vector<16x64xf32>, vector<64x128xf32>, vector<16x128xf32> -> vector<16x128xf32>
    %c1_102 = arith.constant 1 : index
    %c0_103 = arith.constant 0 : index
    %c0_104 = arith.constant 0 : index
    %152 = vector.load %arg7[%c1_102, %c0_103, %c0_104] : memref<16x128x128xf32, #tpu.memory_space<vmem>>, vector<1x128x128xf32>
    %153 = vector.shape_cast %152 : vector<1x128x128xf32> to vector<128x128xf32>
    %cst_105 = arith.constant dense<0.000000e+00> : vector<16x128xf32>
    %154 = tpu.matmul %151, %153, %cst_105 {dimension_numbers = #tpu.dot_dimension_numbers<[1], [0], [0], [1], [0, 0, 1, 1], [], []>} : vector<16x128xf32>, vector<128x128xf32>, vector<16x128xf32> -> vector<16x128xf32>
    %155 = arith.addf %148, %154 : vector<16x128xf32>
    %c32 = arith.constant 32 : index
    %c0_106 = arith.constant 0 : index
    %156 = vector.load %arg6[%c32, %c0_106] : memref<256x64xbf16, #tpu.memory_space<vmem>>, vector<16x64xbf16>
    %157 = arith.extf %156 : vector<16x64xbf16> to vector<16x64xf32>
    %cst_107 = arith.constant dense<0.000000e+00> : vector<16x128xf32>
    %158 = tpu.matmul %157, %132, %cst_107 {dimension_numbers = #tpu.dot_dimension_numbers<[1], [0], [0], [1], [0, 0, 1, 1], [], []>} : vector<16x64xf32>, vector<64x128xf32>, vector<16x128xf32> -> vector<16x128xf32>
    %c2_108 = arith.constant 2 : index
    %c0_109 = arith.constant 0 : index
    %c0_110 = arith.constant 0 : index
    %159 = vector.load %arg7[%c2_108, %c0_109, %c0_110] : memref<16x128x128xf32, #tpu.memory_space<vmem>>, vector<1x128x128xf32>
    %160 = vector.shape_cast %159 : vector<1x128x128xf32> to vector<128x128xf32>
    %cst_111 = arith.constant dense<0.000000e+00> : vector<16x128xf32>
    %161 = tpu.matmul %158, %160, %cst_111 {dimension_numbers = #tpu.dot_dimension_numbers<[1], [0], [0], [1], [0, 0, 1, 1], [], []>} : vector<16x128xf32>, vector<128x128xf32>, vector<16x128xf32> -> vector<16x128xf32>
    %162 = arith.addf %155, %161 : vector<16x128xf32>
    %c48 = arith.constant 48 : index
    %c0_112 = arith.constant 0 : index
    %163 = vector.load %arg6[%c48, %c0_112] : memref<256x64xbf16, #tpu.memory_space<vmem>>, vector<16x64xbf16>
    %164 = arith.extf %163 : vector<16x64xbf16> to vector<16x64xf32>
    %cst_113 = arith.constant dense<0.000000e+00> : vector<16x128xf32>
    %165 = tpu.matmul %164, %132, %cst_113 {dimension_numbers = #tpu.dot_dimension_numbers<[1], [0], [0], [1], [0, 0, 1, 1], [], []>} : vector<16x64xf32>, vector<64x128xf32>, vector<16x128xf32> -> vector<16x128xf32>
    %c3_114 = arith.constant 3 : index
    %c0_115 = arith.constant 0 : index
    %c0_116 = arith.constant 0 : index
    %166 = vector.load %arg7[%c3_114, %c0_115, %c0_116] : memref<16x128x128xf32, #tpu.memory_space<vmem>>, vector<1x128x128xf32>
    %167 = vector.shape_cast %166 : vector<1x128x128xf32> to vector<128x128xf32>
    %cst_117 = arith.constant dense<0.000000e+00> : vector<16x128xf32>
    %168 = tpu.matmul %165, %167, %cst_117 {dimension_numbers = #tpu.dot_dimension_numbers<[1], [0], [0], [1], [0, 0, 1, 1], [], []>} : vector<16x128xf32>, vector<128x128xf32>, vector<16x128xf32> -> vector<16x128xf32>
    %169 = arith.addf %162, %168 : vector<16x128xf32>
    %c64_118 = arith.constant 64 : index
    %c0_119 = arith.constant 0 : index
    %170 = vector.load %arg6[%c64_118, %c0_119] : memref<256x64xbf16, #tpu.memory_space<vmem>>, vector<16x64xbf16>
    %171 = arith.extf %170 : vector<16x64xbf16> to vector<16x64xf32>
    %cst_120 = arith.constant dense<0.000000e+00> : vector<16x128xf32>
    %172 = tpu.matmul %171, %132, %cst_120 {dimension_numbers = #tpu.dot_dimension_numbers<[1], [0], [0], [1], [0, 0, 1, 1], [], []>} : vector<16x64xf32>, vector<64x128xf32>, vector<16x128xf32> -> vector<16x128xf32>
    %c4_121 = arith.constant 4 : index
    %c0_122 = arith.constant 0 : index
    %c0_123 = arith.constant 0 : index
    %173 = vector.load %arg7[%c4_121, %c0_122, %c0_123] : memref<16x128x128xf32, #tpu.memory_space<vmem>>, vector<1x128x128xf32>
    %174 = vector.shape_cast %173 : vector<1x128x128xf32> to vector<128x128xf32>
    %cst_124 = arith.constant dense<0.000000e+00> : vector<16x128xf32>
    %175 = tpu.matmul %172, %174, %cst_124 {dimension_numbers = #tpu.dot_dimension_numbers<[1], [0], [0], [1], [0, 0, 1, 1], [], []>} : vector<16x128xf32>, vector<128x128xf32>, vector<16x128xf32> -> vector<16x128xf32>
    %176 = arith.addf %169, %175 : vector<16x128xf32>
    %c80 = arith.constant 80 : index
    %c0_125 = arith.constant 0 : index
    %177 = vector.load %arg6[%c80, %c0_125] : memref<256x64xbf16, #tpu.memory_space<vmem>>, vector<16x64xbf16>
    %178 = arith.extf %177 : vector<16x64xbf16> to vector<16x64xf32>
    %cst_126 = arith.constant dense<0.000000e+00> : vector<16x128xf32>
    %179 = tpu.matmul %178, %132, %cst_126 {dimension_numbers = #tpu.dot_dimension_numbers<[1], [0], [0], [1], [0, 0, 1, 1], [], []>} : vector<16x64xf32>, vector<64x128xf32>, vector<16x128xf32> -> vector<16x128xf32>
    %c5_127 = arith.constant 5 : index
    %c0_128 = arith.constant 0 : index
    %c0_129 = arith.constant 0 : index
    %180 = vector.load %arg7[%c5_127, %c0_128, %c0_129] : memref<16x128x128xf32, #tpu.memory_space<vmem>>, vector<1x128x128xf32>
    %181 = vector.shape_cast %180 : vector<1x128x128xf32> to vector<128x128xf32>
    %cst_130 = arith.constant dense<0.000000e+00> : vector<16x128xf32>
    %182 = tpu.matmul %179, %181, %cst_130 {dimension_numbers = #tpu.dot_dimension_numbers<[1], [0], [0], [1], [0, 0, 1, 1], [], []>} : vector<16x128xf32>, vector<128x128xf32>, vector<16x128xf32> -> vector<16x128xf32>
    %183 = arith.addf %176, %182 : vector<16x128xf32>
    %c96 = arith.constant 96 : index
    %c0_131 = arith.constant 0 : index
    %184 = vector.load %arg6[%c96, %c0_131] : memref<256x64xbf16, #tpu.memory_space<vmem>>, vector<16x64xbf16>
    %185 = arith.extf %184 : vector<16x64xbf16> to vector<16x64xf32>
    %cst_132 = arith.constant dense<0.000000e+00> : vector<16x128xf32>
    %186 = tpu.matmul %185, %132, %cst_132 {dimension_numbers = #tpu.dot_dimension_numbers<[1], [0], [0], [1], [0, 0, 1, 1], [], []>} : vector<16x64xf32>, vector<64x128xf32>, vector<16x128xf32> -> vector<16x128xf32>
    %c6_133 = arith.constant 6 : index
    %c0_134 = arith.constant 0 : index
    %c0_135 = arith.constant 0 : index
    %187 = vector.load %arg7[%c6_133, %c0_134, %c0_135] : memref<16x128x128xf32, #tpu.memory_space<vmem>>, vector<1x128x128xf32>
    %188 = vector.shape_cast %187 : vector<1x128x128xf32> to vector<128x128xf32>
    %cst_136 = arith.constant dense<0.000000e+00> : vector<16x128xf32>
    %189 = tpu.matmul %186, %188, %cst_136 {dimension_numbers = #tpu.dot_dimension_numbers<[1], [0], [0], [1], [0, 0, 1, 1], [], []>} : vector<16x128xf32>, vector<128x128xf32>, vector<16x128xf32> -> vector<16x128xf32>
    %190 = arith.addf %183, %189 : vector<16x128xf32>
    %c112 = arith.constant 112 : index
    %c0_137 = arith.constant 0 : index
    %191 = vector.load %arg6[%c112, %c0_137] : memref<256x64xbf16, #tpu.memory_space<vmem>>, vector<16x64xbf16>
    %192 = arith.extf %191 : vector<16x64xbf16> to vector<16x64xf32>
    %cst_138 = arith.constant dense<0.000000e+00> : vector<16x128xf32>
    %193 = tpu.matmul %192, %132, %cst_138 {dimension_numbers = #tpu.dot_dimension_numbers<[1], [0], [0], [1], [0, 0, 1, 1], [], []>} : vector<16x64xf32>, vector<64x128xf32>, vector<16x128xf32> -> vector<16x128xf32>
    %c7_139 = arith.constant 7 : index
    %c0_140 = arith.constant 0 : index
    %c0_141 = arith.constant 0 : index
    %194 = vector.load %arg7[%c7_139, %c0_140, %c0_141] : memref<16x128x128xf32, #tpu.memory_space<vmem>>, vector<1x128x128xf32>
    %195 = vector.shape_cast %194 : vector<1x128x128xf32> to vector<128x128xf32>
    %cst_142 = arith.constant dense<0.000000e+00> : vector<16x128xf32>
    %196 = tpu.matmul %193, %195, %cst_142 {dimension_numbers = #tpu.dot_dimension_numbers<[1], [0], [0], [1], [0, 0, 1, 1], [], []>} : vector<16x128xf32>, vector<128x128xf32>, vector<16x128xf32> -> vector<16x128xf32>
    %197 = arith.addf %190, %196 : vector<16x128xf32>
    %c128_143 = arith.constant 128 : index
    %c0_144 = arith.constant 0 : index
    %198 = vector.load %arg6[%c128_143, %c0_144] : memref<256x64xbf16, #tpu.memory_space<vmem>>, vector<16x64xbf16>
    %199 = arith.extf %198 : vector<16x64xbf16> to vector<16x64xf32>
    %cst_145 = arith.constant dense<0.000000e+00> : vector<16x128xf32>
    %200 = tpu.matmul %199, %132, %cst_145 {dimension_numbers = #tpu.dot_dimension_numbers<[1], [0], [0], [1], [0, 0, 1, 1], [], []>} : vector<16x64xf32>, vector<64x128xf32>, vector<16x128xf32> -> vector<16x128xf32>
    %c8_146 = arith.constant 8 : index
    %c0_147 = arith.constant 0 : index
    %c0_148 = arith.constant 0 : index
    %201 = vector.load %arg7[%c8_146, %c0_147, %c0_148] : memref<16x128x128xf32, #tpu.memory_space<vmem>>, vector<1x128x128xf32>
    %202 = vector.shape_cast %201 : vector<1x128x128xf32> to vector<128x128xf32>
    %cst_149 = arith.constant dense<0.000000e+00> : vector<16x128xf32>
    %203 = tpu.matmul %200, %202, %cst_149 {dimension_numbers = #tpu.dot_dimension_numbers<[1], [0], [0], [1], [0, 0, 1, 1], [], []>} : vector<16x128xf32>, vector<128x128xf32>, vector<16x128xf32> -> vector<16x128xf32>
    %204 = arith.addf %197, %203 : vector<16x128xf32>
    %c144 = arith.constant 144 : index
    %c0_150 = arith.constant 0 : index
    %205 = vector.load %arg6[%c144, %c0_150] : memref<256x64xbf16, #tpu.memory_space<vmem>>, vector<16x64xbf16>
    %206 = arith.extf %205 : vector<16x64xbf16> to vector<16x64xf32>
    %cst_151 = arith.constant dense<0.000000e+00> : vector<16x128xf32>
    %207 = tpu.matmul %206, %132, %cst_151 {dimension_numbers = #tpu.dot_dimension_numbers<[1], [0], [0], [1], [0, 0, 1, 1], [], []>} : vector<16x64xf32>, vector<64x128xf32>, vector<16x128xf32> -> vector<16x128xf32>
    %c9_152 = arith.constant 9 : index
    %c0_153 = arith.constant 0 : index
    %c0_154 = arith.constant 0 : index
    %208 = vector.load %arg7[%c9_152, %c0_153, %c0_154] : memref<16x128x128xf32, #tpu.memory_space<vmem>>, vector<1x128x128xf32>
    %209 = vector.shape_cast %208 : vector<1x128x128xf32> to vector<128x128xf32>
    %cst_155 = arith.constant dense<0.000000e+00> : vector<16x128xf32>
    %210 = tpu.matmul %207, %209, %cst_155 {dimension_numbers = #tpu.dot_dimension_numbers<[1], [0], [0], [1], [0, 0, 1, 1], [], []>} : vector<16x128xf32>, vector<128x128xf32>, vector<16x128xf32> -> vector<16x128xf32>
    %211 = arith.addf %204, %210 : vector<16x128xf32>
    %c160 = arith.constant 160 : index
    %c0_156 = arith.constant 0 : index
    %212 = vector.load %arg6[%c160, %c0_156] : memref<256x64xbf16, #tpu.memory_space<vmem>>, vector<16x64xbf16>
    %213 = arith.extf %212 : vector<16x64xbf16> to vector<16x64xf32>
    %cst_157 = arith.constant dense<0.000000e+00> : vector<16x128xf32>
    %214 = tpu.matmul %213, %132, %cst_157 {dimension_numbers = #tpu.dot_dimension_numbers<[1], [0], [0], [1], [0, 0, 1, 1], [], []>} : vector<16x64xf32>, vector<64x128xf32>, vector<16x128xf32> -> vector<16x128xf32>
    %c10_158 = arith.constant 10 : index
    %c0_159 = arith.constant 0 : index
    %c0_160 = arith.constant 0 : index
    %215 = vector.load %arg7[%c10_158, %c0_159, %c0_160] : memref<16x128x128xf32, #tpu.memory_space<vmem>>, vector<1x128x128xf32>
    %216 = vector.shape_cast %215 : vector<1x128x128xf32> to vector<128x128xf32>
    %cst_161 = arith.constant dense<0.000000e+00> : vector<16x128xf32>
    %217 = tpu.matmul %214, %216, %cst_161 {dimension_numbers = #tpu.dot_dimension_numbers<[1], [0], [0], [1], [0, 0, 1, 1], [], []>} : vector<16x128xf32>, vector<128x128xf32>, vector<16x128xf32> -> vector<16x128xf32>
    %218 = arith.addf %211, %217 : vector<16x128xf32>
    %c176 = arith.constant 176 : index
    %c0_162 = arith.constant 0 : index
    %219 = vector.load %arg6[%c176, %c0_162] : memref<256x64xbf16, #tpu.memory_space<vmem>>, vector<16x64xbf16>
    %220 = arith.extf %219 : vector<16x64xbf16> to vector<16x64xf32>
    %cst_163 = arith.constant dense<0.000000e+00> : vector<16x128xf32>
    %221 = tpu.matmul %220, %132, %cst_163 {dimension_numbers = #tpu.dot_dimension_numbers<[1], [0], [0], [1], [0, 0, 1, 1], [], []>} : vector<16x64xf32>, vector<64x128xf32>, vector<16x128xf32> -> vector<16x128xf32>
    %c11_164 = arith.constant 11 : index
    %c0_165 = arith.constant 0 : index
    %c0_166 = arith.constant 0 : index
    %222 = vector.load %arg7[%c11_164, %c0_165, %c0_166] : memref<16x128x128xf32, #tpu.memory_space<vmem>>, vector<1x128x128xf32>
    %223 = vector.shape_cast %222 : vector<1x128x128xf32> to vector<128x128xf32>
    %cst_167 = arith.constant dense<0.000000e+00> : vector<16x128xf32>
    %224 = tpu.matmul %221, %223, %cst_167 {dimension_numbers = #tpu.dot_dimension_numbers<[1], [0], [0], [1], [0, 0, 1, 1], [], []>} : vector<16x128xf32>, vector<128x128xf32>, vector<16x128xf32> -> vector<16x128xf32>
    %225 = arith.addf %218, %224 : vector<16x128xf32>
    %c192_168 = arith.constant 192 : index
    %c0_169 = arith.constant 0 : index
    %226 = vector.load %arg6[%c192_168, %c0_169] : memref<256x64xbf16, #tpu.memory_space<vmem>>, vector<16x64xbf16>
    %227 = arith.extf %226 : vector<16x64xbf16> to vector<16x64xf32>
    %cst_170 = arith.constant dense<0.000000e+00> : vector<16x128xf32>
    %228 = tpu.matmul %227, %132, %cst_170 {dimension_numbers = #tpu.dot_dimension_numbers<[1], [0], [0], [1], [0, 0, 1, 1], [], []>} : vector<16x64xf32>, vector<64x128xf32>, vector<16x128xf32> -> vector<16x128xf32>
    %c12_171 = arith.constant 12 : index
    %c0_172 = arith.constant 0 : index
    %c0_173 = arith.constant 0 : index
    %229 = vector.load %arg7[%c12_171, %c0_172, %c0_173] : memref<16x128x128xf32, #tpu.memory_space<vmem>>, vector<1x128x128xf32>
    %230 = vector.shape_cast %229 : vector<1x128x128xf32> to vector<128x128xf32>
    %cst_174 = arith.constant dense<0.000000e+00> : vector<16x128xf32>
    %231 = tpu.matmul %228, %230, %cst_174 {dimension_numbers = #tpu.dot_dimension_numbers<[1], [0], [0], [1], [0, 0, 1, 1], [], []>} : vector<16x128xf32>, vector<128x128xf32>, vector<16x128xf32> -> vector<16x128xf32>
    %232 = arith.addf %225, %231 : vector<16x128xf32>
    %c208 = arith.constant 208 : index
    %c0_175 = arith.constant 0 : index
    %233 = vector.load %arg6[%c208, %c0_175] : memref<256x64xbf16, #tpu.memory_space<vmem>>, vector<16x64xbf16>
    %234 = arith.extf %233 : vector<16x64xbf16> to vector<16x64xf32>
    %cst_176 = arith.constant dense<0.000000e+00> : vector<16x128xf32>
    %235 = tpu.matmul %234, %132, %cst_176 {dimension_numbers = #tpu.dot_dimension_numbers<[1], [0], [0], [1], [0, 0, 1, 1], [], []>} : vector<16x64xf32>, vector<64x128xf32>, vector<16x128xf32> -> vector<16x128xf32>
    %c13_177 = arith.constant 13 : index
    %c0_178 = arith.constant 0 : index
    %c0_179 = arith.constant 0 : index
    %236 = vector.load %arg7[%c13_177, %c0_178, %c0_179] : memref<16x128x128xf32, #tpu.memory_space<vmem>>, vector<1x128x128xf32>
    %237 = vector.shape_cast %236 : vector<1x128x128xf32> to vector<128x128xf32>
    %cst_180 = arith.constant dense<0.000000e+00> : vector<16x128xf32>
    %238 = tpu.matmul %235, %237, %cst_180 {dimension_numbers = #tpu.dot_dimension_numbers<[1], [0], [0], [1], [0, 0, 1, 1], [], []>} : vector<16x128xf32>, vector<128x128xf32>, vector<16x128xf32> -> vector<16x128xf32>
    %239 = arith.addf %232, %238 : vector<16x128xf32>
    %c224 = arith.constant 224 : index
    %c0_181 = arith.constant 0 : index
    %240 = vector.load %arg6[%c224, %c0_181] : memref<256x64xbf16, #tpu.memory_space<vmem>>, vector<16x64xbf16>
    %241 = arith.extf %240 : vector<16x64xbf16> to vector<16x64xf32>
    %cst_182 = arith.constant dense<0.000000e+00> : vector<16x128xf32>
    %242 = tpu.matmul %241, %132, %cst_182 {dimension_numbers = #tpu.dot_dimension_numbers<[1], [0], [0], [1], [0, 0, 1, 1], [], []>} : vector<16x64xf32>, vector<64x128xf32>, vector<16x128xf32> -> vector<16x128xf32>
    %c14_183 = arith.constant 14 : index
    %c0_184 = arith.constant 0 : index
    %c0_185 = arith.constant 0 : index
    %243 = vector.load %arg7[%c14_183, %c0_184, %c0_185] : memref<16x128x128xf32, #tpu.memory_space<vmem>>, vector<1x128x128xf32>
    %244 = vector.shape_cast %243 : vector<1x128x128xf32> to vector<128x128xf32>
    %cst_186 = arith.constant dense<0.000000e+00> : vector<16x128xf32>
    %245 = tpu.matmul %242, %244, %cst_186 {dimension_numbers = #tpu.dot_dimension_numbers<[1], [0], [0], [1], [0, 0, 1, 1], [], []>} : vector<16x128xf32>, vector<128x128xf32>, vector<16x128xf32> -> vector<16x128xf32>
    %246 = arith.addf %239, %245 : vector<16x128xf32>
    %c240 = arith.constant 240 : index
    %c0_187 = arith.constant 0 : index
    %247 = vector.load %arg6[%c240, %c0_187] : memref<256x64xbf16, #tpu.memory_space<vmem>>, vector<16x64xbf16>
    %248 = arith.extf %247 : vector<16x64xbf16> to vector<16x64xf32>
    %cst_188 = arith.constant dense<0.000000e+00> : vector<16x128xf32>
    %249 = tpu.matmul %248, %132, %cst_188 {dimension_numbers = #tpu.dot_dimension_numbers<[1], [0], [0], [1], [0, 0, 1, 1], [], []>} : vector<16x64xf32>, vector<64x128xf32>, vector<16x128xf32> -> vector<16x128xf32>
    %c15_189 = arith.constant 15 : index
    %c0_190 = arith.constant 0 : index
    %c0_191 = arith.constant 0 : index
    %250 = vector.load %arg7[%c15_189, %c0_190, %c0_191] : memref<16x128x128xf32, #tpu.memory_space<vmem>>, vector<1x128x128xf32>
    %251 = vector.shape_cast %250 : vector<1x128x128xf32> to vector<128x128xf32>
    %cst_192 = arith.constant dense<0.000000e+00> : vector<16x128xf32>
    %252 = tpu.matmul %249, %251, %cst_192 {dimension_numbers = #tpu.dot_dimension_numbers<[1], [0], [0], [1], [0, 0, 1, 1], [], []>} : vector<16x128xf32>, vector<128x128xf32>, vector<16x128xf32> -> vector<16x128xf32>
    %253 = arith.addf %246, %252 : vector<16x128xf32>
    %c0_193 = arith.constant 0 : index
    %c0_194 = arith.constant 0 : index
    %254 = vector.load %arg8[%c0_193, %c0_194] : memref<1x128xf32, #tpu.memory_space<vmem>>, vector<1x128xf32>
    %255 = vector.broadcast %254 : vector<1x128xf32> to vector<16x128xf32>
    %256 = arith.addf %253, %255 : vector<16x128xf32>
    %cst_195 = arith.constant 0.000000e+00 : f32
    %257 = vector.broadcast %cst_195 : f32 to vector<16x128xf32>
    %258 = arith.maximumf %256, %257 : vector<16x128xf32>
    %259 = vector.extract_strided_slice %258 {offsets = [8, 0], sizes = [8, 128], strides = [1, 1]} : vector<16x128xf32> to vector<8x128xf32>
    %260 = vector.extract_strided_slice %258 {offsets = [0, 0], sizes = [8, 128], strides = [1, 1]} : vector<16x128xf32> to vector<8x128xf32>
    %261 = arith.subf %259, %260 : vector<8x128xf32>
    %262 = arith.mulf %261, %261 : vector<8x128xf32>
    %263 = vector.shape_cast %262 : vector<8x128xf32> to vector<1x8x128xf32>
    %cst_196 = arith.constant dense<0.000000e+00> : vector<1xf32>
    %264 = vector.multi_reduction <add>, %263, %cst_196 [1, 2] : vector<1x8x128xf32> to vector<1xf32>
    %265 = vector.shape_cast %264 : vector<1xf32> to vector<1x1x1xf32>
    %266 = vector.extract %265[0, 0, 0] : f32 from vector<1x1x1xf32>
    %267 = vector.broadcast %266 : f32 to vector<1x1xf32>
    %268 = arith.addf %142, %267 : vector<1x1xf32>
    %c0_197 = arith.constant 0 : index
    %c0_198 = arith.constant 0 : index
    %269 = vector.load %arg9[%c0_197, %c0_198] : memref<2x32xf32, #tpu.memory_space<vmem>>, vector<2x32xf32>
    %c0_199 = arith.constant 0 : index
    %c0_200 = arith.constant 0 : index
    %270 = vector.load %arg10[%c0_199, %c0_200] : memref<2x32xf32, #tpu.memory_space<vmem>>, vector<2x32xf32>
    %cst_201 = arith.constant 1.000000e+00 : f32
    %271 = vector.broadcast %cst_201 : f32 to vector<2x32xf32>
    %272 = arith.addf %271, %270 : vector<2x32xf32>
    %273 = arith.mulf %269, %269 : vector<2x32xf32>
    %274 = arith.subf %272, %273 : vector<2x32xf32>
    %275 = math.exp %270 : vector<2x32xf32>
    %276 = arith.subf %274, %275 : vector<2x32xf32>
    %277 = vector.shape_cast %276 : vector<2x32xf32> to vector<1x2x32xf32>
    %cst_202 = arith.constant dense<0.000000e+00> : vector<1xf32>
    %278 = vector.multi_reduction <add>, %277, %cst_202 [1, 2] : vector<1x2x32xf32> to vector<1xf32>
    %279 = vector.shape_cast %278 : vector<1xf32> to vector<1x1x1xf32>
    %280 = vector.extract %279[0, 0, 0] : f32 from vector<1x1x1xf32>
    %281 = vector.broadcast %280 : f32 to vector<1x1xf32>
    %cst_203 = arith.constant -5.000000e-01 : f32
    %282 = vector.broadcast %cst_203 : f32 to vector<1x1xf32>
    %283 = arith.mulf %282, %281 : vector<1x1xf32>
    %284 = arith.addf %268, %283 : vector<1x1xf32>
    %c0_204 = arith.constant 0 : index
    %c0_205 = arith.constant 0 : index
    %285 = vector.load %arg11[%c0_204, %c0_205] : memref<1x1xf32, #tpu.memory_space<vmem>>, vector<1x1xf32>
    tpu.vector_store %arg11[%c0_204, %c0_205], %284 {strides = array<i32>} : memref<1x1xf32, #tpu.memory_space<vmem>>, vector<1x1xf32>,
    return
  }
}

</mosaic_0001>

<llo_original>
// kernel: tpu_custom_call.1
$region0: #{tpu_custom_call.1}
  #allocation0 [shape = 'u32[]', space=smem, size = 0x4, offset = 0x4, fixed_abs, tag = 'smem constant byte address 0x4 - core index']
  #allocation1 [shape = 'u32[72,128]{1,0:T(1,128)}', space=vmem, size = 0x9000, scoped, tag = 'internal scratch']
  %s0 = inlined_call_operand.vmem [shape: f32[256,48], index: 0, kind: input, shape index: {}]
  %s1 = inlined_call_operand.vmem [shape: f32[48,128], index: 1, kind: input, shape index: {}]
  %s2 = inlined_call_operand.vmem [shape: f32[1,128], index: 2, kind: input, shape index: {}]
  %s3 = inlined_call_operand.hbm [shape: bf16[1024,256], index: 3, kind: input, shape index: {}]
  %s4 = inlined_call_operand.hbm [shape: f32[16,128,128], index: 4, kind: input, shape index: {}]
  %s5 = inlined_call_operand.vmem [shape: f32[1,128], index: 5, kind: input, shape index: {}]
  %s6 = inlined_call_operand.vmem [shape: bf16[256,64], index: 6, kind: input, shape index: {}]
  %s7 = inlined_call_operand.hbm [shape: f32[16,128,128], index: 7, kind: input, shape index: {}]
  %s8 = inlined_call_operand.vmem [shape: f32[1,128], index: 8, kind: input, shape index: {}]
  %s9 = inlined_call_operand.vmem [shape: f32[2,32], index: 9, kind: input, shape index: {}]
  %s10 = inlined_call_operand.vmem [shape: f32[2,32], index: 10, kind: input, shape index: {}]
  %s11 = inlined_call_operand.hbm [shape: f32[1,1], index: 11, kind: output, shape index: {}]
  %s12 = sld [smem:[#allocation0]]
  $region66: #{tpu_custom_call.1} parent=0
    _
  %s14 = ssub.s32 1, %s12
  %s15 = scalar_select 0, %s14, %s12
  $region1: #{tpu_custom_call.1} parent=0
    #allocation2 [shape = 'u8[524288]{0}', space=vmem, size = 0x80000, scoped, tag = 'input window, operand 3, single buffered']
    #allocation3 [shape = 's32[1]{0}', space=sflag, size = 0x4, scoped, tag = 'scoped memory for tpu_custom_call.1']
    #allocation4 [shape = 's32[1]{0}', space=sflag, size = 0x4, scoped, tag = 'scoped memory for tpu_custom_call.1']
    #allocation5 [shape = 'u8[1048576]{0}', space=vmem, size = 0x100000, scoped, tag = 'input window, operand 4, single buffered']
    #allocation6 [shape = 's32[1]{0}', space=sflag, size = 0x4, scoped, tag = 'scoped memory for tpu_custom_call.1']
    #allocation7 [shape = 'u8[1048576]{0}', space=vmem, size = 0x100000, scoped, tag = 'input window, operand 7, single buffered']
    #allocation8 [shape = 'u8[512]{0}', space=vmem, size = 0x400, scoped, tag = 'output window, operand 0, single buffered']
    %16 = vsyncpa [#allocation3], 0
    %17 = vsyncpa [#allocation6], 0
    %18 = vsyncpa [#allocation4], 0
    // Predicated region
    $region2: #{tpu_custom_call.1} parent=1 // pred_check
      _
    $region3: #{tpu_custom_call.1} parent=1 // pred_check_branch
      %20 = sbr.rel (0) target = $region5
    $region4: #{tpu_custom_call.1} parent=1 // pred_region
      _
    $region5: #{tpu_custom_call.1} parent=1 // pred_fallthru
      _
    // Predicated region
    $region6: #{tpu_custom_call.1} parent=1 // pred_check
      _
    $region7: #{tpu_custom_call.1} parent=1 // pred_check_branch
      %22 = sbr.rel (0) target = $region9
    $region8: #{tpu_custom_call.1} parent=1 // pred_region
      _
    $region9: #{tpu_custom_call.1} parent=1 // pred_fallthru
      _
    // Predicated region
    $region10: #{tpu_custom_call.1} parent=1 // pred_check
      _
    $region11: #{tpu_custom_call.1} parent=1 // pred_check_branch
      %24 = sbr.rel (0) target = $region13
    $region12: #{tpu_custom_call.1} parent=1 // pred_region
      _
    $region13: #{tpu_custom_call.1} parent=1 // pred_fallthru
      _
    // Predicated region
    $region14: #{tpu_custom_call.1} parent=1 // pred_check
      _
    $region15: #{tpu_custom_call.1} parent=1 // pred_check_branch
      %26 = sbr.rel (0) target = $region17
    $region16: #{tpu_custom_call.1} parent=1 // pred_region
      %28 = vsyncadd [#allocation3], 0
      %s29 = sshll.u32 %s3, 4
      %s30 = int_to_ptr.hbm [resolvable:$true] %s29
      %s31 = sshll.u32 [#allocation2], 4
      %s32 = int_to_ptr.vmem [resolvable:$true] %s31
      %37 = dma.hbm_to_vmem [thread:$0]  %s30, 16384, %s32, [#allocation3], 128, 128, 8
    $region17: #{tpu_custom_call.1} parent=1 // pred_fallthru
      _
    // Predicated region
    $region18: #{tpu_custom_call.1} parent=1 // pred_check
      _
    $region19: #{tpu_custom_call.1} parent=1 // pred_check_branch
      %39 = sbr.rel (0) target = $region21
    $region20: #{tpu_custom_call.1} parent=1 // pred_region
      %41 = vsyncadd [#allocation6], 0
      %s42 = sshll.u32 %s4, 4
      %s43 = int_to_ptr.hbm [resolvable:$true] %s42
      %s44 = sshll.u32 [#allocation5], 4
      %s45 = int_to_ptr.vmem [resolvable:$true] %s44
      %50 = dma.hbm_to_vmem [thread:$0]  %s43, 32768, %s45, [#allocation6], 128, 128, 8
    $region21: #{tpu_custom_call.1} parent=1 // pred_fallthru
      _
    // Predicated region
    $region22: #{tpu_custom_call.1} parent=1 // pred_check
      _
    $region23: #{tpu_custom_call.1} parent=1 // pred_check_branch
      %52 = sbr.rel (0) target = $region25
    $region24: #{tpu_custom_call.1} parent=1 // pred_region
      _
    $region25: #{tpu_custom_call.1} parent=1 // pred_fallthru
      _
    // Predicated region
    $region26: #{tpu_custom_call.1} parent=1 // pred_check
      _
    $region27: #{tpu_custom_call.1} parent=1 // pred_check_branch
      %54 = sbr.rel (0) target = $region29
    $region28: #{tpu_custom_call.1} parent=1 // pred_region
      _
    $region29: #{tpu_custom_call.1} parent=1 // pred_fallthru
      _
    // Predicated region
    $region30: #{tpu_custom_call.1} parent=1 // pred_check
      _
    $region31: #{tpu_custom_call.1} parent=1 // pred_check_branch
      %56 = sbr.rel (0) target = $region33
    $region32: #{tpu_custom_call.1} parent=1 // pred_region
      %58 = vsyncadd [#allocation6], 0
      %s59 = sshll.u32 %s7, 4
      %s60 = int_to_ptr.hbm [resolvable:$true] %s59
      %s61 = sshll.u32 [#allocation7], 4
      %s62 = int_to_ptr.vmem [resolvable:$true] %s61
      %67 = dma.hbm_to_vmem [thread:$0]  %s60, 32768, %s62, [#allocation6], 128, 128, 8
    $region33: #{tpu_custom_call.1} parent=1 // pred_fallthru
      _
    // Predicated region
    $region34: #{tpu_custom_call.1} parent=1 // pred_check
      _
    $region35: #{tpu_custom_call.1} parent=1 // pred_check_branch
      %69 = sbr.rel (0) target = $region37
    $region36: #{tpu_custom_call.1} parent=1 // pred_region
      _
    $region37: #{tpu_custom_call.1} parent=1 // pred_fallthru
      _
    // Predicated region
    $region38: #{tpu_custom_call.1} parent=1 // pred_check
      _
    $region39: #{tpu_custom_call.1} parent=1 // pred_check_branch
      %71 = sbr.rel (0) target = $region41
    $region40: #{tpu_custom_call.1} parent=1 // pred_region
      _
    $region41: #{tpu_custom_call.1} parent=1 // pred_fallthru
      _
    // Predicated region
    $region42: #{tpu_custom_call.1} parent=1 // pred_check
      _
    $region43: #{tpu_custom_call.1} parent=1 // pred_check_branch
      %73 = sbr.rel (0) target = $region45
    $region44: #{tpu_custom_call.1} parent=1 // pred_region
      _
    $region45: #{tpu_custom_call.1} parent=1 // pred_fallthru
      _
    // Predicated region
    $region46: #{tpu_custom_call.1} parent=1 // pred_check
      _
    $region47: #{tpu_custom_call.1} parent=1 // pred_check_branch
      %75 = sbr.rel (0) target = $region49
    $region48: #{tpu_custom_call.1} parent=1 // pred_region
      %77 = dma.done [#allocation3], 16384
    $region49: #{tpu_custom_call.1} parent=1 // pred_fallthru
      _
    // Predicated region
    $region50: #{tpu_custom_call.1} parent=1 // pred_check
      _
    $region51: #{tpu_custom_call.1} parent=1 // pred_check_branch
      %79 = sbr.rel (0) target = $region53
    $region52: #{tpu_custom_call.1} parent=1 // pred_region
      %81 = dma.done [#allocation6], 32768
    $region53: #{tpu_custom_call.1} parent=1 // pred_fallthru
      _
    // Predicated region
    $region54: #{tpu_custom_call.1} parent=1 // pred_check
      _
    $region55: #{tpu_custom_call.1} parent=1 // pred_check_branch
      %83 = sbr.rel (0) target = $region57
    $region56: #{tpu_custom_call.1} parent=1 // pred_region
      %85 = dma.done [#allocation6], 32768
    $region57: #{tpu_custom_call.1} parent=1 // pred_fallthru
      _
    %v86 = vld [vmem:[%s0] sm:$0xff]
    %v87 = vld [vmem:[%s0 + $0x8] sm:$0xff]
    %v88 = vld [vmem:[%s0 + $0x10] sm:$0xff]
    %v89 = vld [vmem:[%s0 + $0x18] sm:$0xff]
    %v90 = vld [vmem:[%s0 + $0x20] sm:$0xff]
    %v91 = vld [vmem:[%s0 + $0x28] sm:$0xff]
    %v92 = vld [vmem:[%s0 + $0x30] sm:$0xff]
    %v93 = vld [vmem:[%s0 + $0x38] sm:$0xff]
    %v94 = vld [vmem:[%s0 + $0x40] sm:$0xff]
    %v95 = vld [vmem:[%s0 + $0x48] sm:$0xff]
    %v96 = vld [vmem:[%s0 + $0x50] sm:$0xff]
    %v97 = vld [vmem:[%s0 + $0x58] sm:$0xff]
    %v98 = vld [vmem:[%s0 + $0x60] sm:$0xff]
    %v99 = vld [vmem:[%s0 + $0x68] sm:$0xff]
    %v100 = vld [vmem:[%s0 + $0x70] sm:$0xff]
    %v101 = vld [vmem:[%s0 + $0x78] sm:$0xff]
    %v102 = vld [vmem:[%s0 + $0x80] sm:$0xff]
    %v103 = vld [vmem:[%s0 + $0x88] sm:$0xff]
    %v104 = vld [vmem:[%s0 + $0x90] sm:$0xff]
    %v105 = vld [vmem:[%s0 + $0x98] sm:$0xff]
    %v106 = vld [vmem:[%s0 + $0xa0] sm:$0xff]
    %v107 = vld [vmem:[%s0 + $0xa8] sm:$0xff]
    %v108 = vld [vmem:[%s0 + $0xb0] sm:$0xff]
    %v109 = vld [vmem:[%s0 + $0xb8] sm:$0xff]
    %v110 = vld [vmem:[%s0 + $0xc0] sm:$0xff]
    %v111 = vld [vmem:[%s0 + $0xc8] sm:$0xff]
    %v112 = vld [vmem:[%s0 + $0xd0] sm:$0xff]
    %v113 = vld [vmem:[%s0 + $0xd8] sm:$0xff]
    %v114 = vld [vmem:[%s0 + $0xe0] sm:$0xff]
    %v115 = vld [vmem:[%s0 + $0xe8] sm:$0xff]
    %v116 = vld [vmem:[%s0 + $0xf0] sm:$0xff]
    %v117 = vld [vmem:[%s0 + $0xf8] sm:$0xff]
    %v118 = vld [vmem:[%s1] sm:$0xff]
    %v119 = vld [vmem:[%s1 + $0x8] sm:$0xff]
    %v120 = vld [vmem:[%s1 + $0x10] sm:$0xff]
    %v121 = vld [vmem:[%s1 + $0x18] sm:$0xff]
    %v122 = vld [vmem:[%s1 + $0x20] sm:$0xff]
    %v123 = vld [vmem:[%s1 + $0x28] sm:$0xff]
    %v124 = vld [vmem:[%s2] sm:$0x1]
    %v126 = vperm.slane %v124, 0
    %vm128 = vcmask 392192
    %v130 = vsel %vm128, %v86, 0
    %v133 = vsel %vm128, %v87, 0
    %v136 = vsel %vm128, %v88, 0
    %v139 = vsel %vm128, %v89, 0
    %v142 = vsel %vm128, %v90, 0
    %v145 = vsel %vm128, %v91, 0
    %v148 = vsel %vm128, %v92, 0
    %v151 = vsel %vm128, %v93, 0
    %v154 = vsel %vm128, %v94, 0
    %v157 = vsel %vm128, %v95, 0
    %v160 = vsel %vm128, %v96, 0
    %v163 = vsel %vm128, %v97, 0
    %v166 = vsel %vm128, %v98, 0
    %v169 = vsel %vm128, %v99, 0
    %v172 = vsel %vm128, %v100, 0
    %v175 = vsel %vm128, %v101, 0
    %v178 = vsel %vm128, %v102, 0
    %v181 = vsel %vm128, %v103, 0
    %v184 = vsel %vm128, %v104, 0
    %v187 = vsel %vm128, %v105, 0
    %v190 = vsel %vm128, %v106, 0
    %v193 = vsel %vm128, %v107, 0
    %v196 = vsel %vm128, %v108, 0
    %v199 = vsel %vm128, %v109, 0
    %v202 = vsel %vm128, %v110, 0
    %v205 = vsel %vm128, %v111, 0
    %v208 = vsel %vm128, %v112, 0
    %v211 = vsel %vm128, %v113, 0
    %v214 = vsel %vm128, %v114, 0
    %v217 = vsel %vm128, %v115, 0
    %v220 = vsel %vm128, %v116, 0
    %v223 = vsel %vm128, %v117, 0
    %225 = vmatpush.msra.mxu0 0.0
    %226 = vmatpush.msra.mxu0 0.0
    %227 = vmatpush.msra.mxu0 0.0
    %228 = vmatpush.msra.mxu0 0.0
    %229 = vmatpush.msra.mxu0 0.0
    %230 = vmatpush.msra.mxu0 0.0
    %231 = vmatpush.msra.mxu0 0.0
    %232 = vmatpush.msra.mxu0 0.0
    %233 = vmatpush.msra.mxu0 0.0
    %234 = vmatpush.msra.mxu0 0.0
    %235 = vmatpush.msra.mxu0 %v123
    %236 = vmatpush.msra.mxu0 %v122
    %237 = vmatpush.msra.mxu0 %v121
    %238 = vmatpush.msra.mxu0 %v120
    %239 = vmatpush.msra.mxu0 %v119
    %240 = vmatpush.msra.mxu0 %v118
    %241 = vmatmul.f32.gmra.mxu0 %v130
    %v242 = vpop.f32.mrf.mxu0
    %v243 = vadd.f32 %v126, %v242
    %244 = vmatmul.f32.gmra.mxu0 %v133
    %v245 = vpop.f32.mrf.mxu0
    %v246 = vadd.f32 %v126, %v245
    %247 = vmatmul.f32.gmra.mxu0 %v136
    %v248 = vpop.f32.mrf.mxu0
    %v249 = vadd.f32 %v126, %v248
    %250 = vmatmul.f32.gmra.mxu0 %v139
    %v251 = vpop.f32.mrf.mxu0
    %v252 = vadd.f32 %v126, %v251
    %253 = vmatmul.f32.gmra.mxu0 %v142
    %v254 = vpop.f32.mrf.mxu0
    %v255 = vadd.f32 %v126, %v254
    %256 = vmatmul.f32.gmra.mxu0 %v145
    %v257 = vpop.f32.mrf.mxu0
    %v258 = vadd.f32 %v126, %v257
    %259 = vmatmul.f32.gmra.mxu0 %v148
    %v260 = vpop.f32.mrf.mxu0
    %v261 = vadd.f32 %v126, %v260
    %262 = vmatmul.f32.gmra.mxu0 %v151
    %v263 = vpop.f32.mrf.mxu0
    %v264 = vadd.f32 %v126, %v263
    %265 = vmatmul.f32.gmra.mxu0 %v154
    %v266 = vpop.f32.mrf.mxu0
    %v267 = vadd.f32 %v126, %v266
    %268 = vmatmul.f32.gmra.mxu0 %v157
    %v269 = vpop.f32.mrf.mxu0
    %v270 = vadd.f32 %v126, %v269
    %271 = vmatmul.f32.gmra.mxu0 %v160
    %v272 = vpop.f32.mrf.mxu0
    %v273 = vadd.f32 %v126, %v272
    %274 = vmatmul.f32.gmra.mxu0 %v163
    %v275 = vpop.f32.mrf.mxu0
    %v276 = vadd.f32 %v126, %v275
    %277 = vmatmul.f32.gmra.mxu0 %v166
    %v278 = vpop.f32.mrf.mxu0
    %v279 = vadd.f32 %v126, %v278
    %280 = vmatmul.f32.gmra.mxu0 %v169
    %v281 = vpop.f32.mrf.mxu0
    %v282 = vadd.f32 %v126, %v281
    %283 = vmatmul.f32.gmra.mxu0 %v172
    %v284 = vpop.f32.mrf.mxu0
    %v285 = vadd.f32 %v126, %v284
    %286 = vmatmul.f32.gmra.mxu0 %v175
    %v287 = vpop.f32.mrf.mxu0
    %v288 = vadd.f32 %v126, %v287
    %289 = vmatmul.f32.gmra.mxu0 %v178
    %v290 = vpop.f32.mrf.mxu0
    %v291 = vadd.f32 %v126, %v290
    %292 = vmatmul.f32.gmra.mxu0 %v181
    %v293 = vpop.f32.mrf.mxu0
    %v294 = vadd.f32 %v126, %v293
    %295 = vmatmul.f32.gmra.mxu0 %v184
    %v296 = vpop.f32.mrf.mxu0
    %v297 = vadd.f32 %v126, %v296
    %298 = vmatmul.f32.gmra.mxu0 %v187
    %v299 = vpop.f32.mrf.mxu0
    %v300 = vadd.f32 %v126, %v299
    %301 = vmatmul.f32.gmra.mxu0 %v190
    %v302 = vpop.f32.mrf.mxu0
    %v303 = vadd.f32 %v126, %v302
    %304 = vmatmul.f32.gmra.mxu0 %v193
    %v305 = vpop.f32.mrf.mxu0
    %v306 = vadd.f32 %v126, %v305
    %307 = vmatmul.f32.gmra.mxu0 %v196
    %v308 = vpop.f32.mrf.mxu0
    %v309 = vadd.f32 %v126, %v308
    %310 = vmatmul.f32.gmra.mxu0 %v199
    %v311 = vpop.f32.mrf.mxu0
    %v312 = vadd.f32 %v126, %v311
    %313 = vmatmul.f32.gmra.mxu0 %v202
    %v314 = vpop.f32.mrf.mxu0
    %v315 = vadd.f32 %v126, %v314
    %316 = vmatmul.f32.gmra.mxu0 %v205
    %v317 = vpop.f32.mrf.mxu0
    %v318 = vadd.f32 %v126, %v317
    %319 = vmatmul.f32.gmra.mxu0 %v208
    %v320 = vpop.f32.mrf.mxu0
    %v321 = vadd.f32 %v126, %v320
    %322 = vmatmul.f32.gmra.mxu0 %v211
    %v323 = vpop.f32.mrf.mxu0
    %v324 = vadd.f32 %v126, %v323
    %325 = vmatmul.f32.gmra.mxu0 %v214
    %v326 = vpop.f32.mrf.mxu0
    %v327 = vadd.f32 %v126, %v326
    %328 = vmatmul.f32.gmra.mxu0 %v217
    %v329 = vpop.f32.mrf.mxu0
    %v330 = vadd.f32 %v126, %v329
    %331 = vmatmul.f32.gmra.mxu0 %v220
    %v332 = vpop.f32.mrf.mxu0
    %v333 = vadd.f32 %v126, %v332
    %334 = vmatmul.f32.gmra.mxu0 %v223
    %v335 = vpop.f32.mrf.mxu0
    %v336 = vadd.f32 %v126, %v335
    %337 = vdwg.mxu0
    %v338 = vmax.f32 %v243, 0.0
    %v339 = vmax.f32 %v246, 0.0
    %v340 = vmax.f32 %v249, 0.0
    %v341 = vmax.f32 %v252, 0.0
    %v342 = vmax.f32 %v255, 0.0
    %v343 = vmax.f32 %v258, 0.0
    %v344 = vmax.f32 %v261, 0.0
    %v345 = vmax.f32 %v264, 0.0
    %v346 = vmax.f32 %v267, 0.0
    %v347 = vmax.f32 %v270, 0.0
    %v348 = vmax.f32 %v273, 0.0
    %v349 = vmax.f32 %v276, 0.0
    %v350 = vmax.f32 %v279, 0.0
    %v351 = vmax.f32 %v282, 0.0
    %v352 = vmax.f32 %v285, 0.0
    %v353 = vmax.f32 %v288, 0.0
    %v354 = vmax.f32 %v291, 0.0
    %v355 = vmax.f32 %v294, 0.0
    %v356 = vmax.f32 %v297, 0.0
    %v357 = vmax.f32 %v300, 0.0
    %v358 = vmax.f32 %v303, 0.0
    %v359 = vmax.f32 %v306, 0.0
    %v360 = vmax.f32 %v309, 0.0
    %v361 = vmax.f32 %v312, 0.0
    %v362 = vmax.f32 %v315, 0.0
    %v363 = vmax.f32 %v318, 0.0
    %v364 = vmax.f32 %v321, 0.0
    %v365 = vmax.f32 %v324, 0.0
    %v366 = vmax.f32 %v327, 0.0
    %v367 = vmax.f32 %v330, 0.0
    %v368 = vmax.f32 %v333, 0.0
    %v369 = vmax.f32 %v336, 0.0
    %v370 = vsub.f32 %v354, %v338
    %v371 = vsub.f32 %v355, %v339
    %v372 = vsub.f32 %v356, %v340
    %v373 = vsub.f32 %v357, %v341
    %v374 = vsub.f32 %v358, %v342
    %v375 = vsub.f32 %v359, %v343
    %v376 = vsub.f32 %v360, %v344
    %v377 = vsub.f32 %v361, %v345
    %v378 = vsub.f32 %v362, %v346
    %v379 = vsub.f32 %v363, %v347
    %v380 = vsub.f32 %v364, %v348
    %v381 = vsub.f32 %v365, %v349
    %v382 = vsub.f32 %v366, %v350
    %v383 = vsub.f32 %v367, %v351
    %v384 = vsub.f32 %v368, %v352
    %v385 = vsub.f32 %v369, %v353
    %v386 = vmul.f32 %v370, %v370
    %v387 = vmul.f32 %v371, %v371
    %v388 = vmul.f32 %v372, %v372
    %v389 = vmul.f32 %v373, %v373
    %v390 = vmul.f32 %v374, %v374
    %v391 = vmul.f32 %v375, %v375
    %v392 = vmul.f32 %v376, %v376
    %v393 = vmul.f32 %v377, %v377
    %v394 = vmul.f32 %v378, %v378
    %v395 = vmul.f32 %v379, %v379
    %v396 = vmul.f32 %v380, %v380
    %v397 = vmul.f32 %v381, %v381
    %v398 = vmul.f32 %v382, %v382
    %v399 = vmul.f32 %v383, %v383
    %v400 = vmul.f32 %v384, %v384
    %v401 = vmul.f32 %v385, %v385
    %v402 = vadd.f32 %v386, %v387
    %v403 = vadd.f32 %v402, %v388
    %v404 = vadd.f32 %v403, %v389
    %v405 = vadd.f32 %v404, %v390
    %v406 = vadd.f32 %v405, %v391
    %v407 = vadd.f32 %v406, %v392
    %v408 = vadd.f32 %v407, %v393
    %v409 = vadd.f32 %v408, %v394
    %v410 = vadd.f32 %v409, %v395
    %v411 = vadd.f32 %v410, %v396
    %v412 = vadd.f32 %v411, %v397
    %v413 = vadd.f32 %v412, %v398
    %v414 = vadd.f32 %v413, %v399
    %v415 = vadd.f32 %v414, %v400
    %v416 = vadd.f32 %v415, %v401
    %417 = vadd.xlane.f32.xlu0 %v416
    %v418 = vpop.xlane.xlu0 %417
    %v419 = vrot.slane %v418, 4
    %v420 = vadd.f32 %v418, %v419
    %v421 = vrot.slane %v420, 2
    %v422 = vadd.f32 %v420, %v421
    %v423 = vrot.slane %v422, 1
    %v424 = vadd.f32 %v422, %v423
    %s425 = vtos %v424
    %v426 = vstv %s425
    %v427 = vld [vmem:[#allocation2] sm:$0xff]
    %v428 = vld [vmem:[#allocation2 + $0x8] sm:$0xff]
    %v429 = vld [vmem:[#allocation2 + $0x10] sm:$0xff]
    %v430 = vld [vmem:[#allocation2 + $0x18] sm:$0xff]
    %v431 = vld [vmem:[#allocation2 + $0x20] sm:$0xff]
    %v432 = vld [vmem:[#allocation2 + $0x28] sm:$0xff]
    %v433 = vld [vmem:[#allocation2 + $0x30] sm:$0xff]
    %v434 = vld [vmem:[#allocation2 + $0x38] sm:$0xff]
    %v435 = vunpack.c.l.bf16 %v427
    %v436 = vunpack.c.h.bf16 %v427
    %v437 = vunpack.c.l.bf16 %v428
    %v438 = vunpack.c.h.bf16 %v428
    %v439 = vunpack.c.l.bf16 %v429
    %v440 = vunpack.c.h.bf16 %v429
    %v441 = vunpack.c.l.bf16 %v430
    %v442 = vunpack.c.h.bf16 %v430
    %v443 = vunpack.c.l.bf16 %v431
    %v444 = vunpack.c.h.bf16 %v431
    %v445 = vunpack.c.l.bf16 %v432
    %v446 = vunpack.c.h.bf16 %v432
    %v447 = vunpack.c.l.bf16 %v433
    %v448 = vunpack.c.h.bf16 %v433
    %v449 = vunpack.c.l.bf16 %v434
    %v450 = vunpack.c.h.bf16 %v434
    %451 = vmatpush.msra.mxu0 %v353
    %452 = vmatpush.msra.mxu0 %v352
    %453 = vmatpush.msra.mxu0 %v351
    %454 = vmatpush.msra.mxu0 %v350
    %455 = vmatpush.msra.mxu0 %v349
    %456 = vmatpush.msra.mxu0 %v348
    %457 = vmatpush.msra.mxu0 %v347
    %458 = vmatpush.msra.mxu0 %v346
    %459 = vmatpush.msra.mxu0 %v345
    %460 = vmatpush.msra.mxu0 %v344
    %461 = vmatpush.msra.mxu0 %v343
    %462 = vmatpush.msra.mxu0 %v342
    %463 = vmatpush.msra.mxu0 %v341
    %464 = vmatpush.msra.mxu0 %v340
    %465 = vmatpush.msra.mxu0 %v339
    %466 = vmatpush.msra.mxu0 %v338
    %467 = vmatmul.f32.gmra.mxu0 %v435
    %v468 = vpop.f32.mrf.mxu0
    %v469 = vadd.f32 0.0, %v468
    %470 = vmatmul.f32.gmra.mxu0 %v437
    %v471 = vpop.f32.mrf.mxu0
    %v472 = vadd.f32 0.0, %v471
    %473 = vmatmul.f32.gmra.mxu0 %v439
    %v474 = vpop.f32.mrf.mxu0
    %v475 = vadd.f32 0.0, %v474
    %476 = vmatmul.f32.gmra.mxu0 %v441
    %v477 = vpop.f32.mrf.mxu0
    %v478 = vadd.f32 0.0, %v477
    %479 = vmatmul.f32.gmra.mxu0 %v443
    %v480 = vpop.f32.mrf.mxu0
    %v481 = vadd.f32 0.0, %v480
    %482 = vmatmul.f32.gmra.mxu0 %v445
    %v483 = vpop.f32.mrf.mxu0
    %v484 = vadd.f32 0.0, %v483
    %485 = vmatmul.f32.gmra.mxu0 %v447
    %v486 = vpop.f32.mrf.mxu0
    %v487 = vadd.f32 0.0, %v486
    %488 = vmatmul.f32.gmra.mxu0 %v449
    %v489 = vpop.f32.mrf.mxu0
    %v490 = vadd.f32 0.0, %v489
    %491 = vdwg.mxu0
    %492 = vmatpush.msra.mxu0 %v369
    %493 = vmatpush.msra.mxu0 %v368
    %494 = vmatpush.msra.mxu0 %v367
    %495 = vmatpush.msra.mxu0 %v366
    %496 = vmatpush.msra.mxu0 %v365
    %497 = vmatpush.msra.mxu0 %v364
    %498 = vmatpush.msra.mxu0 %v363
    %499 = vmatpush.msra.mxu0 %v362
    %500 = vmatpush.msra.mxu0 %v361
    %501 = vmatpush.msra.mxu0 %v360
    %502 = vmatpush.msra.mxu0 %v359
    %503 = vmatpush.msra.mxu0 %v358
    %504 = vmatpush.msra.mxu0 %v357
    %505 = vmatpush.msra.mxu0 %v356
    %506 = vmatpush.msra.mxu0 %v355
    %507 = vmatpush.msra.mxu0 %v354
    %508 = vmatmul.f32.gmra.mxu0 %v436
    %v509 = vpop.f32.mrf.mxu0
    %v510 = vadd.f32 %v469, %v509
    %511 = vmatmul.f32.gmra.mxu0 %v438
    %v512 = vpop.f32.mrf.mxu0
    %v513 = vadd.f32 %v472, %v512
    %514 = vmatmul.f32.gmra.mxu0 %v440
    %v515 = vpop.f32.mrf.mxu0
    %v516 = vadd.f32 %v475, %v515
    %517 = vmatmul.f32.gmra.mxu0 %v442
    %v518 = vpop.f32.mrf.mxu0
    %v519 = vadd.f32 %v478, %v518
    %520 = vmatmul.f32.gmra.mxu0 %v444
    %v521 = vpop.f32.mrf.mxu0
    %v522 = vadd.f32 %v481, %v521
    %523 = vmatmul.f32.gmra.mxu0 %v446
    %v524 = vpop.f32.mrf.mxu0
    %v525 = vadd.f32 %v484, %v524
    %526 = vmatmul.f32.gmra.mxu0 %v448
    %v527 = vpop.f32.mrf.mxu0
    %v528 = vadd.f32 %v487, %v527
    %529 = vmatmul.f32.gmra.mxu0 %v450
    %v530 = vpop.f32.mrf.mxu0
    %v531 = vadd.f32 %v490, %v530
    %532 = vdwg.mxu0
    %v533 = vld [vmem:[#allocation5] sm:$0xff]
    %v534 = vld [vmem:[#allocation5 + $0x8] sm:$0xff]
    %v535 = vld [vmem:[#allocation5 + $0x10] sm:$0xff]
    %v536 = vld [vmem:[#allocation5 + $0x18] sm:$0xff]
    %v537 = vld [vmem:[#allocation5 + $0x20] sm:$0xff]
    %v538 = vld [vmem:[#allocation5 + $0x28] sm:$0xff]
    %v539 = vld [vmem:[#allocation5 + $0x30] sm:$0xff]
    %v540 = vld [vmem:[#allocation5 + $0x38] sm:$0xff]
    %v541 = vld [vmem:[#allocation5 + $0x40] sm:$0xff]
    %v542 = vld [vmem:[#allocation5 + $0x48] sm:$0xff]
    %v543 = vld [vmem:[#allocation5 + $0x50] sm:$0xff]
    %v544 = vld [vmem:[#allocation5 + $0x58] sm:$0xff]
    %v545 = vld [vmem:[#allocation5 + $0x60] sm:$0xff]
    %v546 = vld [vmem:[#allocation5 + $0x68] sm:$0xff]
    %v547 = vld [vmem:[#allocation5 + $0x70] sm:$0xff]
    %v548 = vld [vmem:[#allocation5 + $0x78] sm:$0xff]
    %v549 = vld [vmem:[#allocation2 + $0x40] sm:$0xff]
    %v550 = vld [vmem:[#allocation2 + $0x48] sm:$0xff]
    %v551 = vld [vmem:[#allocation2 + $0x50] sm:$0xff]
    %v552 = vld [vmem:[#allocation2 + $0x58] sm:$0xff]
    %v553 = vld [vmem:[#allocation2 + $0x60] sm:$0xff]
    %v554 = vld [vmem:[#allocation2 + $0x68] sm:$0xff]
    %v555 = vld [vmem:[#allocation2 + $0x70] sm:$0xff]
    %v556 = vld [vmem:[#allocation2 + $0x78] sm:$0xff]
    %v557 = vunpack.c.l.bf16 %v549
    %v558 = vunpack.c.h.bf16 %v549
    %v559 = vunpack.c.l.bf16 %v550
    %v560 = vunpack.c.h.bf16 %v550
    %v561 = vunpack.c.l.bf16 %v551
    %v562 = vunpack.c.h.bf16 %v551
    %v563 = vunpack.c.l.bf16 %v552
    %v564 = vunpack.c.h.bf16 %v552
    %v565 = vunpack.c.l.bf16 %v553
    %v566 = vunpack.c.h.bf16 %v553
    %v567 = vunpack.c.l.bf16 %v554
    %v568 = vunpack.c.h.bf16 %v554
    %v569 = vunpack.c.l.bf16 %v555
    %v570 = vunpack.c.h.bf16 %v555
    %v571 = vunpack.c.l.bf16 %v556
    %v572 = vunpack.c.h.bf16 %v556
    %573 = vmatpush.msra.mxu0 %v353
    %574 = vmatpush.msra.mxu0 %v352
    %575 = vmatpush.msra.mxu0 %v351
    %576 = vmatpush.msra.mxu0 %v350
    %577 = vmatpush.msra.mxu0 %v349
    %578 = vmatpush.msra.mxu0 %v348
    %579 = vmatpush.msra.mxu0 %v347
    %580 = vmatpush.msra.mxu0 %v346
    %581 = vmatpush.msra.mxu0 %v345
    %582 = vmatpush.msra.mxu0 %v344
    %583 = vmatpush.msra.mxu0 %v343
    %584 = vmatpush.msra.mxu0 %v342
    %585 = vmatpush.msra.mxu0 %v341
    %586 = vmatpush.msra.mxu0 %v340
    %587 = vmatpush.msra.mxu0 %v339
    %588 = vmatpush.msra.mxu0 %v338
    %589 = vmatmul.f32.gmra.mxu0 %v557
    %v590 = vpop.f32.mrf.mxu0
    %v591 = vadd.f32 0.0, %v590
    %592 = vmatmul.f32.gmra.mxu0 %v559
    %v593 = vpop.f32.mrf.mxu0
    %v594 = vadd.f32 0.0, %v593
    %595 = vmatmul.f32.gmra.mxu0 %v561
    %v596 = vpop.f32.mrf.mxu0
    %v597 = vadd.f32 0.0, %v596
    %598 = vmatmul.f32.gmra.mxu0 %v563
    %v599 = vpop.f32.mrf.mxu0
    %v600 = vadd.f32 0.0, %v599
    %601 = vmatmul.f32.gmra.mxu0 %v565
    %v602 = vpop.f32.mrf.mxu0
    %v603 = vadd.f32 0.0, %v602
    %604 = vmatmul.f32.gmra.mxu0 %v567
    %v605 = vpop.f32.mrf.mxu0
    %v606 = vadd.f32 0.0, %v605
    %607 = vmatmul.f32.gmra.mxu0 %v569
    %v608 = vpop.f32.mrf.mxu0
    %v609 = vadd.f32 0.0, %v608
    %610 = vmatmul.f32.gmra.mxu0 %v571
    %v611 = vpop.f32.mrf.mxu0
    %v612 = vadd.f32 0.0, %v611
    %613 = vdwg.mxu0
    %614 = vmatpush.msra.mxu0 %v369
    %615 = vmatpush.msra.mxu0 %v368
    %616 = vmatpush.msra.mxu0 %v367
    %617 = vmatpush.msra.mxu0 %v366
    %618 = vmatpush.msra.mxu0 %v365
    %619 = vmatpush.msra.mxu0 %v364
    %620 = vmatpush.msra.mxu0 %v363
    %621 = vmatpush.msra.mxu0 %v362
    %622 = vmatpush.msra.mxu0 %v361
    %623 = vmatpush.msra.mxu0 %v360
    %624 = vmatpush.msra.mxu0 %v359
    %625 = vmatpush.msra.mxu0 %v358
    %626 = vmatpush.msra.mxu0 %v357
    %627 = vmatpush.msra.mxu0 %v356
    %628 = vmatpush.msra.mxu0 %v355
    %629 = vmatpush.msra.mxu0 %v354
    %630 = vmatmul.f32.gmra.mxu0 %v558
    %v631 = vpop.f32.mrf.mxu0
    %v632 = vadd.f32 %v591, %v631
    %633 = vmatmul.f32.gmra.mxu0 %v560
    %v634 = vpop.f32.mrf.mxu0
    %v635 = vadd.f32 %v594, %v634
    %636 = vmatmul.f32.gmra.mxu0 %v562
    %v637 = vpop.f32.mrf.mxu0
    %v638 = vadd.f32 %v597, %v637
    %639 = vmatmul.f32.gmra.mxu0 %v564
    %v640 = vpop.f32.mrf.mxu0
    %v641 = vadd.f32 %v600, %v640
    %642 = vmatmul.f32.gmra.mxu0 %v566
    %v643 = vpop.f32.mrf.mxu0
    %v644 = vadd.f32 %v603, %v643
    %645 = vmatmul.f32.gmra.mxu0 %v568
    %v646 = vpop.f32.mrf.mxu0
    %v647 = vadd.f32 %v606, %v646
    %648 = vmatmul.f32.gmra.mxu0 %v570
    %v649 = vpop.f32.mrf.mxu0
    %v650 = vadd.f32 %v609, %v649
    %651 = vmatmul.f32.gmra.mxu0 %v572
    %v652 = vpop.f32.mrf.mxu0
    %v653 = vadd.f32 %v612, %v652
    %654 = vdwg.mxu0
    %s655 = scalar_lea.vmem [#allocation5], 128
    %v656 = vld [vmem:[%s655] sm:$0xff]
    %v657 = vld [vmem:[%s655 + $0x8] sm:$0xff]
    %v658 = vld [vmem:[%s655 + $0x10] sm:$0xff]
    %v659 = vld [vmem:[%s655 + $0x18] sm:$0xff]
    %v660 = vld [vmem:[%s655 + $0x20] sm:$0xff]
    %v661 = vld [vmem:[%s655 + $0x28] sm:$0xff]
    %v662 = vld [vmem:[%s655 + $0x30] sm:$0xff]
    %v663 = vld [vmem:[%s655 + $0x38] sm:$0xff]
    %v664 = vld [vmem:[%s655 + $0x40] sm:$0xff]
    %v665 = vld [vmem:[%s655 + $0x48] sm:$0xff]
    %v666 = vld [vmem:[%s655 + $0x50] sm:$0xff]
    %v667 = vld [vmem:[%s655 + $0x58] sm:$0xff]
    %v668 = vld [vmem:[%s655 + $0x60] sm:$0xff]
    %v669 = vld [vmem:[%s655 + $0x68] sm:$0xff]
    %v670 = vld [vmem:[%s655 + $0x70] sm:$0xff]
    %v671 = vld [vmem:[%s655 + $0x78] sm:$0xff]
    %672 = vmatpush.msra.mxu0 %v671
    %673 = vmatpush.msra.mxu0 %v670
    %674 = vmatpush.msra.mxu0 %v669
    %675 = vmatpush.msra.mxu0 %v668
    %676 = vmatpush.msra.mxu0 %v667
    %677 = vmatpush.msra.mxu0 %v666
    %678 = vmatpush.msra.mxu0 %v665
    %679 = vmatpush.msra.mxu0 %v664
    %680 = vmatpush.msra.mxu0 %v663
    %681 = vmatpush.msra.mxu0 %v662
    %682 = vmatpush.msra.mxu0 %v661
    %683 = vmatpush.msra.mxu0 %v660
    %684 = vmatpush.msra.mxu0 %v659
    %685 = vmatpush.msra.mxu0 %v658
    %686 = vmatpush.msra.mxu0 %v657
    %687 = vmatpush.msra.mxu0 %v656
    %688 = vmatmul.f32.gmra.mxu0 %v632
    %v689 = vpop.f32.mrf.mxu0
    %v690 = vadd.f32 0.0, %v689
    %691 = vmatmul.f32.gmra.mxu0 %v635
    %v692 = vpop.f32.mrf.mxu0
    %v693 = vadd.f32 0.0, %v692
    %694 = vmatmul.f32.gmra.mxu0 %v638
    %v695 = vpop.f32.mrf.mxu0
    %v696 = vadd.f32 0.0, %v695
    %697 = vmatmul.f32.gmra.mxu0 %v641
    %v698 = vpop.f32.mrf.mxu0
    %v699 = vadd.f32 0.0, %v698
    %700 = vmatmul.f32.gmra.mxu0 %v644
    %v701 = vpop.f32.mrf.mxu0
    %v702 = vadd.f32 0.0, %v701
    %703 = vmatmul.f32.gmra.mxu0 %v647
    %v704 = vpop.f32.mrf.mxu0
    %v705 = vadd.f32 0.0, %v704
    %706 = vmatmul.f32.gmra.mxu0 %v650
    %v707 = vpop.f32.mrf.mxu0
    %v708 = vadd.f32 0.0, %v707
    %709 = vmatmul.f32.gmra.mxu0 %v653
    %v710 = vpop.f32.mrf.mxu0
    %v711 = vadd.f32 0.0, %v710
    %712 = vdwg.mxu0
    %713 = vmatpush.msra.mxu0 %v548
    %714 = vmatpush.msra.mxu0 %v547
    %715 = vmatpush.msra.mxu0 %v546
    %716 = vmatpush.msra.mxu0 %v545
    %717 = vmatpush.msra.mxu0 %v544
    %718 = vmatpush.msra.mxu0 %v543
    %719 = vmatpush.msra.mxu0 %v542
    %720 = vmatpush.msra.mxu0 %v541
    %721 = vmatpush.msra.mxu0 %v540
    %722 = vmatpush.msra.mxu0 %v539
    %723 = vmatpush.msra.mxu0 %v538
    %724 = vmatpush.msra.mxu0 %v537
    %725 = vmatpush.msra.mxu0 %v536
    %726 = vmatpush.msra.mxu0 %v535
    %727 = vmatpush.msra.mxu0 %v534
    %728 = vmatpush.msra.mxu0 %v533
    %729 = vmatmul.f32.gmra.mxu0 %v510
    %v730 = vpop.f32.mrf.mxu0
    %v731 = vadd.f32 %v690, %v730
    %732 = vmatmul.f32.gmra.mxu0 %v513
    %v733 = vpop.f32.mrf.mxu0
    %v734 = vadd.f32 %v693, %v733
    %735 = vmatmul.f32.gmra.mxu0 %v516
    %v736 = vpop.f32.mrf.mxu0
    %v737 = vadd.f32 %v696, %v736
    %738 = vmatmul.f32.gmra.mxu0 %v519
    %v739 = vpop.f32.mrf.mxu0
    %v740 = vadd.f32 %v699, %v739
    %741 = vmatmul.f32.gmra.mxu0 %v522
    %v742 = vpop.f32.mrf.mxu0
    %v743 = vadd.f32 %v702, %v742
    %744 = vmatmul.f32.gmra.mxu0 %v525
    %v745 = vpop.f32.mrf.mxu0
    %v746 = vadd.f32 %v705, %v745
    %747 = vmatmul.f32.gmra.mxu0 %v528
    %v748 = vpop.f32.mrf.mxu0
    %v749 = vadd.f32 %v708, %v748
    %750 = vmatmul.f32.gmra.mxu0 %v531
    %v751 = vpop.f32.mrf.mxu0
    %v752 = vadd.f32 %v711, %v751
    %753 = vdwg.mxu0
    %v754 = vld [vmem:[#allocation2 + $0x80] sm:$0xff]
    %v755 = vld [vmem:[#allocation2 + $0x88] sm:$0xff]
    %v756 = vld [vmem:[#allocation2 + $0x90] sm:$0xff]
    %v757 = vld [vmem:[#allocation2 + $0x98] sm:$0xff]
    %v758 = vld [vmem:[#allocation2 + $0xa0] sm:$0xff]
    %v759 = vld [vmem:[#allocation2 + $0xa8] sm:$0xff]
    %v760 = vld [vmem:[#allocation2 + $0xb0] sm:$0xff]
    %v761 = vld [vmem:[#allocation2 + $0xb8] sm:$0xff]
    %v762 = vunpack.c.l.bf16 %v754
    %v763 = vunpack.c.h.bf16 %v754
    %v764 = vunpack.c.l.bf16 %v755
    %v765 = vunpack.c.h.bf16 %v755
    %v766 = vunpack.c.l.bf16 %v756
    %v767 = vunpack.c.h.bf16 %v756
    %v768 = vunpack.c.l.bf16 %v757
    %v769 = vunpack.c.h.bf16 %v757
    %v770 = vunpack.c.l.bf16 %v758
    %v771 = vunpack.c.h.bf16 %v758
    %v772 = vunpack.c.l.bf16 %v759
    %v773 = vunpack.c.h.bf16 %v759
    %v774 = vunpack.c.l.bf16 %v760
    %v775 = vunpack.c.h.bf16 %v760
    %v776 = vunpack.c.l.bf16 %v761
    %v777 = vunpack.c.h.bf16 %v761
    %778 = vmatpush.msra.mxu0 %v353
    %779 = vmatpush.msra.mxu0 %v352
    %780 = vmatpush.msra.mxu0 %v351
    %781 = vmatpush.msra.mxu0 %v350
    %782 = vmatpush.msra.mxu0 %v349
    %783 = vmatpush.msra.mxu0 %v348
    %784 = vmatpush.msra.mxu0 %v347
    %785 = vmatpush.msra.mxu0 %v346
    %786 = vmatpush.msra.mxu0 %v345
    %787 = vmatpush.msra.mxu0 %v344
    %788 = vmatpush.msra.mxu0 %v343
    %789 = vmatpush.msra.mxu0 %v342
    %790 = vmatpush.msra.mxu0 %v341
    %791 = vmatpush.msra.mxu0 %v340
    %792 = vmatpush.msra.mxu0 %v339
    %793 = vmatpush.msra.mxu0 %v338
    %794 = vmatmul.f32.gmra.mxu0 %v762
    %v795 = vpop.f32.mrf.mxu0
    %v796 = vadd.f32 0.0, %v795
    %797 = vmatmul.f32.gmra.mxu0 %v764
    %v798 = vpop.f32.mrf.mxu0
    %v799 = vadd.f32 0.0, %v798
    %800 = vmatmul.f32.gmra.mxu0 %v766
    %v801 = vpop.f32.mrf.mxu0
    %v802 = vadd.f32 0.0, %v801
    %803 = vmatmul.f32.gmra.mxu0 %v768
    %v804 = vpop.f32.mrf.mxu0
    %v805 = vadd.f32 0.0, %v804
    %806 = vmatmul.f32.gmra.mxu0 %v770
    %v807 = vpop.f32.mrf.mxu0
    %v808 = vadd.f32 0.0, %v807
    %809 = vmatmul.f32.gmra.mxu0 %v772
    %v810 = vpop.f32.mrf.mxu0
    %v811 = vadd.f32 0.0, %v810
    %812 = vmatmul.f32.gmra.mxu0 %v774
    %v813 = vpop.f32.mrf.mxu0
    %v814 = vadd.f32 0.0, %v813
    %815 = vmatmul.f32.gmra.mxu0 %v776
    %v816 = vpop.f32.mrf.mxu0
    %v817 = vadd.f32 0.0, %v816
    %818 = vdwg.mxu0
    %819 = vmatpush.msra.mxu0 %v369
    %820 = vmatpush.msra.mxu0 %v368
    %821 = vmatpush.msra.mxu0 %v367
    %822 = vmatpush.msra.mxu0 %v366
    %823 = vmatpush.msra.mxu0 %v365
    %824 = vmatpush.msra.mxu0 %v364
    %825 = vmatpush.msra.mxu0 %v363
    %826 = vmatpush.msra.mxu0 %v362
    %827 = vmatpush.msra.mxu0 %v361
    %828 = vmatpush.msra.mxu0 %v360
    %829 = vmatpush.msra.mxu0 %v359
    %830 = vmatpush.msra.mxu0 %v358
    %831 = vmatpush.msra.mxu0 %v357
    %832 = vmatpush.msra.mxu0 %v356
    %833 = vmatpush.msra.mxu0 %v355
    %834 = vmatpush.msra.mxu0 %v354
    %835 = vmatmul.f32.gmra.mxu0 %v763
    %v836 = vpop.f32.mrf.mxu0
    %v837 = vadd.f32 %v796, %v836
    %838 = vmatmul.f32.gmra.mxu0 %v765
    %v839 = vpop.f32.mrf.mxu0
    %v840 = vadd.f32 %v799, %v839
    %841 = vmatmul.f32.gmra.mxu0 %v767
    %v842 = vpop.f32.mrf.mxu0
    %v843 = vadd.f32 %v802, %v842
    %844 = vmatmul.f32.gmra.mxu0 %v769
    %v845 = vpop.f32.mrf.mxu0
    %v846 = vadd.f32 %v805, %v845
    %847 = vmatmul.f32.gmra.mxu0 %v771
    %v848 = vpop.f32.mrf.mxu0
    %v849 = vadd.f32 %v808, %v848
    %850 = vmatmul.f32.gmra.mxu0 %v773
    %v851 = vpop.f32.mrf.mxu0
    %v852 = vadd.f32 %v811, %v851
    %853 = vmatmul.f32.gmra.mxu0 %v775
    %v854 = vpop.f32.mrf.mxu0
    %v855 = vadd.f32 %v814, %v854
    %856 = vmatmul.f32.gmra.mxu0 %v777
    %v857 = vpop.f32.mrf.mxu0
    %v858 = vadd.f32 %v817, %v857
    %859 = vdwg.mxu0
    %s860 = scalar_lea.vmem [#allocation5], 256
    %v861 = vld [vmem:[%s860] sm:$0xff]
    %v862 = vld [vmem:[%s860 + $0x8] sm:$0xff]
    %v863 = vld [vmem:[%s860 + $0x10] sm:$0xff]
    %v864 = vld [vmem:[%s860 + $0x18] sm:$0xff]
    %v865 = vld [vmem:[%s860 + $0x20] sm:$0xff]
    %v866 = vld [vmem:[%s860 + $0x28] sm:$0xff]
    %v867 = vld [vmem:[%s860 + $0x30] sm:$0xff]
    %v868 = vld [vmem:[%s860 + $0x38] sm:$0xff]
    %v869 = vld [vmem:[%s860 + $0x40] sm:$0xff]
    %v870 = vld [vmem:[%s860 + $0x48] sm:$0xff]
    %v871 = vld [vmem:[%s860 + $0x50] sm:$0xff]
    %v872 = vld [vmem:[%s860 + $0x58] sm:$0xff]
    %v873 = vld [vmem:[%s860 + $0x60] sm:$0xff]
    %v874 = vld [vmem:[%s860 + $0x68] sm:$0xff]
    %v875 = vld [vmem:[%s860 + $0x70] sm:$0xff]
    %v876 = vld [vmem:[%s860 + $0x78] sm:$0xff]
    %877 = vmatpush.msra.mxu0 %v876
    %878 = vmatpush.msra.mxu0 %v875
    %879 = vmatpush.msra.mxu0 %v874
    %880 = vmatpush.msra.mxu0 %v873
    %881 = vmatpush.msra.mxu0 %v872
    %882 = vmatpush.msra.mxu0 %v871
    %883 = vmatpush.msra.mxu0 %v870
    %884 = vmatpush.msra.mxu0 %v869
    %885 = vmatpush.msra.mxu0 %v868
    %886 = vmatpush.msra.mxu0 %v867
    %887 = vmatpush.msra.mxu0 %v866
    %888 = vmatpush.msra.mxu0 %v865
    %889 = vmatpush.msra.mxu0 %v864
    %890 = vmatpush.msra.mxu0 %v863
    %891 = vmatpush.msra.mxu0 %v862
    %892 = vmatpush.msra.mxu0 %v861
    %893 = vmatmul.f32.gmra.mxu0 %v837
    %v894 = vpop.f32.mrf.mxu0
    %v895 = vadd.f32 0.0, %v894
    %896 = vmatmul.f32.gmra.mxu0 %v840
    %v897 = vpop.f32.mrf.mxu0
    %v898 = vadd.f32 0.0, %v897
    %899 = vmatmul.f32.gmra.mxu0 %v843
    %v900 = vpop.f32.mrf.mxu0
    %v901 = vadd.f32 0.0, %v900
    %902 = vmatmul.f32.gmra.mxu0 %v846
    %v903 = vpop.f32.mrf.mxu0
    %v904 = vadd.f32 0.0, %v903
    %905 = vmatmul.f32.gmra.mxu0 %v849
    %v906 = vpop.f32.mrf.mxu0
    %v907 = vadd.f32 0.0, %v906
    %908 = vmatmul.f32.gmra.mxu0 %v852
    %v909 = vpop.f32.mrf.mxu0
    %v910 = vadd.f32 0.0, %v909
    %911 = vmatmul.f32.gmra.mxu0 %v855
    %v912 = vpop.f32.mrf.mxu0
    %v913 = vadd.f32 0.0, %v912
    %914 = vmatmul.f32.gmra.mxu0 %v858
    %v915 = vpop.f32.mrf.mxu0
    %v916 = vadd.f32 0.0, %v915
    %917 = vdwg.mxu0
    %v918 = vadd.f32 %v731, %v895
    %v919 = vadd.f32 %v734, %v898
    %v920 = vadd.f32 %v737, %v901
    %v921 = vadd.f32 %v740, %v904
    %v922 = vadd.f32 %v743, %v907
    %v923 = vadd.f32 %v746, %v910
    %v924 = vadd.f32 %v749, %v913
    %v925 = vadd.f32 %v752, %v916
    %v926 = vld [vmem:[#allocation2 + $0xc0] sm:$0xff]
    %v927 = vld [vmem:[#allocation2 + $0xc8] sm:$0xff]
    %v928 = vld [vmem:[#allocation2 + $0xd0] sm:$0xff]
    %v929 = vld [vmem:[#allocation2 + $0xd8] sm:$0xff]
    %v930 = vld [vmem:[#allocation2 + $0xe0] sm:$0xff]
    %v931 = vld [vmem:[#allocation2 + $0xe8] sm:$0xff]
    %v932 = vld [vmem:[#allocation2 + $0xf0] sm:$0xff]
    %v933 = vld [vmem:[#allocation2 + $0xf8] sm:$0xff]
    %v934 = vunpack.c.l.bf16 %v926
    %v935 = vunpack.c.h.bf16 %v926
    %v936 = vunpack.c.l.bf16 %v927
    %v937 = vunpack.c.h.bf16 %v927
    %v938 = vunpack.c.l.bf16 %v928
    %v939 = vunpack.c.h.bf16 %v928
    %v940 = vunpack.c.l.bf16 %v929
    %v941 = vunpack.c.h.bf16 %v929
    %v942 = vunpack.c.l.bf16 %v930
    %v943 = vunpack.c.h.bf16 %v930
    %v944 = vunpack.c.l.bf16 %v931
    %v945 = vunpack.c.h.bf16 %v931
    %v946 = vunpack.c.l.bf16 %v932
    %v947 = vunpack.c.h.bf16 %v932
    %v948 = vunpack.c.l.bf16 %v933
    %v949 = vunpack.c.h.bf16 %v933
    %950 = vmatpush.msra.mxu0 %v353
    %951 = vmatpush.msra.mxu0 %v352
    %952 = vmatpush.msra.mxu0 %v351
    %953 = vmatpush.msra.mxu0 %v350
    %954 = vmatpush.msra.mxu0 %v349
    %955 = vmatpush.msra.mxu0 %v348
    %956 = vmatpush.msra.mxu0 %v347
    %957 = vmatpush.msra.mxu0 %v346
    %958 = vmatpush.msra.mxu0 %v345
    %959 = vmatpush.msra.mxu0 %v344
    %960 = vmatpush.msra.mxu0 %v343
    %961 = vmatpush.msra.mxu0 %v342
    %962 = vmatpush.msra.mxu0 %v341
    %963 = vmatpush.msra.mxu0 %v340
    %964 = vmatpush.msra.mxu0 %v339
    %965 = vmatpush.msra.mxu0 %v338
    %966 = vmatmul.f32.gmra.mxu0 %v934
    %v967 = vpop.f32.mrf.mxu0
    %v968 = vadd.f32 0.0, %v967
    %969 = vmatmul.f32.gmra.mxu0 %v936
    %v970 = vpop.f32.mrf.mxu0
    %v971 = vadd.f32 0.0, %v970
    %972 = vmatmul.f32.gmra.mxu0 %v938
    %v973 = vpop.f32.mrf.mxu0
    %v974 = vadd.f32 0.0, %v973
    %975 = vmatmul.f32.gmra.mxu0 %v940
    %v976 = vpop.f32.mrf.mxu0
    %v977 = vadd.f32 0.0, %v976
    %978 = vmatmul.f32.gmra.mxu0 %v942
    %v979 = vpop.f32.mrf.mxu0
    %v980 = vadd.f32 0.0, %v979
    %981 = vmatmul.f32.gmra.mxu0 %v944
    %v982 = vpop.f32.mrf.mxu0
    %v983 = vadd.f32 0.0, %v982
    %984 = vmatmul.f32.gmra.mxu0 %v946
    %v985 = vpop.f32.mrf.mxu0
    %v986 = vadd.f32 0.0, %v985
    %987 = vmatmul.f32.gmra.mxu0 %v948
    %v988 = vpop.f32.mrf.mxu0
    %v989 = vadd.f32 0.0, %v988
    %990 = vdwg.mxu0
    %991 = vmatpush.msra.mxu0 %v369
    %992 = vmatpush.msra.mxu0 %v368
    %993 = vmatpush.msra.mxu0 %v367
    %994 = vmatpush.msra.mxu0 %v366
    %995 = vmatpush.msra.mxu0 %v365
    %996 = vmatpush.msra.mxu0 %v364
    %997 = vmatpush.msra.mxu0 %v363
    %998 = vmatpush.msra.mxu0 %v362
    %999 = vmatpush.msra.mxu0 %v361
    %1000 = vmatpush.msra.mxu0 %v360
    %1001 = vmatpush.msra.mxu0 %v359
    %1002 = vmatpush.msra.mxu0 %v358
    %1003 = vmatpush.msra.mxu0 %v357
    %1004 = vmatpush.msra.mxu0 %v356
    %1005 = vmatpush.msra.mxu0 %v355
    %1006 = vmatpush.msra.mxu0 %v354
    %1007 = vmatmul.f32.gmra.mxu0 %v935
    %v1008 = vpop.f32.mrf.mxu0
    %v1009 = vadd.f32 %v968, %v1008
    %1010 = vmatmul.f32.gmra.mxu0 %v937
    %v1011 = vpop.f32.mrf.mxu0
    %v1012 = vadd.f32 %v971, %v1011
    %1013 = vmatmul.f32.gmra.mxu0 %v939
    %v1014 = vpop.f32.mrf.mxu0
    %v1015 = vadd.f32 %v974, %v1014
    %1016 = vmatmul.f32.gmra.mxu0 %v941
    %v1017 = vpop.f32.mrf.mxu0
    %v1018 = vadd.f32 %v977, %v1017
    %1019 = vmatmul.f32.gmra.mxu0 %v943
    %v1020 = vpop.f32.mrf.mxu0
    %v1021 = vadd.f32 %v980, %v1020
    %1022 = vmatmul.f32.gmra.mxu0 %v945
    %v1023 = vpop.f32.mrf.mxu0
    %v1024 = vadd.f32 %v983, %v1023
    %1025 = vmatmul.f32.gmra.mxu0 %v947
    %v1026 = vpop.f32.mrf.mxu0
    %v1027 = vadd.f32 %v986, %v1026
    %1028 = vmatmul.f32.gmra.mxu0 %v949
    %v1029 = vpop.f32.mrf.mxu0
    %v1030 = vadd.f32 %v989, %v1029
    %1031 = vdwg.mxu0
    %s1032 = scalar_lea.vmem [#allocation5], 384
    %v1033 = vld [vmem:[%s1032] sm:$0xff]
    %v1034 = vld [vmem:[%s1032 + $0x8] sm:$0xff]
    %v1035 = vld [vmem:[%s1032 + $0x10] sm:$0xff]
    %v1036 = vld [vmem:[%s1032 + $0x18] sm:$0xff]
    %v1037 = vld [vmem:[%s1032 + $0x20] sm:$0xff]
    %v1038 = vld [vmem:[%s1032 + $0x28] sm:$0xff]
    %v1039 = vld [vmem:[%s1032 + $0x30] sm:$0xff]
    %v1040 = vld [vmem:[%s1032 + $0x38] sm:$0xff]
    %v1041 = vld [vmem:[%s1032 + $0x40] sm:$0xff]
    %v1042 = vld [vmem:[%s1032 + $0x48] sm:$0xff]
    %v1043 = vld [vmem:[%s1032 + $0x50] sm:$0xff]
    %v1044 = vld [vmem:[%s1032 + $0x58] sm:$0xff]
    %v1045 = vld [vmem:[%s1032 + $0x60] sm:$0xff]
    %v1046 = vld [vmem:[%s1032 + $0x68] sm:$0xff]
    %v1047 = vld [vmem:[%s1032 + $0x70] sm:$0xff]
    %v1048 = vld [vmem:[%s1032 + $0x78] sm:$0xff]
    %1049 = vmatpush.msra.mxu0 %v1048
    %1050 = vmatpush.msra.mxu0 %v1047
    %1051 = vmatpush.msra.mxu0 %v1046
    %1052 = vmatpush.msra.mxu0 %v1045
    %1053 = vmatpush.msra.mxu0 %v1044
    %1054 = vmatpush.msra.mxu0 %v1043
    %1055 = vmatpush.msra.mxu0 %v1042
    %1056 = vmatpush.msra.mxu0 %v1041
    %1057 = vmatpush.msra.mxu0 %v1040
    %1058 = vmatpush.msra.mxu0 %v1039
    %1059 = vmatpush.msra.mxu0 %v1038
    %1060 = vmatpush.msra.mxu0 %v1037
    %1061 = vmatpush.msra.mxu0 %v1036
    %1062 = vmatpush.msra.mxu0 %v1035
    %1063 = vmatpush.msra.mxu0 %v1034
    %1064 = vmatpush.msra.mxu0 %v1033
    %1065 = vmatmul.f32.gmra.mxu0 %v1009
    %v1066 = vpop.f32.mrf.mxu0
    %v1067 = vadd.f32 0.0, %v1066
    %1068 = vmatmul.f32.gmra.mxu0 %v1012
    %v1069 = vpop.f32.mrf.mxu0
    %v1070 = vadd.f32 0.0, %v1069
    %1071 = vmatmul.f32.gmra.mxu0 %v1015
    %v1072 = vpop.f32.mrf.mxu0
    %v1073 = vadd.f32 0.0, %v1072
    %1074 = vmatmul.f32.gmra.mxu0 %v1018
    %v1075 = vpop.f32.mrf.mxu0
    %v1076 = vadd.f32 0.0, %v1075
    %1077 = vmatmul.f32.gmra.mxu0 %v1021
    %v1078 = vpop.f32.mrf.mxu0
    %v1079 = vadd.f32 0.0, %v1078
    %1080 = vmatmul.f32.gmra.mxu0 %v1024
    %v1081 = vpop.f32.mrf.mxu0
    %v1082 = vadd.f32 0.0, %v1081
    %1083 = vmatmul.f32.gmra.mxu0 %v1027
    %v1084 = vpop.f32.mrf.mxu0
    %v1085 = vadd.f32 0.0, %v1084
    %1086 = vmatmul.f32.gmra.mxu0 %v1030
    %v1087 = vpop.f32.mrf.mxu0
    %v1088 = vadd.f32 0.0, %v1087
    %1089 = vdwg.mxu0
    %v1090 = vadd.f32 %v918, %v1067
    %v1091 = vadd.f32 %v919, %v1070
    %v1092 = vadd.f32 %v920, %v1073
    %v1093 = vadd.f32 %v921, %v1076
    %v1094 = vadd.f32 %v922, %v1079
    %v1095 = vadd.f32 %v923, %v1082
    %v1096 = vadd.f32 %v924, %v1085
    %v1097 = vadd.f32 %v925, %v1088
    %v1098 = vld [vmem:[#allocation2 + $0x100] sm:$0xff]
    %v1099 = vld [vmem:[#allocation2 + $0x108] sm:$0xff]
    %v1100 = vld [vmem:[#allocation2 + $0x110] sm:$0xff]
    %v1101 = vld [vmem:[#allocation2 + $0x118] sm:$0xff]
    %v1102 = vld [vmem:[#allocation2 + $0x120] sm:$0xff]
    %v1103 = vld [vmem:[#allocation2 + $0x128] sm:$0xff]
    %v1104 = vld [vmem:[#allocation2 + $0x130] sm:$0xff]
    %v1105 = vld [vmem:[#allocation2 + $0x138] sm:$0xff]
    %v1106 = vunpack.c.l.bf16 %v1098
    %v1107 = vunpack.c.h.bf16 %v1098
    %v1108 = vunpack.c.l.bf16 %v1099
    %v1109 = vunpack.c.h.bf16 %v1099
    %v1110 = vunpack.c.l.bf16 %v1100
    %v1111 = vunpack.c.h.bf16 %v1100
    %v1112 = vunpack.c.l.bf16 %v1101
    %v1113 = vunpack.c.h.bf16 %v1101
    %v1114 = vunpack.c.l.bf16 %v1102
    %v1115 = vunpack.c.h.bf16 %v1102
    %v1116 = vunpack.c.l.bf16 %v1103
    %v1117 = vunpack.c.h.bf16 %v1103
    %v1118 = vunpack.c.l.bf16 %v1104
    %v1119 = vunpack.c.h.bf16 %v1104
    %v1120 = vunpack.c.l.bf16 %v1105
    %v1121 = vunpack.c.h.bf16 %v1105
    %1122 = vmatpush.msra.mxu0 %v353
    %1123 = vmatpush.msra.mxu0 %v352
    %1124 = vmatpush.msra.mxu0 %v351
    %1125 = vmatpush.msra.mxu0 %v350
    %1126 = vmatpush.msra.mxu0 %v349
    %1127 = vmatpush.msra.mxu0 %v348
    %1128 = vmatpush.msra.mxu0 %v347
    %1129 = vmatpush.msra.mxu0 %v346
    %1130 = vmatpush.msra.mxu0 %v345
    %1131 = vmatpush.msra.mxu0 %v344
    %1132 = vmatpush.msra.mxu0 %v343
    %1133 = vmatpush.msra.mxu0 %v342
    %1134 = vmatpush.msra.mxu0 %v341
    %1135 = vmatpush.msra.mxu0 %v340
    %1136 = vmatpush.msra.mxu0 %v339
    %1137 = vmatpush.msra.mxu0 %v338
    %1138 = vmatmul.f32.gmra.mxu0 %v1106
    %v1139 = vpop.f32.mrf.mxu0
    %v1140 = vadd.f32 0.0, %v1139
    %1141 = vmatmul.f32.gmra.mxu0 %v1108
    %v1142 = vpop.f32.mrf.mxu0
    %v1143 = vadd.f32 0.0, %v1142
    %1144 = vmatmul.f32.gmra.mxu0 %v1110
    %v1145 = vpop.f32.mrf.mxu0
    %v1146 = vadd.f32 0.0, %v1145
    %1147 = vmatmul.f32.gmra.mxu0 %v1112
    %v1148 = vpop.f32.mrf.mxu0
    %v1149 = vadd.f32 0.0, %v1148
    %1150 = vmatmul.f32.gmra.mxu0 %v1114
    %v1151 = vpop.f32.mrf.mxu0
    %v1152 = vadd.f32 0.0, %v1151
    %1153 = vmatmul.f32.gmra.mxu0 %v1116
    %v1154 = vpop.f32.mrf.mxu0
    %v1155 = vadd.f32 0.0, %v1154
    %1156 = vmatmul.f32.gmra.mxu0 %v1118
    %v1157 = vpop.f32.mrf.mxu0
    %v1158 = vadd.f32 0.0, %v1157
    %1159 = vmatmul.f32.gmra.mxu0 %v1120
    %v1160 = vpop.f32.mrf.mxu0
    %v1161 = vadd.f32 0.0, %v1160
    %1162 = vdwg.mxu0
    %1163 = vmatpush.msra.mxu0 %v369
    %1164 = vmatpush.msra.mxu0 %v368
    %1165 = vmatpush.msra.mxu0 %v367
    %1166 = vmatpush.msra.mxu0 %v366
    %1167 = vmatpush.msra.mxu0 %v365
    %1168 = vmatpush.msra.mxu0 %v364
    %1169 = vmatpush.msra.mxu0 %v363
    %1170 = vmatpush.msra.mxu0 %v362
    %1171 = vmatpush.msra.mxu0 %v361
    %1172 = vmatpush.msra.mxu0 %v360
    %1173 = vmatpush.msra.mxu0 %v359
    %1174 = vmatpush.msra.mxu0 %v358
    %1175 = vmatpush.msra.mxu0 %v357
    %1176 = vmatpush.msra.mxu0 %v356
    %1177 = vmatpush.msra.mxu0 %v355
    %1178 = vmatpush.msra.mxu0 %v354
    %1179 = vmatmul.f32.gmra.mxu0 %v1107
    %v1180 = vpop.f32.mrf.mxu0
    %v1181 = vadd.f32 %v1140, %v1180
    %1182 = vmatmul.f32.gmra.mxu0 %v1109
    %v1183 = vpop.f32.mrf.mxu0
    %v1184 = vadd.f32 %v1143, %v1183
    %1185 = vmatmul.f32.gmra.mxu0 %v1111
    %v1186 = vpop.f32.mrf.mxu0
    %v1187 = vadd.f32 %v1146, %v1186
    %1188 = vmatmul.f32.gmra.mxu0 %v1113
    %v1189 = vpop.f32.mrf.mxu0
    %v1190 = vadd.f32 %v1149, %v1189
    %1191 = vmatmul.f32.gmra.mxu0 %v1115
    %v1192 = vpop.f32.mrf.mxu0
    %v1193 = vadd.f32 %v1152, %v1192
    %1194 = vmatmul.f32.gmra.mxu0 %v1117
    %v1195 = vpop.f32.mrf.mxu0
    %v1196 = vadd.f32 %v1155, %v1195
    %1197 = vmatmul.f32.gmra.mxu0 %v1119
    %v1198 = vpop.f32.mrf.mxu0
    %v1199 = vadd.f32 %v1158, %v1198
    %1200 = vmatmul.f32.gmra.mxu0 %v1121
    %v1201 = vpop.f32.mrf.mxu0
    %v1202 = vadd.f32 %v1161, %v1201
    %1203 = vdwg.mxu0
    %s1204 = scalar_lea.vmem [#allocation5], 512
    %v1205 = vld [vmem:[%s1204] sm:$0xff]
    %v1206 = vld [vmem:[%s1204 + $0x8] sm:$0xff]
    %v1207 = vld [vmem:[%s1204 + $0x10] sm:$0xff]
    %v1208 = vld [vmem:[%s1204 + $0x18] sm:$0xff]
    %v1209 = vld [vmem:[%s1204 + $0x20] sm:$0xff]
    %v1210 = vld [vmem:[%s1204 + $0x28] sm:$0xff]
    %v1211 = vld [vmem:[%s1204 + $0x30] sm:$0xff]
    %v1212 = vld [vmem:[%s1204 + $0x38] sm:$0xff]
    %v1213 = vld [vmem:[%s1204 + $0x40] sm:$0xff]
    %v1214 = vld [vmem:[%s1204 + $0x48] sm:$0xff]
    %v1215 = vld [vmem:[%s1204 + $0x50] sm:$0xff]
    %v1216 = vld [vmem:[%s1204 + $0x58] sm:$0xff]
    %v1217 = vld [vmem:[%s1204 + $0x60] sm:$0xff]
    %v1218 = vld [vmem:[%s1204 + $0x68] sm:$0xff]
    %v1219 = vld [vmem:[%s1204 + $0x70] sm:$0xff]
    %v1220 = vld [vmem:[%s1204 + $0x78] sm:$0xff]
    %1221 = vmatpush.msra.mxu0 %v1220
    %1222 = vmatpush.msra.mxu0 %v1219
    %1223 = vmatpush.msra.mxu0 %v1218
    %1224 = vmatpush.msra.mxu0 %v1217
    %1225 = vmatpush.msra.mxu0 %v1216
    %1226 = vmatpush.msra.mxu0 %v1215
    %1227 = vmatpush.msra.mxu0 %v1214
    %1228 = vmatpush.msra.mxu0 %v1213
    %1229 = vmatpush.msra.mxu0 %v1212
    %1230 = vmatpush.msra.mxu0 %v1211
    %1231 = vmatpush.msra.mxu0 %v1210
    %1232 = vmatpush.msra.mxu0 %v1209
    %1233 = vmatpush.msra.mxu0 %v1208
    %1234 = vmatpush.msra.mxu0 %v1207
    %1235 = vmatpush.msra.mxu0 %v1206
    %1236 = vmatpush.msra.mxu0 %v1205
    %1237 = vmatmul.f32.gmra.mxu0 %v1181
    %v1238 = vpop.f32.mrf.mxu0
    %v1239 = vadd.f32 0.0, %v1238
    %1240 = vmatmul.f32.gmra.mxu0 %v1184
    %v1241 = vpop.f32.mrf.mxu0
    %v1242 = vadd.f32 0.0, %v1241
    %1243 = vmatmul.f32.gmra.mxu0 %v1187
    %v1244 = vpop.f32.mrf.mxu0
    %v1245 = vadd.f32 0.0, %v1244
    %1246 = vmatmul.f32.gmra.mxu0 %v1190
    %v1247 = vpop.f32.mrf.mxu0
    %v1248 = vadd.f32 0.0, %v1247
    %1249 = vmatmul.f32.gmra.mxu0 %v1193
    %v1250 = vpop.f32.mrf.mxu0
    %v1251 = vadd.f32 0.0, %v1250
    %1252 = vmatmul.f32.gmra.mxu0 %v1196
    %v1253 = vpop.f32.mrf.mxu0
    %v1254 = vadd.f32 0.0, %v1253
    %1255 = vmatmul.f32.gmra.mxu0 %v1199
    %v1256 = vpop.f32.mrf.mxu0
    %v1257 = vadd.f32 0.0, %v1256
    %1258 = vmatmul.f32.gmra.mxu0 %v1202
    %v1259 = vpop.f32.mrf.mxu0
    %v1260 = vadd.f32 0.0, %v1259
    %1261 = vdwg.mxu0
    %v1262 = vadd.f32 %v1090, %v1239
    %v1263 = vadd.f32 %v1091, %v1242
    %v1264 = vadd.f32 %v1092, %v1245
    %v1265 = vadd.f32 %v1093, %v1248
    %v1266 = vadd.f32 %v1094, %v1251
    %v1267 = vadd.f32 %v1095, %v1254
    %v1268 = vadd.f32 %v1096, %v1257
    %v1269 = vadd.f32 %v1097, %v1260
    %v1270 = vld [vmem:[#allocation2 + $0x140] sm:$0xff]
    %v1271 = vld [vmem:[#allocation2 + $0x148] sm:$0xff]
    %v1272 = vld [vmem:[#allocation2 + $0x150] sm:$0xff]
    %v1273 = vld [vmem:[#allocation2 + $0x158] sm:$0xff]
    %v1274 = vld [vmem:[#allocation2 + $0x160] sm:$0xff]
    %v1275 = vld [vmem:[#allocation2 + $0x168] sm:$0xff]
    %v1276 = vld [vmem:[#allocation2 + $0x170] sm:$0xff]
    %v1277 = vld [vmem:[#allocation2 + $0x178] sm:$0xff]
    %v1278 = vunpack.c.l.bf16 %v1270
    %v1279 = vunpack.c.h.bf16 %v1270
    %v1280 = vunpack.c.l.bf16 %v1271
    %v1281 = vunpack.c.h.bf16 %v1271
    %v1282 = vunpack.c.l.bf16 %v1272
    %v1283 = vunpack.c.h.bf16 %v1272
    %v1284 = vunpack.c.l.bf16 %v1273
    %v1285 = vunpack.c.h.bf16 %v1273
    %v1286 = vunpack.c.l.bf16 %v1274
    %v1287 = vunpack.c.h.bf16 %v1274
    %v1288 = vunpack.c.l.bf16 %v1275
    %v1289 = vunpack.c.h.bf16 %v1275
    %v1290 = vunpack.c.l.bf16 %v1276
    %v1291 = vunpack.c.h.bf16 %v1276
    %v1292 = vunpack.c.l.bf16 %v1277
    %v1293 = vunpack.c.h.bf16 %v1277
    %1294 = vmatpush.msra.mxu0 %v353
    %1295 = vmatpush.msra.mxu0 %v352
    %1296 = vmatpush.msra.mxu0 %v351
    %1297 = vmatpush.msra.mxu0 %v350
    %1298 = vmatpush.msra.mxu0 %v349
    %1299 = vmatpush.msra.mxu0 %v348
    %1300 = vmatpush.msra.mxu0 %v347
    %1301 = vmatpush.msra.mxu0 %v346
    %1302 = vmatpush.msra.mxu0 %v345
    %1303 = vmatpush.msra.mxu0 %v344
    %1304 = vmatpush.msra.mxu0 %v343
    %1305 = vmatpush.msra.mxu0 %v342
    %1306 = vmatpush.msra.mxu0 %v341
    %1307 = vmatpush.msra.mxu0 %v340
    %1308 = vmatpush.msra.mxu0 %v339
    %1309 = vmatpush.msra.mxu0 %v338
    %1310 = vmatmul.f32.gmra.mxu0 %v1278
    %v1311 = vpop.f32.mrf.mxu0
    %v1312 = vadd.f32 0.0, %v1311
    %1313 = vmatmul.f32.gmra.mxu0 %v1280
    %v1314 = vpop.f32.mrf.mxu0
    %v1315 = vadd.f32 0.0, %v1314
    %1316 = vmatmul.f32.gmra.mxu0 %v1282
    %v1317 = vpop.f32.mrf.mxu0
    %v1318 = vadd.f32 0.0, %v1317
    %1319 = vmatmul.f32.gmra.mxu0 %v1284
    %v1320 = vpop.f32.mrf.mxu0
    %v1321 = vadd.f32 0.0, %v1320
    %1322 = vmatmul.f32.gmra.mxu0 %v1286
    %v1323 = vpop.f32.mrf.mxu0
    %v1324 = vadd.f32 0.0, %v1323
    %1325 = vmatmul.f32.gmra.mxu0 %v1288
    %v1326 = vpop.f32.mrf.mxu0
    %v1327 = vadd.f32 0.0, %v1326
    %1328 = vmatmul.f32.gmra.mxu0 %v1290
    %v1329 = vpop.f32.mrf.mxu0
    %v1330 = vadd.f32 0.0, %v1329
    %1331 = vmatmul.f32.gmra.mxu0 %v1292
    %v1332 = vpop.f32.mrf.mxu0
    %v1333 = vadd.f32 0.0, %v1332
    %1334 = vdwg.mxu0
    %1335 = vmatpush.msra.mxu0 %v369
    %1336 = vmatpush.msra.mxu0 %v368
    %1337 = vmatpush.msra.mxu0 %v367
    %1338 = vmatpush.msra.mxu0 %v366
    %1339 = vmatpush.msra.mxu0 %v365
    %1340 = vmatpush.msra.mxu0 %v364
    %1341 = vmatpush.msra.mxu0 %v363
    %1342 = vmatpush.msra.mxu0 %v362
    %1343 = vmatpush.msra.mxu0 %v361
    %1344 = vmatpush.msra.mxu0 %v360
    %1345 = vmatpush.msra.mxu0 %v359
    %1346 = vmatpush.msra.mxu0 %v358
    %1347 = vmatpush.msra.mxu0 %v357
    %1348 = vmatpush.msra.mxu0 %v356
    %1349 = vmatpush.msra.mxu0 %v355
    %1350 = vmatpush.msra.mxu0 %v354
    %1351 = vmatmul.f32.gmra.mxu0 %v1279
    %v1352 = vpop.f32.mrf.mxu0
    %v1353 = vadd.f32 %v1312, %v1352
    %1354 = vmatmul.f32.gmra.mxu0 %v1281
    %v1355 = vpop.f32.mrf.mxu0
    %v1356 = vadd.f32 %v1315, %v1355
    %1357 = vmatmul.f32.gmra.mxu0 %v1283
    %v1358 = vpop.f32.mrf.mxu0
    %v1359 = vadd.f32 %v1318, %v1358
    %1360 = vmatmul.f32.gmra.mxu0 %v1285
    %v1361 = vpop.f32.mrf.mxu0
    %v1362 = vadd.f32 %v1321, %v1361
    %1363 = vmatmul.f32.gmra.mxu0 %v1287
    %v1364 = vpop.f32.mrf.mxu0
    %v1365 = vadd.f32 %v1324, %v1364
    %1366 = vmatmul.f32.gmra.mxu0 %v1289
    %v1367 = vpop.f32.mrf.mxu0
    %v1368 = vadd.f32 %v1327, %v1367
    %1369 = vmatmul.f32.gmra.mxu0 %v1291
    %v1370 = vpop.f32.mrf.mxu0
    %v1371 = vadd.f32 %v1330, %v1370
    %1372 = vmatmul.f32.gmra.mxu0 %v1293
    %v1373 = vpop.f32.mrf.mxu0
    %v1374 = vadd.f32 %v1333, %v1373
    %1375 = vdwg.mxu0
    %s1376 = scalar_lea.vmem [#allocation5], 640
    %v1377 = vld [vmem:[%s1376] sm:$0xff]
    %v1378 = vld [vmem:[%s1376 + $0x8] sm:$0xff]
    %v1379 = vld [vmem:[%s1376 + $0x10] sm:$0xff]
    %v1380 = vld [vmem:[%s1376 + $0x18] sm:$0xff]
    %v1381 = vld [vmem:[%s1376 + $0x20] sm:$0xff]
    %v1382 = vld [vmem:[%s1376 + $0x28] sm:$0xff]
    %v1383 = vld [vmem:[%s1376 + $0x30] sm:$0xff]
    %v1384 = vld [vmem:[%s1376 + $0x38] sm:$0xff]
    %v1385 = vld [vmem:[%s1376 + $0x40] sm:$0xff]
    %v1386 = vld [vmem:[%s1376 + $0x48] sm:$0xff]
    %v1387 = vld [vmem:[%s1376 + $0x50] sm:$0xff]
    %v1388 = vld [vmem:[%s1376 + $0x58] sm:$0xff]
    %v1389 = vld [vmem:[%s1376 + $0x60] sm:$0xff]
    %v1390 = vld [vmem:[%s1376 + $0x68] sm:$0xff]
    %v1391 = vld [vmem:[%s1376 + $0x70] sm:$0xff]
    %v1392 = vld [vmem:[%s1376 + $0x78] sm:$0xff]
    %1393 = vmatpush.msra.mxu0 %v1392
    %1394 = vmatpush.msra.mxu0 %v1391
    %1395 = vmatpush.msra.mxu0 %v1390
    %1396 = vmatpush.msra.mxu0 %v1389
    %1397 = vmatpush.msra.mxu0 %v1388
    %1398 = vmatpush.msra.mxu0 %v1387
    %1399 = vmatpush.msra.mxu0 %v1386
    %1400 = vmatpush.msra.mxu0 %v1385
    %1401 = vmatpush.msra.mxu0 %v1384
    %1402 = vmatpush.msra.mxu0 %v1383
    %1403 = vmatpush.msra.mxu0 %v1382
    %1404 = vmatpush.msra.mxu0 %v1381
    %1405 = vmatpush.msra.mxu0 %v1380
    %1406 = vmatpush.msra.mxu0 %v1379
    %1407 = vmatpush.msra.mxu0 %v1378
    %1408 = vmatpush.msra.mxu0 %v1377
    %1409 = vmatmul.f32.gmra.mxu0 %v1353
    %v1410 = vpop.f32.mrf.mxu0
    %v1411 = vadd.f32 0.0, %v1410
    %1412 = vmatmul.f32.gmra.mxu0 %v1356
    %v1413 = vpop.f32.mrf.mxu0
    %v1414 = vadd.f32 0.0, %v1413
    %1415 = vmatmul.f32.gmra.mxu0 %v1359
    %v1416 = vpop.f32.mrf.mxu0
    %v1417 = vadd.f32 0.0, %v1416
    %1418 = vmatmul.f32.gmra.mxu0 %v1362
    %v1419 = vpop.f32.mrf.mxu0
    %v1420 = vadd.f32 0.0, %v1419
    %1421 = vmatmul.f32.gmra.mxu0 %v1365
    %v1422 = vpop.f32.mrf.mxu0
    %v1423 = vadd.f32 0.0, %v1422
    %1424 = vmatmul.f32.gmra.mxu0 %v1368
    %v1425 = vpop.f32.mrf.mxu0
    %v1426 = vadd.f32 0.0, %v1425
    %1427 = vmatmul.f32.gmra.mxu0 %v1371
    %v1428 = vpop.f32.mrf.mxu0
    %v1429 = vadd.f32 0.0, %v1428
    %1430 = vmatmul.f32.gmra.mxu0 %v1374
    %v1431 = vpop.f32.mrf.mxu0
    %v1432 = vadd.f32 0.0, %v1431
    %1433 = vdwg.mxu0
    %v1434 = vadd.f32 %v1262, %v1411
    %v1435 = vadd.f32 %v1263, %v1414
    %v1436 = vadd.f32 %v1264, %v1417
    %v1437 = vadd.f32 %v1265, %v1420
    %v1438 = vadd.f32 %v1266, %v1423
    %v1439 = vadd.f32 %v1267, %v1426
    %v1440 = vadd.f32 %v1268, %v1429
    %v1441 = vadd.f32 %v1269, %v1432
    %v1442 = vld [vmem:[#allocation2 + $0x180] sm:$0xff]
    %v1443 = vld [vmem:[#allocation2 + $0x188] sm:$0xff]
    %v1444 = vld [vmem:[#allocation2 + $0x190] sm:$0xff]
    %v1445 = vld [vmem:[#allocation2 + $0x198] sm:$0xff]
    %v1446 = vld [vmem:[#allocation2 + $0x1a0] sm:$0xff]
    %v1447 = vld [vmem:[#allocation2 + $0x1a8] sm:$0xff]
    %v1448 = vld [vmem:[#allocation2 + $0x1b0] sm:$0xff]
    %v1449 = vld [vmem:[#allocation2 + $0x1b8] sm:$0xff]
    %v1450 = vunpack.c.l.bf16 %v1442
    %v1451 = vunpack.c.h.bf16 %v1442
    %v1452 = vunpack.c.l.bf16 %v1443
    %v1453 = vunpack.c.h.bf16 %v1443
    %v1454 = vunpack.c.l.bf16 %v1444
    %v1455 = vunpack.c.h.bf16 %v1444
    %v1456 = vunpack.c.l.bf16 %v1445
    %v1457 = vunpack.c.h.bf16 %v1445
    %v1458 = vunpack.c.l.bf16 %v1446
    %v1459 = vunpack.c.h.bf16 %v1446
    %v1460 = vunpack.c.l.bf16 %v1447
    %v1461 = vunpack.c.h.bf16 %v1447
    %v1462 = vunpack.c.l.bf16 %v1448
    %v1463 = vunpack.c.h.bf16 %v1448
    %v1464 = vunpack.c.l.bf16 %v1449
    %v1465 = vunpack.c.h.bf16 %v1449
    %1466 = vmatpush.msra.mxu0 %v353
    %1467 = vmatpush.msra.mxu0 %v352
    %1468 = vmatpush.msra.mxu0 %v351
    %1469 = vmatpush.msra.mxu0 %v350
    %1470 = vmatpush.msra.mxu0 %v349
    %1471 = vmatpush.msra.mxu0 %v348
    %1472 = vmatpush.msra.mxu0 %v347
    %1473 = vmatpush.msra.mxu0 %v346
    %1474 = vmatpush.msra.mxu0 %v345
    %1475 = vmatpush.msra.mxu0 %v344
    %1476 = vmatpush.msra.mxu0 %v343
    %1477 = vmatpush.msra.mxu0 %v342
    %1478 = vmatpush.msra.mxu0 %v341
    %1479 = vmatpush.msra.mxu0 %v340
    %1480 = vmatpush.msra.mxu0 %v339
    %1481 = vmatpush.msra.mxu0 %v338
    %1482 = vmatmul.f32.gmra.mxu0 %v1450
    %v1483 = vpop.f32.mrf.mxu0
    %v1484 = vadd.f32 0.0, %v1483
    %1485 = vmatmul.f32.gmra.mxu0 %v1452
    %v1486 = vpop.f32.mrf.mxu0
    %v1487 = vadd.f32 0.0, %v1486
    %1488 = vmatmul.f32.gmra.mxu0 %v1454
    %v1489 = vpop.f32.mrf.mxu0
    %v1490 = vadd.f32 0.0, %v1489
    %1491 = vmatmul.f32.gmra.mxu0 %v1456
    %v1492 = vpop.f32.mrf.mxu0
    %v1493 = vadd.f32 0.0, %v1492
    %1494 = vmatmul.f32.gmra.mxu0 %v1458
    %v1495 = vpop.f32.mrf.mxu0
    %v1496 = vadd.f32 0.0, %v1495
    %1497 = vmatmul.f32.gmra.mxu0 %v1460
    %v1498 = vpop.f32.mrf.mxu0
    %v1499 = vadd.f32 0.0, %v1498
    %1500 = vmatmul.f32.gmra.mxu0 %v1462
    %v1501 = vpop.f32.mrf.mxu0
    %v1502 = vadd.f32 0.0, %v1501
    %1503 = vmatmul.f32.gmra.mxu0 %v1464
    %v1504 = vpop.f32.mrf.mxu0
    %v1505 = vadd.f32 0.0, %v1504
    %1506 = vdwg.mxu0
    %1507 = vmatpush.msra.mxu0 %v369
    %1508 = vmatpush.msra.mxu0 %v368
    %1509 = vmatpush.msra.mxu0 %v367
    %1510 = vmatpush.msra.mxu0 %v366
    %1511 = vmatpush.msra.mxu0 %v365
    %1512 = vmatpush.msra.mxu0 %v364
    %1513 = vmatpush.msra.mxu0 %v363
    %1514 = vmatpush.msra.mxu0 %v362
    %1515 = vmatpush.msra.mxu0 %v361
    %1516 = vmatpush.msra.mxu0 %v360
    %1517 = vmatpush.msra.mxu0 %v359
    %1518 = vmatpush.msra.mxu0 %v358
    %1519 = vmatpush.msra.mxu0 %v357
    %1520 = vmatpush.msra.mxu0 %v356
    %1521 = vmatpush.msra.mxu0 %v355
    %1522 = vmatpush.msra.mxu0 %v354
    %1523 = vmatmul.f32.gmra.mxu0 %v1451
    %v1524 = vpop.f32.mrf.mxu0
    %v1525 = vadd.f32 %v1484, %v1524
    %1526 = vmatmul.f32.gmra.mxu0 %v1453
    %v1527 = vpop.f32.mrf.mxu0
    %v1528 = vadd.f32 %v1487, %v1527
    %1529 = vmatmul.f32.gmra.mxu0 %v1455
    %v1530 = vpop.f32.mrf.mxu0
    %v1531 = vadd.f32 %v1490, %v1530
    %1532 = vmatmul.f32.gmra.mxu0 %v1457
    %v1533 = vpop.f32.mrf.mxu0
    %v1534 = vadd.f32 %v1493, %v1533
    %1535 = vmatmul.f32.gmra.mxu0 %v1459
    %v1536 = vpop.f32.mrf.mxu0
    %v1537 = vadd.f32 %v1496, %v1536
    %1538 = vmatmul.f32.gmra.mxu0 %v1461
    %v1539 = vpop.f32.mrf.mxu0
    %v1540 = vadd.f32 %v1499, %v1539
    %1541 = vmatmul.f32.gmra.mxu0 %v1463
    %v1542 = vpop.f32.mrf.mxu0
    %v1543 = vadd.f32 %v1502, %v1542
    %1544 = vmatmul.f32.gmra.mxu0 %v1465
    %v1545 = vpop.f32.mrf.mxu0
    %v1546 = vadd.f32 %v1505, %v1545
    %1547 = vdwg.mxu0
    %s1548 = scalar_lea.vmem [#allocation5], 768
    %v1549 = vld [vmem:[%s1548] sm:$0xff]
    %v1550 = vld [vmem:[%s1548 + $0x8] sm:$0xff]
    %v1551 = vld [vmem:[%s1548 + $0x10] sm:$0xff]
    %v1552 = vld [vmem:[%s1548 + $0x18] sm:$0xff]
    %v1553 = vld [vmem:[%s1548 + $0x20] sm:$0xff]
    %v1554 = vld [vmem:[%s1548 + $0x28] sm:$0xff]
    %v1555 = vld [vmem:[%s1548 + $0x30] sm:$0xff]
    %v1556 = vld [vmem:[%s1548 + $0x38] sm:$0xff]
    %v1557 = vld [vmem:[%s1548 + $0x40] sm:$0xff]
    %v1558 = vld [vmem:[%s1548 + $0x48] sm:$0xff]
    %v1559 = vld [vmem:[%s1548 + $0x50] sm:$0xff]
    %v1560 = vld [vmem:[%s1548 + $0x58] sm:$0xff]
    %v1561 = vld [vmem:[%s1548 + $0x60] sm:$0xff]
    %v1562 = vld [vmem:[%s1548 + $0x68] sm:$0xff]
    %v1563 = vld [vmem:[%s1548 + $0x70] sm:$0xff]
    %v1564 = vld [vmem:[%s1548 + $0x78] sm:$0xff]
    %1565 = vmatpush.msra.mxu0 %v1564
    %1566 = vmatpush.msra.mxu0 %v1563
    %1567 = vmatpush.msra.mxu0 %v1562
    %1568 = vmatpush.msra.mxu0 %v1561
    %1569 = vmatpush.msra.mxu0 %v1560
    %1570 = vmatpush.msra.mxu0 %v1559
    %1571 = vmatpush.msra.mxu0 %v1558
    %1572 = vmatpush.msra.mxu0 %v1557
    %1573 = vmatpush.msra.mxu0 %v1556
    %1574 = vmatpush.msra.mxu0 %v1555
    %1575 = vmatpush.msra.mxu0 %v1554
    %1576 = vmatpush.msra.mxu0 %v1553
    %1577 = vmatpush.msra.mxu0 %v1552
    %1578 = vmatpush.msra.mxu0 %v1551
    %1579 = vmatpush.msra.mxu0 %v1550
    %1580 = vmatpush.msra.mxu0 %v1549
    %1581 = vmatmul.f32.gmra.mxu0 %v1525
    %v1582 = vpop.f32.mrf.mxu0
    %v1583 = vadd.f32 0.0, %v1582
    %1584 = vmatmul.f32.gmra.mxu0 %v1528
    %v1585 = vpop.f32.mrf.mxu0
    %v1586 = vadd.f32 0.0, %v1585
    %1587 = vmatmul.f32.gmra.mxu0 %v1531
    %v1588 = vpop.f32.mrf.mxu0
    %v1589 = vadd.f32 0.0, %v1588
    %1590 = vmatmul.f32.gmra.mxu0 %v1534
    %v1591 = vpop.f32.mrf.mxu0
    %v1592 = vadd.f32 0.0, %v1591
    %1593 = vmatmul.f32.gmra.mxu0 %v1537
    %v1594 = vpop.f32.mrf.mxu0
    %v1595 = vadd.f32 0.0, %v1594
    %1596 = vmatmul.f32.gmra.mxu0 %v1540
    %v1597 = vpop.f32.mrf.mxu0
    %v1598 = vadd.f32 0.0, %v1597
    %1599 = vmatmul.f32.gmra.mxu0 %v1543
    %v1600 = vpop.f32.mrf.mxu0
    %v1601 = vadd.f32 0.0, %v1600
    %1602 = vmatmul.f32.gmra.mxu0 %v1546
    %v1603 = vpop.f32.mrf.mxu0
    %v1604 = vadd.f32 0.0, %v1603
    %1605 = vdwg.mxu0
    %v1606 = vadd.f32 %v1434, %v1583
    %v1607 = vadd.f32 %v1435, %v1586
    %v1608 = vadd.f32 %v1436, %v1589
    %v1609 = vadd.f32 %v1437, %v1592
    %v1610 = vadd.f32 %v1438, %v1595
    %v1611 = vadd.f32 %v1439, %v1598
    %v1612 = vadd.f32 %v1440, %v1601
    %v1613 = vadd.f32 %v1441, %v1604
    %v1614 = vld [vmem:[#allocation2 + $0x1c0] sm:$0xff]
    %v1615 = vld [vmem:[#allocation2 + $0x1c8] sm:$0xff]
    %v1616 = vld [vmem:[#allocation2 + $0x1d0] sm:$0xff]
    %v1617 = vld [vmem:[#allocation2 + $0x1d8] sm:$0xff]
    %v1618 = vld [vmem:[#allocation2 + $0x1e0] sm:$0xff]
    %v1619 = vld [vmem:[#allocation2 + $0x1e8] sm:$0xff]
    %v1620 = vld [vmem:[#allocation2 + $0x1f0] sm:$0xff]
    %v1621 = vld [vmem:[#allocation2 + $0x1f8] sm:$0xff]
    %v1622 = vunpack.c.l.bf16 %v1614
    %v1623 = vunpack.c.h.bf16 %v1614
    %v1624 = vunpack.c.l.bf16 %v1615
    %v1625 = vunpack.c.h.bf16 %v1615
    %v1626 = vunpack.c.l.bf16 %v1616
    %v1627 = vunpack.c.h.bf16 %v1616
    %v1628 = vunpack.c.l.bf16 %v1617
    %v1629 = vunpack.c.h.bf16 %v1617
    %v1630 = vunpack.c.l.bf16 %v1618
    %v1631 = vunpack.c.h.bf16 %v1618
    %v1632 = vunpack.c.l.bf16 %v1619
    %v1633 = vunpack.c.h.bf16 %v1619
    %v1634 = vunpack.c.l.bf16 %v1620
    %v1635 = vunpack.c.h.bf16 %v1620
    %v1636 = vunpack.c.l.bf16 %v1621
    %v1637 = vunpack.c.h.bf16 %v1621
    %1638 = vmatpush.msra.mxu0 %v353
    %1639 = vmatpush.msra.mxu0 %v352
    %1640 = vmatpush.msra.mxu0 %v351
    %1641 = vmatpush.msra.mxu0 %v350
    %1642 = vmatpush.msra.mxu0 %v349
    %1643 = vmatpush.msra.mxu0 %v348
    %1644 = vmatpush.msra.mxu0 %v347
    %1645 = vmatpush.msra.mxu0 %v346
    %1646 = vmatpush.msra.mxu0 %v345
    %1647 = vmatpush.msra.mxu0 %v344
    %1648 = vmatpush.msra.mxu0 %v343
    %1649 = vmatpush.msra.mxu0 %v342
    %1650 = vmatpush.msra.mxu0 %v341
    %1651 = vmatpush.msra.mxu0 %v340
    %1652 = vmatpush.msra.mxu0 %v339
    %1653 = vmatpush.msra.mxu0 %v338
    %1654 = vmatmul.f32.gmra.mxu0 %v1622
    %v1655 = vpop.f32.mrf.mxu0
    %v1656 = vadd.f32 0.0, %v1655
    %1657 = vmatmul.f32.gmra.mxu0 %v1624
    %v1658 = vpop.f32.mrf.mxu0
    %v1659 = vadd.f32 0.0, %v1658
    %1660 = vmatmul.f32.gmra.mxu0 %v1626
    %v1661 = vpop.f32.mrf.mxu0
    %v1662 = vadd.f32 0.0, %v1661
    %1663 = vmatmul.f32.gmra.mxu0 %v1628
    %v1664 = vpop.f32.mrf.mxu0
    %v1665 = vadd.f32 0.0, %v1664
    %1666 = vmatmul.f32.gmra.mxu0 %v1630
    %v1667 = vpop.f32.mrf.mxu0
    %v1668 = vadd.f32 0.0, %v1667
    %1669 = vmatmul.f32.gmra.mxu0 %v1632
    %v1670 = vpop.f32.mrf.mxu0
    %v1671 = vadd.f32 0.0, %v1670
    %1672 = vmatmul.f32.gmra.mxu0 %v1634
    %v1673 = vpop.f32.mrf.mxu0
    %v1674 = vadd.f32 0.0, %v1673
    %1675 = vmatmul.f32.gmra.mxu0 %v1636
    %v1676 = vpop.f32.mrf.mxu0
    %v1677 = vadd.f32 0.0, %v1676
    %1678 = vdwg.mxu0
    %1679 = vmatpush.msra.mxu0 %v369
    %1680 = vmatpush.msra.mxu0 %v368
    %1681 = vmatpush.msra.mxu0 %v367
    %1682 = vmatpush.msra.mxu0 %v366
    %1683 = vmatpush.msra.mxu0 %v365
    %1684 = vmatpush.msra.mxu0 %v364
    %1685 = vmatpush.msra.mxu0 %v363
    %1686 = vmatpush.msra.mxu0 %v362
    %1687 = vmatpush.msra.mxu0 %v361
    %1688 = vmatpush.msra.mxu0 %v360
    %1689 = vmatpush.msra.mxu0 %v359
    %1690 = vmatpush.msra.mxu0 %v358
    %1691 = vmatpush.msra.mxu0 %v357
    %1692 = vmatpush.msra.mxu0 %v356
    %1693 = vmatpush.msra.mxu0 %v355
    %1694 = vmatpush.msra.mxu0 %v354
    %1695 = vmatmul.f32.gmra.mxu0 %v1623
    %v1696 = vpop.f32.mrf.mxu0
    %v1697 = vadd.f32 %v1656, %v1696
    %1698 = vmatmul.f32.gmra.mxu0 %v1625
    %v1699 = vpop.f32.mrf.mxu0
    %v1700 = vadd.f32 %v1659, %v1699
    %1701 = vmatmul.f32.gmra.mxu0 %v1627
    %v1702 = vpop.f32.mrf.mxu0
    %v1703 = vadd.f32 %v1662, %v1702
    %1704 = vmatmul.f32.gmra.mxu0 %v1629
    %v1705 = vpop.f32.mrf.mxu0
    %v1706 = vadd.f32 %v1665, %v1705
    %1707 = vmatmul.f32.gmra.mxu0 %v1631
    %v1708 = vpop.f32.mrf.mxu0
    %v1709 = vadd.f32 %v1668, %v1708
    %1710 = vmatmul.f32.gmra.mxu0 %v1633
    %v1711 = vpop.f32.mrf.mxu0
    %v1712 = vadd.f32 %v1671, %v1711
    %1713 = vmatmul.f32.gmra.mxu0 %v1635
    %v1714 = vpop.f32.mrf.mxu0
    %v1715 = vadd.f32 %v1674, %v1714
    %1716 = vmatmul.f32.gmra.mxu0 %v1637
    %v1717 = vpop.f32.mrf.mxu0
    %v1718 = vadd.f32 %v1677, %v1717
    %1719 = vdwg.mxu0
    %s1720 = scalar_lea.vmem [#allocation5], 896
    %v1721 = vld [vmem:[%s1720] sm:$0xff]
    %v1722 = vld [vmem:[%s1720 + $0x8] sm:$0xff]
    %v1723 = vld [vmem:[%s1720 + $0x10] sm:$0xff]
    %v1724 = vld [vmem:[%s1720 + $0x18] sm:$0xff]
    %v1725 = vld [vmem:[%s1720 + $0x20] sm:$0xff]
    %v1726 = vld [vmem:[%s1720 + $0x28] sm:$0xff]
    %v1727 = vld [vmem:[%s1720 + $0x30] sm:$0xff]
    %v1728 = vld [vmem:[%s1720 + $0x38] sm:$0xff]
    %v1729 = vld [vmem:[%s1720 + $0x40] sm:$0xff]
    %v1730 = vld [vmem:[%s1720 + $0x48] sm:$0xff]
    %v1731 = vld [vmem:[%s1720 + $0x50] sm:$0xff]
    %v1732 = vld [vmem:[%s1720 + $0x58] sm:$0xff]
    %v1733 = vld [vmem:[%s1720 + $0x60] sm:$0xff]
    %v1734 = vld [vmem:[%s1720 + $0x68] sm:$0xff]
    %v1735 = vld [vmem:[%s1720 + $0x70] sm:$0xff]
    %v1736 = vld [vmem:[%s1720 + $0x78] sm:$0xff]
    %1737 = vmatpush.msra.mxu0 %v1736
    %1738 = vmatpush.msra.mxu0 %v1735
    %1739 = vmatpush.msra.mxu0 %v1734
    %1740 = vmatpush.msra.mxu0 %v1733
    %1741 = vmatpush.msra.mxu0 %v1732
    %1742 = vmatpush.msra.mxu0 %v1731
    %1743 = vmatpush.msra.mxu0 %v1730
    %1744 = vmatpush.msra.mxu0 %v1729
    %1745 = vmatpush.msra.mxu0 %v1728
    %1746 = vmatpush.msra.mxu0 %v1727
    %1747 = vmatpush.msra.mxu0 %v1726
    %1748 = vmatpush.msra.mxu0 %v1725
    %1749 = vmatpush.msra.mxu0 %v1724
    %1750 = vmatpush.msra.mxu0 %v1723
    %1751 = vmatpush.msra.mxu0 %v1722
    %1752 = vmatpush.msra.mxu0 %v1721
    %1753 = vmatmul.f32.gmra.mxu0 %v1697
    %v1754 = vpop.f32.mrf.mxu0
    %v1755 = vadd.f32 0.0, %v1754
    %1756 = vmatmul.f32.gmra.mxu0 %v1700
    %v1757 = vpop.f32.mrf.mxu0
    %v1758 = vadd.f32 0.0, %v1757
    %1759 = vmatmul.f32.gmra.mxu0 %v1703
    %v1760 = vpop.f32.mrf.mxu0
    %v1761 = vadd.f32 0.0, %v1760
    %1762 = vmatmul.f32.gmra.mxu0 %v1706
    %v1763 = vpop.f32.mrf.mxu0
    %v1764 = vadd.f32 0.0, %v1763
    %1765 = vmatmul.f32.gmra.mxu0 %v1709
    %v1766 = vpop.f32.mrf.mxu0
    %v1767 = vadd.f32 0.0, %v1766
    %1768 = vmatmul.f32.gmra.mxu0 %v1712
    %v1769 = vpop.f32.mrf.mxu0
    %v1770 = vadd.f32 0.0, %v1769
    %1771 = vmatmul.f32.gmra.mxu0 %v1715
    %v1772 = vpop.f32.mrf.mxu0
    %v1773 = vadd.f32 0.0, %v1772
    %1774 = vmatmul.f32.gmra.mxu0 %v1718
    %v1775 = vpop.f32.mrf.mxu0
    %v1776 = vadd.f32 0.0, %v1775
    %1777 = vdwg.mxu0
    %v1778 = vadd.f32 %v1606, %v1755
    %v1779 = vadd.f32 %v1607, %v1758
    %v1780 = vadd.f32 %v1608, %v1761
    %v1781 = vadd.f32 %v1609, %v1764
    %v1782 = vadd.f32 %v1610, %v1767
    %v1783 = vadd.f32 %v1611, %v1770
    %v1784 = vadd.f32 %v1612, %v1773
    %v1785 = vadd.f32 %v1613, %v1776
    %v1786 = vld [vmem:[#allocation2 + $0x200] sm:$0xff]
    %v1787 = vld [vmem:[#allocation2 + $0x208] sm:$0xff]
    %v1788 = vld [vmem:[#allocation2 + $0x210] sm:$0xff]
    %v1789 = vld [vmem:[#allocation2 + $0x218] sm:$0xff]
    %v1790 = vld [vmem:[#allocation2 + $0x220] sm:$0xff]
    %v1791 = vld [vmem:[#allocation2 + $0x228] sm:$0xff]
    %v1792 = vld [vmem:[#allocation2 + $0x230] sm:$0xff]
    %v1793 = vld [vmem:[#allocation2 + $0x238] sm:$0xff]
    %v1794 = vunpack.c.l.bf16 %v1786
    %v1795 = vunpack.c.h.bf16 %v1786
    %v1796 = vunpack.c.l.bf16 %v1787
    %v1797 = vunpack.c.h.bf16 %v1787
    %v1798 = vunpack.c.l.bf16 %v1788
    %v1799 = vunpack.c.h.bf16 %v1788
    %v1800 = vunpack.c.l.bf16 %v1789
    %v1801 = vunpack.c.h.bf16 %v1789
    %v1802 = vunpack.c.l.bf16 %v1790
    %v1803 = vunpack.c.h.bf16 %v1790
    %v1804 = vunpack.c.l.bf16 %v1791
    %v1805 = vunpack.c.h.bf16 %v1791
    %v1806 = vunpack.c.l.bf16 %v1792
    %v1807 = vunpack.c.h.bf16 %v1792
    %v1808 = vunpack.c.l.bf16 %v1793
    %v1809 = vunpack.c.h.bf16 %v1793
    %1810 = vmatpush.msra.mxu0 %v353
    %1811 = vmatpush.msra.mxu0 %v352
    %1812 = vmatpush.msra.mxu0 %v351
    %1813 = vmatpush.msra.mxu0 %v350
    %1814 = vmatpush.msra.mxu0 %v349
    %1815 = vmatpush.msra.mxu0 %v348
    %1816 = vmatpush.msra.mxu0 %v347
    %1817 = vmatpush.msra.mxu0 %v346
    %1818 = vmatpush.msra.mxu0 %v345
    %1819 = vmatpush.msra.mxu0 %v344
    %1820 = vmatpush.msra.mxu0 %v343
    %1821 = vmatpush.msra.mxu0 %v342
    %1822 = vmatpush.msra.mxu0 %v341
    %1823 = vmatpush.msra.mxu0 %v340
    %1824 = vmatpush.msra.mxu0 %v339
    %1825 = vmatpush.msra.mxu0 %v338
    %1826 = vmatmul.f32.gmra.mxu0 %v1794
    %v1827 = vpop.f32.mrf.mxu0
    %v1828 = vadd.f32 0.0, %v1827
    %1829 = vmatmul.f32.gmra.mxu0 %v1796
    %v1830 = vpop.f32.mrf.mxu0
    %v1831 = vadd.f32 0.0, %v1830
    %1832 = vmatmul.f32.gmra.mxu0 %v1798
    %v1833 = vpop.f32.mrf.mxu0
    %v1834 = vadd.f32 0.0, %v1833
    %1835 = vmatmul.f32.gmra.mxu0 %v1800
    %v1836 = vpop.f32.mrf.mxu0
    %v1837 = vadd.f32 0.0, %v1836
    %1838 = vmatmul.f32.gmra.mxu0 %v1802
    %v1839 = vpop.f32.mrf.mxu0
    %v1840 = vadd.f32 0.0, %v1839
    %1841 = vmatmul.f32.gmra.mxu0 %v1804
    %v1842 = vpop.f32.mrf.mxu0
    %v1843 = vadd.f32 0.0, %v1842
    %1844 = vmatmul.f32.gmra.mxu0 %v1806
    %v1845 = vpop.f32.mrf.mxu0
    %v1846 = vadd.f32 0.0, %v1845
    %1847 = vmatmul.f32.gmra.mxu0 %v1808
    %v1848 = vpop.f32.mrf.mxu0
    %v1849 = vadd.f32 0.0, %v1848
    %1850 = vdwg.mxu0
    %1851 = vmatpush.msra.mxu0 %v369
    %1852 = vmatpush.msra.mxu0 %v368
    %1853 = vmatpush.msra.mxu0 %v367
    %1854 = vmatpush.msra.mxu0 %v366
    %1855 = vmatpush.msra.mxu0 %v365
    %1856 = vmatpush.msra.mxu0 %v364
    %1857 = vmatpush.msra.mxu0 %v363
    %1858 = vmatpush.msra.mxu0 %v362
    %1859 = vmatpush.msra.mxu0 %v361
    %1860 = vmatpush.msra.mxu0 %v360
    %1861 = vmatpush.msra.mxu0 %v359
    %1862 = vmatpush.msra.mxu0 %v358
    %1863 = vmatpush.msra.mxu0 %v357
    %1864 = vmatpush.msra.mxu0 %v356
    %1865 = vmatpush.msra.mxu0 %v355
    %1866 = vmatpush.msra.mxu0 %v354
    %1867 = vmatmul.f32.gmra.mxu0 %v1795
    %v1868 = vpop.f32.mrf.mxu0
    %v1869 = vadd.f32 %v1828, %v1868
    %1870 = vmatmul.f32.gmra.mxu0 %v1797
    %v1871 = vpop.f32.mrf.mxu0
    %v1872 = vadd.f32 %v1831, %v1871
    %1873 = vmatmul.f32.gmra.mxu0 %v1799
    %v1874 = vpop.f32.mrf.mxu0
    %v1875 = vadd.f32 %v1834, %v1874
    %1876 = vmatmul.f32.gmra.mxu0 %v1801
    %v1877 = vpop.f32.mrf.mxu0
    %v1878 = vadd.f32 %v1837, %v1877
    %1879 = vmatmul.f32.gmra.mxu0 %v1803
    %v1880 = vpop.f32.mrf.mxu0
    %v1881 = vadd.f32 %v1840, %v1880
    %1882 = vmatmul.f32.gmra.mxu0 %v1805
    %v1883 = vpop.f32.mrf.mxu0
    %v1884 = vadd.f32 %v1843, %v1883
    %1885 = vmatmul.f32.gmra.mxu0 %v1807
    %v1886 = vpop.f32.mrf.mxu0
    %v1887 = vadd.f32 %v1846, %v1886
    %1888 = vmatmul.f32.gmra.mxu0 %v1809
    %v1889 = vpop.f32.mrf.mxu0
    %v1890 = vadd.f32 %v1849, %v1889
    %1891 = vdwg.mxu0
    %s1892 = scalar_lea.vmem [#allocation5], 1024
    %v1893 = vld [vmem:[%s1892] sm:$0xff]
    %v1894 = vld [vmem:[%s1892 + $0x8] sm:$0xff]
    %v1895 = vld [vmem:[%s1892 + $0x10] sm:$0xff]
    %v1896 = vld [vmem:[%s1892 + $0x18] sm:$0xff]
    %v1897 = vld [vmem:[%s1892 + $0x20] sm:$0xff]
    %v1898 = vld [vmem:[%s1892 + $0x28] sm:$0xff]
    %v1899 = vld [vmem:[%s1892 + $0x30] sm:$0xff]
    %v1900 = vld [vmem:[%s1892 + $0x38] sm:$0xff]
    %v1901 = vld [vmem:[%s1892 + $0x40] sm:$0xff]
    %v1902 = vld [vmem:[%s1892 + $0x48] sm:$0xff]
    %v1903 = vld [vmem:[%s1892 + $0x50] sm:$0xff]
    %v1904 = vld [vmem:[%s1892 + $0x58] sm:$0xff]
    %v1905 = vld [vmem:[%s1892 + $0x60] sm:$0xff]
    %v1906 = vld [vmem:[%s1892 + $0x68] sm:$0xff]
    %v1907 = vld [vmem:[%s1892 + $0x70] sm:$0xff]
    %v1908 = vld [vmem:[%s1892 + $0x78] sm:$0xff]
    %1909 = vmatpush.msra.mxu0 %v1908
    %1910 = vmatpush.msra.mxu0 %v1907
    %1911 = vmatpush.msra.mxu0 %v1906
    %1912 = vmatpush.msra.mxu0 %v1905
    %1913 = vmatpush.msra.mxu0 %v1904
    %1914 = vmatpush.msra.mxu0 %v1903
    %1915 = vmatpush.msra.mxu0 %v1902
    %1916 = vmatpush.msra.mxu0 %v1901
    %1917 = vmatpush.msra.mxu0 %v1900
    %1918 = vmatpush.msra.mxu0 %v1899
    %1919 = vmatpush.msra.mxu0 %v1898
    %1920 = vmatpush.msra.mxu0 %v1897
    %1921 = vmatpush.msra.mxu0 %v1896
    %1922 = vmatpush.msra.mxu0 %v1895
    %1923 = vmatpush.msra.mxu0 %v1894
    %1924 = vmatpush.msra.mxu0 %v1893
    %1925 = vmatmul.f32.gmra.mxu0 %v1869
    %v1926 = vpop.f32.mrf.mxu0
    %v1927 = vadd.f32 0.0, %v1926
    %1928 = vmatmul.f32.gmra.mxu0 %v1872
    %v1929 = vpop.f32.mrf.mxu0
    %v1930 = vadd.f32 0.0, %v1929
    %1931 = vmatmul.f32.gmra.mxu0 %v1875
    %v1932 = vpop.f32.mrf.mxu0
    %v1933 = vadd.f32 0.0, %v1932
    %1934 = vmatmul.f32.gmra.mxu0 %v1878
    %v1935 = vpop.f32.mrf.mxu0
    %v1936 = vadd.f32 0.0, %v1935
    %1937 = vmatmul.f32.gmra.mxu0 %v1881
    %v1938 = vpop.f32.mrf.mxu0
    %v1939 = vadd.f32 0.0, %v1938
    %1940 = vmatmul.f32.gmra.mxu0 %v1884
    %v1941 = vpop.f32.mrf.mxu0
    %v1942 = vadd.f32 0.0, %v1941
    %1943 = vmatmul.f32.gmra.mxu0 %v1887
    %v1944 = vpop.f32.mrf.mxu0
    %v1945 = vadd.f32 0.0, %v1944
    %1946 = vmatmul.f32.gmra.mxu0 %v1890
    %v1947 = vpop.f32.mrf.mxu0
    %v1948 = vadd.f32 0.0, %v1947
    %1949 = vdwg.mxu0
    %v1950 = vadd.f32 %v1778, %v1927
    %v1951 = vadd.f32 %v1779, %v1930
    %v1952 = vadd.f32 %v1780, %v1933
    %v1953 = vadd.f32 %v1781, %v1936
    %v1954 = vadd.f32 %v1782, %v1939
    %v1955 = vadd.f32 %v1783, %v1942
    %v1956 = vadd.f32 %v1784, %v1945
    %v1957 = vadd.f32 %v1785, %v1948
    %v1958 = vld [vmem:[#allocation2 + $0x240] sm:$0xff]
    %v1959 = vld [vmem:[#allocation2 + $0x248] sm:$0xff]
    %v1960 = vld [vmem:[#allocation2 + $0x250] sm:$0xff]
    %v1961 = vld [vmem:[#allocation2 + $0x258] sm:$0xff]
    %v1962 = vld [vmem:[#allocation2 + $0x260] sm:$0xff]
    %v1963 = vld [vmem:[#allocation2 + $0x268] sm:$0xff]
    %v1964 = vld [vmem:[#allocation2 + $0x270] sm:$0xff]
    %v1965 = vld [vmem:[#allocation2 + $0x278] sm:$0xff]
    %v1966 = vunpack.c.l.bf16 %v1958
    %v1967 = vunpack.c.h.bf16 %v1958
    %v1968 = vunpack.c.l.bf16 %v1959
    %v1969 = vunpack.c.h.bf16 %v1959
    %v1970 = vunpack.c.l.bf16 %v1960
    %v1971 = vunpack.c.h.bf16 %v1960
    %v1972 = vunpack.c.l.bf16 %v1961
    %v1973 = vunpack.c.h.bf16 %v1961
    %v1974 = vunpack.c.l.bf16 %v1962
    %v1975 = vunpack.c.h.bf16 %v1962
    %v1976 = vunpack.c.l.bf16 %v1963
    %v1977 = vunpack.c.h.bf16 %v1963
    %v1978 = vunpack.c.l.bf16 %v1964
    %v1979 = vunpack.c.h.bf16 %v1964
    %v1980 = vunpack.c.l.bf16 %v1965
    %v1981 = vunpack.c.h.bf16 %v1965
    %1982 = vmatpush.msra.mxu0 %v353
    %1983 = vmatpush.msra.mxu0 %v352
    %1984 = vmatpush.msra.mxu0 %v351
    %1985 = vmatpush.msra.mxu0 %v350
    %1986 = vmatpush.msra.mxu0 %v349
    %1987 = vmatpush.msra.mxu0 %v348
    %1988 = vmatpush.msra.mxu0 %v347
    %1989 = vmatpush.msra.mxu0 %v346
    %1990 = vmatpush.msra.mxu0 %v345
    %1991 = vmatpush.msra.mxu0 %v344
    %1992 = vmatpush.msra.mxu0 %v343
    %1993 = vmatpush.msra.mxu0 %v342
    %1994 = vmatpush.msra.mxu0 %v341
    %1995 = vmatpush.msra.mxu0 %v340
    %1996 = vmatpush.msra.mxu0 %v339
    %1997 = vmatpush.msra.mxu0 %v338
    %1998 = vmatmul.f32.gmra.mxu0 %v1966
    %v1999 = vpop.f32.mrf.mxu0
    %v2000 = vadd.f32 0.0, %v1999
    %2001 = vmatmul.f32.gmra.mxu0 %v1968
    %v2002 = vpop.f32.mrf.mxu0
    %v2003 = vadd.f32 0.0, %v2002
    %2004 = vmatmul.f32.gmra.mxu0 %v1970
    %v2005 = vpop.f32.mrf.mxu0
    %v2006 = vadd.f32 0.0, %v2005
    %2007 = vmatmul.f32.gmra.mxu0 %v1972
    %v2008 = vpop.f32.mrf.mxu0
    %v2009 = vadd.f32 0.0, %v2008
    %2010 = vmatmul.f32.gmra.mxu0 %v1974
    %v2011 = vpop.f32.mrf.mxu0
    %v2012 = vadd.f32 0.0, %v2011
    %2013 = vmatmul.f32.gmra.mxu0 %v1976
    %v2014 = vpop.f32.mrf.mxu0
    %v2015 = vadd.f32 0.0, %v2014
    %2016 = vmatmul.f32.gmra.mxu0 %v1978
    %v2017 = vpop.f32.mrf.mxu0
    %v2018 = vadd.f32 0.0, %v2017
    %2019 = vmatmul.f32.gmra.mxu0 %v1980
    %v2020 = vpop.f32.mrf.mxu0
    %v2021 = vadd.f32 0.0, %v2020
    %2022 = vdwg.mxu0
    %2023 = vmatpush.msra.mxu0 %v369
    %2024 = vmatpush.msra.mxu0 %v368
    %2025 = vmatpush.msra.mxu0 %v367
    %2026 = vmatpush.msra.mxu0 %v366
    %2027 = vmatpush.msra.mxu0 %v365
    %2028 = vmatpush.msra.mxu0 %v364
    %2029 = vmatpush.msra.mxu0 %v363
    %2030 = vmatpush.msra.mxu0 %v362
    %2031 = vmatpush.msra.mxu0 %v361
    %2032 = vmatpush.msra.mxu0 %v360
    %2033 = vmatpush.msra.mxu0 %v359
    %2034 = vmatpush.msra.mxu0 %v358
    %2035 = vmatpush.msra.mxu0 %v357
    %2036 = vmatpush.msra.mxu0 %v356
    %2037 = vmatpush.msra.mxu0 %v355
    %2038 = vmatpush.msra.mxu0 %v354
    %2039 = vmatmul.f32.gmra.mxu0 %v1967
    %v2040 = vpop.f32.mrf.mxu0
    %v2041 = vadd.f32 %v2000, %v2040
    %2042 = vmatmul.f32.gmra.mxu0 %v1969
    %v2043 = vpop.f32.mrf.mxu0
    %v2044 = vadd.f32 %v2003, %v2043
    %2045 = vmatmul.f32.gmra.mxu0 %v1971
    %v2046 = vpop.f32.mrf.mxu0
    %v2047 = vadd.f32 %v2006, %v2046
    %2048 = vmatmul.f32.gmra.mxu0 %v1973
    %v2049 = vpop.f32.mrf.mxu0
    %v2050 = vadd.f32 %v2009, %v2049
    %2051 = vmatmul.f32.gmra.mxu0 %v1975
    %v2052 = vpop.f32.mrf.mxu0
    %v2053 = vadd.f32 %v2012, %v2052
    %2054 = vmatmul.f32.gmra.mxu0 %v1977
    %v2055 = vpop.f32.mrf.mxu0
    %v2056 = vadd.f32 %v2015, %v2055
    %2057 = vmatmul.f32.gmra.mxu0 %v1979
    %v2058 = vpop.f32.mrf.mxu0
    %v2059 = vadd.f32 %v2018, %v2058
    %2060 = vmatmul.f32.gmra.mxu0 %v1981
    %v2061 = vpop.f32.mrf.mxu0
    %v2062 = vadd.f32 %v2021, %v2061
    %2063 = vdwg.mxu0
    %s2064 = scalar_lea.vmem [#allocation5], 1152
    %v2065 = vld [vmem:[%s2064] sm:$0xff]
    %v2066 = vld [vmem:[%s2064 + $0x8] sm:$0xff]
    %v2067 = vld [vmem:[%s2064 + $0x10] sm:$0xff]
    %v2068 = vld [vmem:[%s2064 + $0x18] sm:$0xff]
    %v2069 = vld [vmem:[%s2064 + $0x20] sm:$0xff]
    %v2070 = vld [vmem:[%s2064 + $0x28] sm:$0xff]
    %v2071 = vld [vmem:[%s2064 + $0x30] sm:$0xff]
    %v2072 = vld [vmem:[%s2064 + $0x38] sm:$0xff]
    %v2073 = vld [vmem:[%s2064 + $0x40] sm:$0xff]
    %v2074 = vld [vmem:[%s2064 + $0x48] sm:$0xff]
    %v2075 = vld [vmem:[%s2064 + $0x50] sm:$0xff]
    %v2076 = vld [vmem:[%s2064 + $0x58] sm:$0xff]
    %v2077 = vld [vmem:[%s2064 + $0x60] sm:$0xff]
    %v2078 = vld [vmem:[%s2064 + $0x68] sm:$0xff]
    %v2079 = vld [vmem:[%s2064 + $0x70] sm:$0xff]
    %v2080 = vld [vmem:[%s2064 + $0x78] sm:$0xff]
    %2081 = vmatpush.msra.mxu0 %v2080
    %2082 = vmatpush.msra.mxu0 %v2079
    %2083 = vmatpush.msra.mxu0 %v2078
    %2084 = vmatpush.msra.mxu0 %v2077
    %2085 = vmatpush.msra.mxu0 %v2076
    %2086 = vmatpush.msra.mxu0 %v2075
    %2087 = vmatpush.msra.mxu0 %v2074
    %2088 = vmatpush.msra.mxu0 %v2073
    %2089 = vmatpush.msra.mxu0 %v2072
    %2090 = vmatpush.msra.mxu0 %v2071
    %2091 = vmatpush.msra.mxu0 %v2070
    %2092 = vmatpush.msra.mxu0 %v2069
    %2093 = vmatpush.msra.mxu0 %v2068
    %2094 = vmatpush.msra.mxu0 %v2067
    %2095 = vmatpush.msra.mxu0 %v2066
    %2096 = vmatpush.msra.mxu0 %v2065
    %2097 = vmatmul.f32.gmra.mxu0 %v2041
    %v2098 = vpop.f32.mrf.mxu0
    %v2099 = vadd.f32 0.0, %v2098
    %2100 = vmatmul.f32.gmra.mxu0 %v2044
    %v2101 = vpop.f32.mrf.mxu0
    %v2102 = vadd.f32 0.0, %v2101
    %2103 = vmatmul.f32.gmra.mxu0 %v2047
    %v2104 = vpop.f32.mrf.mxu0
    %v2105 = vadd.f32 0.0, %v2104
    %2106 = vmatmul.f32.gmra.mxu0 %v2050
    %v2107 = vpop.f32.mrf.mxu0
    %v2108 = vadd.f32 0.0, %v2107
    %2109 = vmatmul.f32.gmra.mxu0 %v2053
    %v2110 = vpop.f32.mrf.mxu0
    %v2111 = vadd.f32 0.0, %v2110
    %2112 = vmatmul.f32.gmra.mxu0 %v2056
    %v2113 = vpop.f32.mrf.mxu0
    %v2114 = vadd.f32 0.0, %v2113
    %2115 = vmatmul.f32.gmra.mxu0 %v2059
    %v2116 = vpop.f32.mrf.mxu0
    %v2117 = vadd.f32 0.0, %v2116
    %2118 = vmatmul.f32.gmra.mxu0 %v2062
    %v2119 = vpop.f32.mrf.mxu0
    %v2120 = vadd.f32 0.0, %v2119
    %2121 = vdwg.mxu0
    %v2122 = vadd.f32 %v1950, %v2099
    %v2123 = vadd.f32 %v1951, %v2102
    %v2124 = vadd.f32 %v1952, %v2105
    %v2125 = vadd.f32 %v1953, %v2108
    %v2126 = vadd.f32 %v1954, %v2111
    %v2127 = vadd.f32 %v1955, %v2114
    %v2128 = vadd.f32 %v1956, %v2117
    %v2129 = vadd.f32 %v1957, %v2120
    %v2130 = vld [vmem:[#allocation2 + $0x280] sm:$0xff]
    %v2131 = vld [vmem:[#allocation2 + $0x288] sm:$0xff]
    %v2132 = vld [vmem:[#allocation2 + $0x290] sm:$0xff]
    %v2133 = vld [vmem:[#allocation2 + $0x298] sm:$0xff]
    %v2134 = vld [vmem:[#allocation2 + $0x2a0] sm:$0xff]
    %v2135 = vld [vmem:[#allocation2 + $0x2a8] sm:$0xff]
    %v2136 = vld [vmem:[#allocation2 + $0x2b0] sm:$0xff]
    %v2137 = vld [vmem:[#allocation2 + $0x2b8] sm:$0xff]
    %v2138 = vunpack.c.l.bf16 %v2130
    %v2139 = vunpack.c.h.bf16 %v2130
    %v2140 = vunpack.c.l.bf16 %v2131
    %v2141 = vunpack.c.h.bf16 %v2131
    %v2142 = vunpack.c.l.bf16 %v2132
    %v2143 = vunpack.c.h.bf16 %v2132
    %v2144 = vunpack.c.l.bf16 %v2133
    %v2145 = vunpack.c.h.bf16 %v2133
    %v2146 = vunpack.c.l.bf16 %v2134
    %v2147 = vunpack.c.h.bf16 %v2134
    %v2148 = vunpack.c.l.bf16 %v2135
    %v2149 = vunpack.c.h.bf16 %v2135
    %v2150 = vunpack.c.l.bf16 %v2136
    %v2151 = vunpack.c.h.bf16 %v2136
    %v2152 = vunpack.c.l.bf16 %v2137
    %v2153 = vunpack.c.h.bf16 %v2137
    %2154 = vmatpush.msra.mxu0 %v353
    %2155 = vmatpush.msra.mxu0 %v352
    %2156 = vmatpush.msra.mxu0 %v351
    %2157 = vmatpush.msra.mxu0 %v350
    %2158 = vmatpush.msra.mxu0 %v349
    %2159 = vmatpush.msra.mxu0 %v348
    %2160 = vmatpush.msra.mxu0 %v347
    %2161 = vmatpush.msra.mxu0 %v346
    %2162 = vmatpush.msra.mxu0 %v345
    %2163 = vmatpush.msra.mxu0 %v344
    %2164 = vmatpush.msra.mxu0 %v343
    %2165 = vmatpush.msra.mxu0 %v342
    %2166 = vmatpush.msra.mxu0 %v341
    %2167 = vmatpush.msra.mxu0 %v340
    %2168 = vmatpush.msra.mxu0 %v339
    %2169 = vmatpush.msra.mxu0 %v338
    %2170 = vmatmul.f32.gmra.mxu0 %v2138
    %v2171 = vpop.f32.mrf.mxu0
    %v2172 = vadd.f32 0.0, %v2171
    %2173 = vmatmul.f32.gmra.mxu0 %v2140
    %v2174 = vpop.f32.mrf.mxu0
    %v2175 = vadd.f32 0.0, %v2174
    %2176 = vmatmul.f32.gmra.mxu0 %v2142
    %v2177 = vpop.f32.mrf.mxu0
    %v2178 = vadd.f32 0.0, %v2177
    %2179 = vmatmul.f32.gmra.mxu0 %v2144
    %v2180 = vpop.f32.mrf.mxu0
    %v2181 = vadd.f32 0.0, %v2180
    %2182 = vmatmul.f32.gmra.mxu0 %v2146
    %v2183 = vpop.f32.mrf.mxu0
    %v2184 = vadd.f32 0.0, %v2183
    %2185 = vmatmul.f32.gmra.mxu0 %v2148
    %v2186 = vpop.f32.mrf.mxu0
    %v2187 = vadd.f32 0.0, %v2186
    %2188 = vmatmul.f32.gmra.mxu0 %v2150
    %v2189 = vpop.f32.mrf.mxu0
    %v2190 = vadd.f32 0.0, %v2189
    %2191 = vmatmul.f32.gmra.mxu0 %v2152
    %v2192 = vpop.f32.mrf.mxu0
    %v2193 = vadd.f32 0.0, %v2192
    %2194 = vdwg.mxu0
    %2195 = vmatpush.msra.mxu0 %v369
    %2196 = vmatpush.msra.mxu0 %v368
    %2197 = vmatpush.msra.mxu0 %v367
    %2198 = vmatpush.msra.mxu0 %v366
    %2199 = vmatpush.msra.mxu0 %v365
    %2200 = vmatpush.msra.mxu0 %v364
    %2201 = vmatpush.msra.mxu0 %v363
    %2202 = vmatpush.msra.mxu0 %v362
    %2203 = vmatpush.msra.mxu0 %v361
    %2204 = vmatpush.msra.mxu0 %v360
    %2205 = vmatpush.msra.mxu0 %v359
    %2206 = vmatpush.msra.mxu0 %v358
    %2207 = vmatpush.msra.mxu0 %v357
    %2208 = vmatpush.msra.mxu0 %v356
    %2209 = vmatpush.msra.mxu0 %v355
    %2210 = vmatpush.msra.mxu0 %v354
    %2211 = vmatmul.f32.gmra.mxu0 %v2139
    %v2212 = vpop.f32.mrf.mxu0
    %v2213 = vadd.f32 %v2172, %v2212
    %2214 = vmatmul.f32.gmra.mxu0 %v2141
    %v2215 = vpop.f32.mrf.mxu0
    %v2216 = vadd.f32 %v2175, %v2215
    %2217 = vmatmul.f32.gmra.mxu0 %v2143
    %v2218 = vpop.f32.mrf.mxu0
    %v2219 = vadd.f32 %v2178, %v2218
    %2220 = vmatmul.f32.gmra.mxu0 %v2145
    %v2221 = vpop.f32.mrf.mxu0
    %v2222 = vadd.f32 %v2181, %v2221
    %2223 = vmatmul.f32.gmra.mxu0 %v2147
    %v2224 = vpop.f32.mrf.mxu0
    %v2225 = vadd.f32 %v2184, %v2224
    %2226 = vmatmul.f32.gmra.mxu0 %v2149
    %v2227 = vpop.f32.mrf.mxu0
    %v2228 = vadd.f32 %v2187, %v2227
    %2229 = vmatmul.f32.gmra.mxu0 %v2151
    %v2230 = vpop.f32.mrf.mxu0
    %v2231 = vadd.f32 %v2190, %v2230
    %2232 = vmatmul.f32.gmra.mxu0 %v2153
    %v2233 = vpop.f32.mrf.mxu0
    %v2234 = vadd.f32 %v2193, %v2233
    %2235 = vdwg.mxu0
    %s2236 = scalar_lea.vmem [#allocation5], 1280
    %v2237 = vld [vmem:[%s2236] sm:$0xff]
    %v2238 = vld [vmem:[%s2236 + $0x8] sm:$0xff]
    %v2239 = vld [vmem:[%s2236 + $0x10] sm:$0xff]
    %v2240 = vld [vmem:[%s2236 + $0x18] sm:$0xff]
    %v2241 = vld [vmem:[%s2236 + $0x20] sm:$0xff]
    %v2242 = vld [vmem:[%s2236 + $0x28] sm:$0xff]
    %v2243 = vld [vmem:[%s2236 + $0x30] sm:$0xff]
    %v2244 = vld [vmem:[%s2236 + $0x38] sm:$0xff]
    %v2245 = vld [vmem:[%s2236 + $0x40] sm:$0xff]
    %v2246 = vld [vmem:[%s2236 + $0x48] sm:$0xff]
    %v2247 = vld [vmem:[%s2236 + $0x50] sm:$0xff]
    %v2248 = vld [vmem:[%s2236 + $0x58] sm:$0xff]
    %v2249 = vld [vmem:[%s2236 + $0x60] sm:$0xff]
    %v2250 = vld [vmem:[%s2236 + $0x68] sm:$0xff]
    %v2251 = vld [vmem:[%s2236 + $0x70] sm:$0xff]
    %v2252 = vld [vmem:[%s2236 + $0x78] sm:$0xff]
    %2253 = vmatpush.msra.mxu0 %v2252
    %2254 = vmatpush.msra.mxu0 %v2251
    %2255 = vmatpush.msra.mxu0 %v2250
    %2256 = vmatpush.msra.mxu0 %v2249
    %2257 = vmatpush.msra.mxu0 %v2248
    %2258 = vmatpush.msra.mxu0 %v2247
    %2259 = vmatpush.msra.mxu0 %v2246
    %2260 = vmatpush.msra.mxu0 %v2245
    %2261 = vmatpush.msra.mxu0 %v2244
    %2262 = vmatpush.msra.mxu0 %v2243
    %2263 = vmatpush.msra.mxu0 %v2242
    %2264 = vmatpush.msra.mxu0 %v2241
    %2265 = vmatpush.msra.mxu0 %v2240
    %2266 = vmatpush.msra.mxu0 %v2239
    %2267 = vmatpush.msra.mxu0 %v2238
    %2268 = vmatpush.msra.mxu0 %v2237
    %2269 = vmatmul.f32.gmra.mxu0 %v2213
    %v2270 = vpop.f32.mrf.mxu0
    %v2271 = vadd.f32 0.0, %v2270
    %2272 = vmatmul.f32.gmra.mxu0 %v2216
    %v2273 = vpop.f32.mrf.mxu0
    %v2274 = vadd.f32 0.0, %v2273
    %2275 = vmatmul.f32.gmra.mxu0 %v2219
    %v2276 = vpop.f32.mrf.mxu0
    %v2277 = vadd.f32 0.0, %v2276
    %2278 = vmatmul.f32.gmra.mxu0 %v2222
    %v2279 = vpop.f32.mrf.mxu0
    %v2280 = vadd.f32 0.0, %v2279
    %2281 = vmatmul.f32.gmra.mxu0 %v2225
    %v2282 = vpop.f32.mrf.mxu0
    %v2283 = vadd.f32 0.0, %v2282
    %2284 = vmatmul.f32.gmra.mxu0 %v2228
    %v2285 = vpop.f32.mrf.mxu0
    %v2286 = vadd.f32 0.0, %v2285
    %2287 = vmatmul.f32.gmra.mxu0 %v2231
    %v2288 = vpop.f32.mrf.mxu0
    %v2289 = vadd.f32 0.0, %v2288
    %2290 = vmatmul.f32.gmra.mxu0 %v2234
    %v2291 = vpop.f32.mrf.mxu0
    %v2292 = vadd.f32 0.0, %v2291
    %2293 = vdwg.mxu0
    %v2294 = vadd.f32 %v2122, %v2271
    %v2295 = vadd.f32 %v2123, %v2274
    %v2296 = vadd.f32 %v2124, %v2277
    %v2297 = vadd.f32 %v2125, %v2280
    %v2298 = vadd.f32 %v2126, %v2283
    %v2299 = vadd.f32 %v2127, %v2286
    %v2300 = vadd.f32 %v2128, %v2289
    %v2301 = vadd.f32 %v2129, %v2292
    %v2302 = vld [vmem:[#allocation2 + $0x2c0] sm:$0xff]
    %v2303 = vld [vmem:[#allocation2 + $0x2c8] sm:$0xff]
    %v2304 = vld [vmem:[#allocation2 + $0x2d0] sm:$0xff]
    %v2305 = vld [vmem:[#allocation2 + $0x2d8] sm:$0xff]
    %v2306 = vld [vmem:[#allocation2 + $0x2e0] sm:$0xff]
    %v2307 = vld [vmem:[#allocation2 + $0x2e8] sm:$0xff]
    %v2308 = vld [vmem:[#allocation2 + $0x2f0] sm:$0xff]
    %v2309 = vld [vmem:[#allocation2 + $0x2f8] sm:$0xff]
    %v2310 = vunpack.c.l.bf16 %v2302
    %v2311 = vunpack.c.h.bf16 %v2302
    %v2312 = vunpack.c.l.bf16 %v2303
    %v2313 = vunpack.c.h.bf16 %v2303
    %v2314 = vunpack.c.l.bf16 %v2304
    %v2315 = vunpack.c.h.bf16 %v2304
    %v2316 = vunpack.c.l.bf16 %v2305
    %v2317 = vunpack.c.h.bf16 %v2305
    %v2318 = vunpack.c.l.bf16 %v2306
    %v2319 = vunpack.c.h.bf16 %v2306
    %v2320 = vunpack.c.l.bf16 %v2307
    %v2321 = vunpack.c.h.bf16 %v2307
    %v2322 = vunpack.c.l.bf16 %v2308
    %v2323 = vunpack.c.h.bf16 %v2308
    %v2324 = vunpack.c.l.bf16 %v2309
    %v2325 = vunpack.c.h.bf16 %v2309
    %2326 = vmatpush.msra.mxu0 %v353
    %2327 = vmatpush.msra.mxu0 %v352
    %2328 = vmatpush.msra.mxu0 %v351
    %2329 = vmatpush.msra.mxu0 %v350
    %2330 = vmatpush.msra.mxu0 %v349
    %2331 = vmatpush.msra.mxu0 %v348
    %2332 = vmatpush.msra.mxu0 %v347
    %2333 = vmatpush.msra.mxu0 %v346
    %2334 = vmatpush.msra.mxu0 %v345
    %2335 = vmatpush.msra.mxu0 %v344
    %2336 = vmatpush.msra.mxu0 %v343
    %2337 = vmatpush.msra.mxu0 %v342
    %2338 = vmatpush.msra.mxu0 %v341
    %2339 = vmatpush.msra.mxu0 %v340
    %2340 = vmatpush.msra.mxu0 %v339
    %2341 = vmatpush.msra.mxu0 %v338
    %2342 = vmatmul.f32.gmra.mxu0 %v2310
    %v2343 = vpop.f32.mrf.mxu0
    %v2344 = vadd.f32 0.0, %v2343
    %2345 = vmatmul.f32.gmra.mxu0 %v2312
    %v2346 = vpop.f32.mrf.mxu0
    %v2347 = vadd.f32 0.0, %v2346
    %2348 = vmatmul.f32.gmra.mxu0 %v2314
    %v2349 = vpop.f32.mrf.mxu0
    %v2350 = vadd.f32 0.0, %v2349
    %2351 = vmatmul.f32.gmra.mxu0 %v2316
    %v2352 = vpop.f32.mrf.mxu0
    %v2353 = vadd.f32 0.0, %v2352
    %2354 = vmatmul.f32.gmra.mxu0 %v2318
    %v2355 = vpop.f32.mrf.mxu0
    %v2356 = vadd.f32 0.0, %v2355
    %2357 = vmatmul.f32.gmra.mxu0 %v2320
    %v2358 = vpop.f32.mrf.mxu0
    %v2359 = vadd.f32 0.0, %v2358
    %2360 = vmatmul.f32.gmra.mxu0 %v2322
    %v2361 = vpop.f32.mrf.mxu0
    %v2362 = vadd.f32 0.0, %v2361
    %2363 = vmatmul.f32.gmra.mxu0 %v2324
    %v2364 = vpop.f32.mrf.mxu0
    %v2365 = vadd.f32 0.0, %v2364
    %2366 = vdwg.mxu0
    %2367 = vmatpush.msra.mxu0 %v369
    %2368 = vmatpush.msra.mxu0 %v368
    %2369 = vmatpush.msra.mxu0 %v367
    %2370 = vmatpush.msra.mxu0 %v366
    %2371 = vmatpush.msra.mxu0 %v365
    %2372 = vmatpush.msra.mxu0 %v364
    %2373 = vmatpush.msra.mxu0 %v363
    %2374 = vmatpush.msra.mxu0 %v362
    %2375 = vmatpush.msra.mxu0 %v361
    %2376 = vmatpush.msra.mxu0 %v360
    %2377 = vmatpush.msra.mxu0 %v359
    %2378 = vmatpush.msra.mxu0 %v358
    %2379 = vmatpush.msra.mxu0 %v357
    %2380 = vmatpush.msra.mxu0 %v356
    %2381 = vmatpush.msra.mxu0 %v355
    %2382 = vmatpush.msra.mxu0 %v354
    %2383 = vmatmul.f32.gmra.mxu0 %v2311
    %v2384 = vpop.f32.mrf.mxu0
    %v2385 = vadd.f32 %v2344, %v2384
    %2386 = vmatmul.f32.gmra.mxu0 %v2313
    %v2387 = vpop.f32.mrf.mxu0
    %v2388 = vadd.f32 %v2347, %v2387
    %2389 = vmatmul.f32.gmra.mxu0 %v2315
    %v2390 = vpop.f32.mrf.mxu0
    %v2391 = vadd.f32 %v2350, %v2390
    %2392 = vmatmul.f32.gmra.mxu0 %v2317
    %v2393 = vpop.f32.mrf.mxu0
    %v2394 = vadd.f32 %v2353, %v2393
    %2395 = vmatmul.f32.gmra.mxu0 %v2319
    %v2396 = vpop.f32.mrf.mxu0
    %v2397 = vadd.f32 %v2356, %v2396
    %2398 = vmatmul.f32.gmra.mxu0 %v2321
    %v2399 = vpop.f32.mrf.mxu0
    %v2400 = vadd.f32 %v2359, %v2399
    %2401 = vmatmul.f32.gmra.mxu0 %v2323
    %v2402 = vpop.f32.mrf.mxu0
    %v2403 = vadd.f32 %v2362, %v2402
    %2404 = vmatmul.f32.gmra.mxu0 %v2325
    %v2405 = vpop.f32.mrf.mxu0
    %v2406 = vadd.f32 %v2365, %v2405
    %2407 = vdwg.mxu0
    %s2408 = scalar_lea.vmem [#allocation5], 1408
    %v2409 = vld [vmem:[%s2408] sm:$0xff]
    %v2410 = vld [vmem:[%s2408 + $0x8] sm:$0xff]
    %v2411 = vld [vmem:[%s2408 + $0x10] sm:$0xff]
    %v2412 = vld [vmem:[%s2408 + $0x18] sm:$0xff]
    %v2413 = vld [vmem:[%s2408 + $0x20] sm:$0xff]
    %v2414 = vld [vmem:[%s2408 + $0x28] sm:$0xff]
    %v2415 = vld [vmem:[%s2408 + $0x30] sm:$0xff]
    %v2416 = vld [vmem:[%s2408 + $0x38] sm:$0xff]
    %v2417 = vld [vmem:[%s2408 + $0x40] sm:$0xff]
    %v2418 = vld [vmem:[%s2408 + $0x48] sm:$0xff]
    %v2419 = vld [vmem:[%s2408 + $0x50] sm:$0xff]
    %v2420 = vld [vmem:[%s2408 + $0x58] sm:$0xff]
    %v2421 = vld [vmem:[%s2408 + $0x60] sm:$0xff]
    %v2422 = vld [vmem:[%s2408 + $0x68] sm:$0xff]
    %v2423 = vld [vmem:[%s2408 + $0x70] sm:$0xff]
    %v2424 = vld [vmem:[%s2408 + $0x78] sm:$0xff]
    %2425 = vmatpush.msra.mxu0 %v2424
    %2426 = vmatpush.msra.mxu0 %v2423
    %2427 = vmatpush.msra.mxu0 %v2422
    %2428 = vmatpush.msra.mxu0 %v2421
    %2429 = vmatpush.msra.mxu0 %v2420
    %2430 = vmatpush.msra.mxu0 %v2419
    %2431 = vmatpush.msra.mxu0 %v2418
    %2432 = vmatpush.msra.mxu0 %v2417
    %2433 = vmatpush.msra.mxu0 %v2416
    %2434 = vmatpush.msra.mxu0 %v2415
    %2435 = vmatpush.msra.mxu0 %v2414
    %2436 = vmatpush.msra.mxu0 %v2413
    %2437 = vmatpush.msra.mxu0 %v2412
    %2438 = vmatpush.msra.mxu0 %v2411
    %2439 = vmatpush.msra.mxu0 %v2410
    %2440 = vmatpush.msra.mxu0 %v2409
    %2441 = vmatmul.f32.gmra.mxu0 %v2385
    %v2442 = vpop.f32.mrf.mxu0
    %v2443 = vadd.f32 0.0, %v2442
    %2444 = vmatmul.f32.gmra.mxu0 %v2388
    %v2445 = vpop.f32.mrf.mxu0
    %v2446 = vadd.f32 0.0, %v2445
    %2447 = vmatmul.f32.gmra.mxu0 %v2391
    %v2448 = vpop.f32.mrf.mxu0
    %v2449 = vadd.f32 0.0, %v2448
    %2450 = vmatmul.f32.gmra.mxu0 %v2394
    %v2451 = vpop.f32.mrf.mxu0
    %v2452 = vadd.f32 0.0, %v2451
    %2453 = vmatmul.f32.gmra.mxu0 %v2397
    %v2454 = vpop.f32.mrf.mxu0
    %v2455 = vadd.f32 0.0, %v2454
    %2456 = vmatmul.f32.gmra.mxu0 %v2400
    %v2457 = vpop.f32.mrf.mxu0
    %v2458 = vadd.f32 0.0, %v2457
    %2459 = vmatmul.f32.gmra.mxu0 %v2403
    %v2460 = vpop.f32.mrf.mxu0
    %v2461 = vadd.f32 0.0, %v2460
    %2462 = vmatmul.f32.gmra.mxu0 %v2406
    %v2463 = vpop.f32.mrf.mxu0
    %v2464 = vadd.f32 0.0, %v2463
    %2465 = vdwg.mxu0
    %v2466 = vadd.f32 %v2294, %v2443
    %v2467 = vadd.f32 %v2295, %v2446
    %v2468 = vadd.f32 %v2296, %v2449
    %v2469 = vadd.f32 %v2297, %v2452
    %v2470 = vadd.f32 %v2298, %v2455
    %v2471 = vadd.f32 %v2299, %v2458
    %v2472 = vadd.f32 %v2300, %v2461
    %v2473 = vadd.f32 %v2301, %v2464
    %v2474 = vld [vmem:[#allocation2 + $0x300] sm:$0xff]
    %v2475 = vld [vmem:[#allocation2 + $0x308] sm:$0xff]
    %v2476 = vld [vmem:[#allocation2 + $0x310] sm:$0xff]
    %v2477 = vld [vmem:[#allocation2 + $0x318] sm:$0xff]
    %v2478 = vld [vmem:[#allocation2 + $0x320] sm:$0xff]
    %v2479 = vld [vmem:[#allocation2 + $0x328] sm:$0xff]
    %v2480 = vld [vmem:[#allocation2 + $0x330] sm:$0xff]
    %v2481 = vld [vmem:[#allocation2 + $0x338] sm:$0xff]
    %v2482 = vunpack.c.l.bf16 %v2474
    %v2483 = vunpack.c.h.bf16 %v2474
    %v2484 = vunpack.c.l.bf16 %v2475
    %v2485 = vunpack.c.h.bf16 %v2475
    %v2486 = vunpack.c.l.bf16 %v2476
    %v2487 = vunpack.c.h.bf16 %v2476
    %v2488 = vunpack.c.l.bf16 %v2477
    %v2489 = vunpack.c.h.bf16 %v2477
    %v2490 = vunpack.c.l.bf16 %v2478
    %v2491 = vunpack.c.h.bf16 %v2478
    %v2492 = vunpack.c.l.bf16 %v2479
    %v2493 = vunpack.c.h.bf16 %v2479
    %v2494 = vunpack.c.l.bf16 %v2480
    %v2495 = vunpack.c.h.bf16 %v2480
    %v2496 = vunpack.c.l.bf16 %v2481
    %v2497 = vunpack.c.h.bf16 %v2481
    %2498 = vmatpush.msra.mxu0 %v353
    %2499 = vmatpush.msra.mxu0 %v352
    %2500 = vmatpush.msra.mxu0 %v351
    %2501 = vmatpush.msra.mxu0 %v350
    %2502 = vmatpush.msra.mxu0 %v349
    %2503 = vmatpush.msra.mxu0 %v348
    %2504 = vmatpush.msra.mxu0 %v347
    %2505 = vmatpush.msra.mxu0 %v346
    %2506 = vmatpush.msra.mxu0 %v345
    %2507 = vmatpush.msra.mxu0 %v344
    %2508 = vmatpush.msra.mxu0 %v343
    %2509 = vmatpush.msra.mxu0 %v342
    %2510 = vmatpush.msra.mxu0 %v341
    %2511 = vmatpush.msra.mxu0 %v340
    %2512 = vmatpush.msra.mxu0 %v339
    %2513 = vmatpush.msra.mxu0 %v338
    %2514 = vmatmul.f32.gmra.mxu0 %v2482
    %v2515 = vpop.f32.mrf.mxu0
    %v2516 = vadd.f32 0.0, %v2515
    %2517 = vmatmul.f32.gmra.mxu0 %v2484
    %v2518 = vpop.f32.mrf.mxu0
    %v2519 = vadd.f32 0.0, %v2518
    %2520 = vmatmul.f32.gmra.mxu0 %v2486
    %v2521 = vpop.f32.mrf.mxu0
    %v2522 = vadd.f32 0.0, %v2521
    %2523 = vmatmul.f32.gmra.mxu0 %v2488
    %v2524 = vpop.f32.mrf.mxu0
    %v2525 = vadd.f32 0.0, %v2524
    %2526 = vmatmul.f32.gmra.mxu0 %v2490
    %v2527 = vpop.f32.mrf.mxu0
    %v2528 = vadd.f32 0.0, %v2527
    %2529 = vmatmul.f32.gmra.mxu0 %v2492
    %v2530 = vpop.f32.mrf.mxu0
    %v2531 = vadd.f32 0.0, %v2530
    %2532 = vmatmul.f32.gmra.mxu0 %v2494
    %v2533 = vpop.f32.mrf.mxu0
    %v2534 = vadd.f32 0.0, %v2533
    %2535 = vmatmul.f32.gmra.mxu0 %v2496
    %v2536 = vpop.f32.mrf.mxu0
    %v2537 = vadd.f32 0.0, %v2536
    %2538 = vdwg.mxu0
    %2539 = vmatpush.msra.mxu0 %v369
    %2540 = vmatpush.msra.mxu0 %v368
    %2541 = vmatpush.msra.mxu0 %v367
    %2542 = vmatpush.msra.mxu0 %v366
    %2543 = vmatpush.msra.mxu0 %v365
    %2544 = vmatpush.msra.mxu0 %v364
    %2545 = vmatpush.msra.mxu0 %v363
    %2546 = vmatpush.msra.mxu0 %v362
    %2547 = vmatpush.msra.mxu0 %v361
    %2548 = vmatpush.msra.mxu0 %v360
    %2549 = vmatpush.msra.mxu0 %v359
    %2550 = vmatpush.msra.mxu0 %v358
    %2551 = vmatpush.msra.mxu0 %v357
    %2552 = vmatpush.msra.mxu0 %v356
    %2553 = vmatpush.msra.mxu0 %v355
    %2554 = vmatpush.msra.mxu0 %v354
    %2555 = vmatmul.f32.gmra.mxu0 %v2483
    %v2556 = vpop.f32.mrf.mxu0
    %v2557 = vadd.f32 %v2516, %v2556
    %2558 = vmatmul.f32.gmra.mxu0 %v2485
    %v2559 = vpop.f32.mrf.mxu0
    %v2560 = vadd.f32 %v2519, %v2559
    %2561 = vmatmul.f32.gmra.mxu0 %v2487
    %v2562 = vpop.f32.mrf.mxu0
    %v2563 = vadd.f32 %v2522, %v2562
    %2564 = vmatmul.f32.gmra.mxu0 %v2489
    %v2565 = vpop.f32.mrf.mxu0
    %v2566 = vadd.f32 %v2525, %v2565
    %2567 = vmatmul.f32.gmra.mxu0 %v2491
    %v2568 = vpop.f32.mrf.mxu0
    %v2569 = vadd.f32 %v2528, %v2568
    %2570 = vmatmul.f32.gmra.mxu0 %v2493
    %v2571 = vpop.f32.mrf.mxu0
    %v2572 = vadd.f32 %v2531, %v2571
    %2573 = vmatmul.f32.gmra.mxu0 %v2495
    %v2574 = vpop.f32.mrf.mxu0
    %v2575 = vadd.f32 %v2534, %v2574
    %2576 = vmatmul.f32.gmra.mxu0 %v2497
    %v2577 = vpop.f32.mrf.mxu0
    %v2578 = vadd.f32 %v2537, %v2577
    %2579 = vdwg.mxu0
    %s2580 = scalar_lea.vmem [#allocation5], 1536
    %v2581 = vld [vmem:[%s2580] sm:$0xff]
    %v2582 = vld [vmem:[%s2580 + $0x8] sm:$0xff]
    %v2583 = vld [vmem:[%s2580 + $0x10] sm:$0xff]
    %v2584 = vld [vmem:[%s2580 + $0x18] sm:$0xff]
    %v2585 = vld [vmem:[%s2580 + $0x20] sm:$0xff]
    %v2586 = vld [vmem:[%s2580 + $0x28] sm:$0xff]
    %v2587 = vld [vmem:[%s2580 + $0x30] sm:$0xff]
    %v2588 = vld [vmem:[%s2580 + $0x38] sm:$0xff]
    %v2589 = vld [vmem:[%s2580 + $0x40] sm:$0xff]
    %v2590 = vld [vmem:[%s2580 + $0x48] sm:$0xff]
    %v2591 = vld [vmem:[%s2580 + $0x50] sm:$0xff]
    %v2592 = vld [vmem:[%s2580 + $0x58] sm:$0xff]
    %v2593 = vld [vmem:[%s2580 + $0x60] sm:$0xff]
    %v2594 = vld [vmem:[%s2580 + $0x68] sm:$0xff]
    %v2595 = vld [vmem:[%s2580 + $0x70] sm:$0xff]
    %v2596 = vld [vmem:[%s2580 + $0x78] sm:$0xff]
    %2597 = vmatpush.msra.mxu0 %v2596
    %2598 = vmatpush.msra.mxu0 %v2595
    %2599 = vmatpush.msra.mxu0 %v2594
    %2600 = vmatpush.msra.mxu0 %v2593
    %2601 = vmatpush.msra.mxu0 %v2592
    %2602 = vmatpush.msra.mxu0 %v2591
    %2603 = vmatpush.msra.mxu0 %v2590
    %2604 = vmatpush.msra.mxu0 %v2589
    %2605 = vmatpush.msra.mxu0 %v2588
    %2606 = vmatpush.msra.mxu0 %v2587
    %2607 = vmatpush.msra.mxu0 %v2586
    %2608 = vmatpush.msra.mxu0 %v2585
    %2609 = vmatpush.msra.mxu0 %v2584
    %2610 = vmatpush.msra.mxu0 %v2583
    %2611 = vmatpush.msra.mxu0 %v2582
    %2612 = vmatpush.msra.mxu0 %v2581
    %2613 = vmatmul.f32.gmra.mxu0 %v2557
    %v2614 = vpop.f32.mrf.mxu0
    %v2615 = vadd.f32 0.0, %v2614
    %2616 = vmatmul.f32.gmra.mxu0 %v2560
    %v2617 = vpop.f32.mrf.mxu0
    %v2618 = vadd.f32 0.0, %v2617
    %2619 = vmatmul.f32.gmra.mxu0 %v2563
    %v2620 = vpop.f32.mrf.mxu0
    %v2621 = vadd.f32 0.0, %v2620
    %2622 = vmatmul.f32.gmra.mxu0 %v2566
    %v2623 = vpop.f32.mrf.mxu0
    %v2624 = vadd.f32 0.0, %v2623
    %2625 = vmatmul.f32.gmra.mxu0 %v2569
    %v2626 = vpop.f32.mrf.mxu0
    %v2627 = vadd.f32 0.0, %v2626
    %2628 = vmatmul.f32.gmra.mxu0 %v2572
    %v2629 = vpop.f32.mrf.mxu0
    %v2630 = vadd.f32 0.0, %v2629
    %2631 = vmatmul.f32.gmra.mxu0 %v2575
    %v2632 = vpop.f32.mrf.mxu0
    %v2633 = vadd.f32 0.0, %v2632
    %2634 = vmatmul.f32.gmra.mxu0 %v2578
    %v2635 = vpop.f32.mrf.mxu0
    %v2636 = vadd.f32 0.0, %v2635
    %2637 = vdwg.mxu0
    %v2638 = vadd.f32 %v2466, %v2615
    %v2639 = vadd.f32 %v2467, %v2618
    %v2640 = vadd.f32 %v2468, %v2621
    %v2641 = vadd.f32 %v2469, %v2624
    %v2642 = vadd.f32 %v2470, %v2627
    %v2643 = vadd.f32 %v2471, %v2630
    %v2644 = vadd.f32 %v2472, %v2633
    %v2645 = vadd.f32 %v2473, %v2636
    %v2646 = vld [vmem:[#allocation2 + $0x340] sm:$0xff]
    %v2647 = vld [vmem:[#allocation2 + $0x348] sm:$0xff]
    %v2648 = vld [vmem:[#allocation2 + $0x350] sm:$0xff]
    %v2649 = vld [vmem:[#allocation2 + $0x358] sm:$0xff]
    %v2650 = vld [vmem:[#allocation2 + $0x360] sm:$0xff]
    %v2651 = vld [vmem:[#allocation2 + $0x368] sm:$0xff]
    %v2652 = vld [vmem:[#allocation2 + $0x370] sm:$0xff]
    %v2653 = vld [vmem:[#allocation2 + $0x378] sm:$0xff]
    %v2654 = vunpack.c.l.bf16 %v2646
    %v2655 = vunpack.c.h.bf16 %v2646
    %v2656 = vunpack.c.l.bf16 %v2647
    %v2657 = vunpack.c.h.bf16 %v2647
    %v2658 = vunpack.c.l.bf16 %v2648
    %v2659 = vunpack.c.h.bf16 %v2648
    %v2660 = vunpack.c.l.bf16 %v2649
    %v2661 = vunpack.c.h.bf16 %v2649
    %v2662 = vunpack.c.l.bf16 %v2650
    %v2663 = vunpack.c.h.bf16 %v2650
    %v2664 = vunpack.c.l.bf16 %v2651
    %v2665 = vunpack.c.h.bf16 %v2651
    %v2666 = vunpack.c.l.bf16 %v2652
    %v2667 = vunpack.c.h.bf16 %v2652
    %v2668 = vunpack.c.l.bf16 %v2653
    %v2669 = vunpack.c.h.bf16 %v2653
    %2670 = vmatpush.msra.mxu0 %v353
    %2671 = vmatpush.msra.mxu0 %v352
    %2672 = vmatpush.msra.mxu0 %v351
    %2673 = vmatpush.msra.mxu0 %v350
    %2674 = vmatpush.msra.mxu0 %v349
    %2675 = vmatpush.msra.mxu0 %v348
    %2676 = vmatpush.msra.mxu0 %v347
    %2677 = vmatpush.msra.mxu0 %v346
    %2678 = vmatpush.msra.mxu0 %v345
    %2679 = vmatpush.msra.mxu0 %v344
    %2680 = vmatpush.msra.mxu0 %v343
    %2681 = vmatpush.msra.mxu0 %v342
    %2682 = vmatpush.msra.mxu0 %v341
    %2683 = vmatpush.msra.mxu0 %v340
    %2684 = vmatpush.msra.mxu0 %v339
    %2685 = vmatpush.msra.mxu0 %v338
    %2686 = vmatmul.f32.gmra.mxu0 %v2654
    %v2687 = vpop.f32.mrf.mxu0
    %v2688 = vadd.f32 0.0, %v2687
    %2689 = vmatmul.f32.gmra.mxu0 %v2656
    %v2690 = vpop.f32.mrf.mxu0
    %v2691 = vadd.f32 0.0, %v2690
    %2692 = vmatmul.f32.gmra.mxu0 %v2658
    %v2693 = vpop.f32.mrf.mxu0
    %v2694 = vadd.f32 0.0, %v2693
    %2695 = vmatmul.f32.gmra.mxu0 %v2660
    %v2696 = vpop.f32.mrf.mxu0
    %v2697 = vadd.f32 0.0, %v2696
    %2698 = vmatmul.f32.gmra.mxu0 %v2662
    %v2699 = vpop.f32.mrf.mxu0
    %v2700 = vadd.f32 0.0, %v2699
    %2701 = vmatmul.f32.gmra.mxu0 %v2664
    %v2702 = vpop.f32.mrf.mxu0
    %v2703 = vadd.f32 0.0, %v2702
    %2704 = vmatmul.f32.gmra.mxu0 %v2666
    %v2705 = vpop.f32.mrf.mxu0
    %v2706 = vadd.f32 0.0, %v2705
    %2707 = vmatmul.f32.gmra.mxu0 %v2668
    %v2708 = vpop.f32.mrf.mxu0
    %v2709 = vadd.f32 0.0, %v2708
    %2710 = vdwg.mxu0
    %2711 = vmatpush.msra.mxu0 %v369
    %2712 = vmatpush.msra.mxu0 %v368
    %2713 = vmatpush.msra.mxu0 %v367
    %2714 = vmatpush.msra.mxu0 %v366
    %2715 = vmatpush.msra.mxu0 %v365
    %2716 = vmatpush.msra.mxu0 %v364
    %2717 = vmatpush.msra.mxu0 %v363
    %2718 = vmatpush.msra.mxu0 %v362
    %2719 = vmatpush.msra.mxu0 %v361
    %2720 = vmatpush.msra.mxu0 %v360
    %2721 = vmatpush.msra.mxu0 %v359
    %2722 = vmatpush.msra.mxu0 %v358
    %2723 = vmatpush.msra.mxu0 %v357
    %2724 = vmatpush.msra.mxu0 %v356
    %2725 = vmatpush.msra.mxu0 %v355
    %2726 = vmatpush.msra.mxu0 %v354
    %2727 = vmatmul.f32.gmra.mxu0 %v2655
    %v2728 = vpop.f32.mrf.mxu0
    %v2729 = vadd.f32 %v2688, %v2728
    %2730 = vmatmul.f32.gmra.mxu0 %v2657
    %v2731 = vpop.f32.mrf.mxu0
    %v2732 = vadd.f32 %v2691, %v2731
    %2733 = vmatmul.f32.gmra.mxu0 %v2659
    %v2734 = vpop.f32.mrf.mxu0
    %v2735 = vadd.f32 %v2694, %v2734
    %2736 = vmatmul.f32.gmra.mxu0 %v2661
    %v2737 = vpop.f32.mrf.mxu0
    %v2738 = vadd.f32 %v2697, %v2737
    %2739 = vmatmul.f32.gmra.mxu0 %v2663
    %v2740 = vpop.f32.mrf.mxu0
    %v2741 = vadd.f32 %v2700, %v2740
    %2742 = vmatmul.f32.gmra.mxu0 %v2665
    %v2743 = vpop.f32.mrf.mxu0
    %v2744 = vadd.f32 %v2703, %v2743
    %2745 = vmatmul.f32.gmra.mxu0 %v2667
    %v2746 = vpop.f32.mrf.mxu0
    %v2747 = vadd.f32 %v2706, %v2746
    %2748 = vmatmul.f32.gmra.mxu0 %v2669
    %v2749 = vpop.f32.mrf.mxu0
    %v2750 = vadd.f32 %v2709, %v2749
    %2751 = vdwg.mxu0
    %s2752 = scalar_lea.vmem [#allocation5], 1664
    %v2753 = vld [vmem:[%s2752] sm:$0xff]
    %v2754 = vld [vmem:[%s2752 + $0x8] sm:$0xff]
    %v2755 = vld [vmem:[%s2752 + $0x10] sm:$0xff]
    %v2756 = vld [vmem:[%s2752 + $0x18] sm:$0xff]
    %v2757 = vld [vmem:[%s2752 + $0x20] sm:$0xff]
    %v2758 = vld [vmem:[%s2752 + $0x28] sm:$0xff]
    %v2759 = vld [vmem:[%s2752 + $0x30] sm:$0xff]
    %v2760 = vld [vmem:[%s2752 + $0x38] sm:$0xff]
    %v2761 = vld [vmem:[%s2752 + $0x40] sm:$0xff]
    %v2762 = vld [vmem:[%s2752 + $0x48] sm:$0xff]
    %v2763 = vld [vmem:[%s2752 + $0x50] sm:$0xff]
    %v2764 = vld [vmem:[%s2752 + $0x58] sm:$0xff]
    %v2765 = vld [vmem:[%s2752 + $0x60] sm:$0xff]
    %v2766 = vld [vmem:[%s2752 + $0x68] sm:$0xff]
    %v2767 = vld [vmem:[%s2752 + $0x70] sm:$0xff]
    %v2768 = vld [vmem:[%s2752 + $0x78] sm:$0xff]
    %2769 = vmatpush.msra.mxu0 %v2768
    %2770 = vmatpush.msra.mxu0 %v2767
    %2771 = vmatpush.msra.mxu0 %v2766
    %2772 = vmatpush.msra.mxu0 %v2765
    %2773 = vmatpush.msra.mxu0 %v2764
    %2774 = vmatpush.msra.mxu0 %v2763
    %2775 = vmatpush.msra.mxu0 %v2762
    %2776 = vmatpush.msra.mxu0 %v2761
    %2777 = vmatpush.msra.mxu0 %v2760
    %2778 = vmatpush.msra.mxu0 %v2759
    %2779 = vmatpush.msra.mxu0 %v2758
    %2780 = vmatpush.msra.mxu0 %v2757
    %2781 = vmatpush.msra.mxu0 %v2756
    %2782 = vmatpush.msra.mxu0 %v2755
    %2783 = vmatpush.msra.mxu0 %v2754
    %2784 = vmatpush.msra.mxu0 %v2753
    %2785 = vmatmul.f32.gmra.mxu0 %v2729
    %v2786 = vpop.f32.mrf.mxu0
    %v2787 = vadd.f32 0.0, %v2786
    %2788 = vmatmul.f32.gmra.mxu0 %v2732
    %v2789 = vpop.f32.mrf.mxu0
    %v2790 = vadd.f32 0.0, %v2789
    %2791 = vmatmul.f32.gmra.mxu0 %v2735
    %v2792 = vpop.f32.mrf.mxu0
    %v2793 = vadd.f32 0.0, %v2792
    %2794 = vmatmul.f32.gmra.mxu0 %v2738
    %v2795 = vpop.f32.mrf.mxu0
    %v2796 = vadd.f32 0.0, %v2795
    %2797 = vmatmul.f32.gmra.mxu0 %v2741
    %v2798 = vpop.f32.mrf.mxu0
    %v2799 = vadd.f32 0.0, %v2798
    %2800 = vmatmul.f32.gmra.mxu0 %v2744
    %v2801 = vpop.f32.mrf.mxu0
    %v2802 = vadd.f32 0.0, %v2801
    %2803 = vmatmul.f32.gmra.mxu0 %v2747
    %v2804 = vpop.f32.mrf.mxu0
    %v2805 = vadd.f32 0.0, %v2804
    %2806 = vmatmul.f32.gmra.mxu0 %v2750
    %v2807 = vpop.f32.mrf.mxu0
    %v2808 = vadd.f32 0.0, %v2807
    %2809 = vdwg.mxu0
    %v2810 = vadd.f32 %v2638, %v2787
    %v2811 = vadd.f32 %v2639, %v2790
    %v2812 = vadd.f32 %v2640, %v2793
    %v2813 = vadd.f32 %v2641, %v2796
    %v2814 = vadd.f32 %v2642, %v2799
    %v2815 = vadd.f32 %v2643, %v2802
    %v2816 = vadd.f32 %v2644, %v2805
    %v2817 = vadd.f32 %v2645, %v2808
    %v2818 = vld [vmem:[#allocation2 + $0x380] sm:$0xff]
    %v2819 = vld [vmem:[#allocation2 + $0x388] sm:$0xff]
    %v2820 = vld [vmem:[#allocation2 + $0x390] sm:$0xff]
    %v2821 = vld [vmem:[#allocation2 + $0x398] sm:$0xff]
    %v2822 = vld [vmem:[#allocation2 + $0x3a0] sm:$0xff]
    %v2823 = vld [vmem:[#allocation2 + $0x3a8] sm:$0xff]
    %v2824 = vld [vmem:[#allocation2 + $0x3b0] sm:$0xff]
    %v2825 = vld [vmem:[#allocation2 + $0x3b8] sm:$0xff]
    %v2826 = vunpack.c.l.bf16 %v2818
    %v2827 = vunpack.c.h.bf16 %v2818
    %v2828 = vunpack.c.l.bf16 %v2819
    %v2829 = vunpack.c.h.bf16 %v2819
    %v2830 = vunpack.c.l.bf16 %v2820
    %v2831 = vunpack.c.h.bf16 %v2820
    %v2832 = vunpack.c.l.bf16 %v2821
    %v2833 = vunpack.c.h.bf16 %v2821
    %v2834 = vunpack.c.l.bf16 %v2822
    %v2835 = vunpack.c.h.bf16 %v2822
    %v2836 = vunpack.c.l.bf16 %v2823
    %v2837 = vunpack.c.h.bf16 %v2823
    %v2838 = vunpack.c.l.bf16 %v2824
    %v2839 = vunpack.c.h.bf16 %v2824
    %v2840 = vunpack.c.l.bf16 %v2825
    %v2841 = vunpack.c.h.bf16 %v2825
    %2842 = vmatpush.msra.mxu0 %v353
    %2843 = vmatpush.msra.mxu0 %v352
    %2844 = vmatpush.msra.mxu0 %v351
    %2845 = vmatpush.msra.mxu0 %v350
    %2846 = vmatpush.msra.mxu0 %v349
    %2847 = vmatpush.msra.mxu0 %v348
    %2848 = vmatpush.msra.mxu0 %v347
    %2849 = vmatpush.msra.mxu0 %v346
    %2850 = vmatpush.msra.mxu0 %v345
    %2851 = vmatpush.msra.mxu0 %v344
    %2852 = vmatpush.msra.mxu0 %v343
    %2853 = vmatpush.msra.mxu0 %v342
    %2854 = vmatpush.msra.mxu0 %v341
    %2855 = vmatpush.msra.mxu0 %v340
    %2856 = vmatpush.msra.mxu0 %v339
    %2857 = vmatpush.msra.mxu0 %v338
    %2858 = vmatmul.f32.gmra.mxu0 %v2826
    %v2859 = vpop.f32.mrf.mxu0
    %v2860 = vadd.f32 0.0, %v2859
    %2861 = vmatmul.f32.gmra.mxu0 %v2828
    %v2862 = vpop.f32.mrf.mxu0
    %v2863 = vadd.f32 0.0, %v2862
    %2864 = vmatmul.f32.gmra.mxu0 %v2830
    %v2865 = vpop.f32.mrf.mxu0
    %v2866 = vadd.f32 0.0, %v2865
    %2867 = vmatmul.f32.gmra.mxu0 %v2832
    %v2868 = vpop.f32.mrf.mxu0
    %v2869 = vadd.f32 0.0, %v2868
    %2870 = vmatmul.f32.gmra.mxu0 %v2834
    %v2871 = vpop.f32.mrf.mxu0
    %v2872 = vadd.f32 0.0, %v2871
    %2873 = vmatmul.f32.gmra.mxu0 %v2836
    %v2874 = vpop.f32.mrf.mxu0
    %v2875 = vadd.f32 0.0, %v2874
    %2876 = vmatmul.f32.gmra.mxu0 %v2838
    %v2877 = vpop.f32.mrf.mxu0
    %v2878 = vadd.f32 0.0, %v2877
    %2879 = vmatmul.f32.gmra.mxu0 %v2840
    %v2880 = vpop.f32.mrf.mxu0
    %v2881 = vadd.f32 0.0, %v2880
    %2882 = vdwg.mxu0
    %2883 = vmatpush.msra.mxu0 %v369
    %2884 = vmatpush.msra.mxu0 %v368
    %2885 = vmatpush.msra.mxu0 %v367
    %2886 = vmatpush.msra.mxu0 %v366
    %2887 = vmatpush.msra.mxu0 %v365
    %2888 = vmatpush.msra.mxu0 %v364
    %2889 = vmatpush.msra.mxu0 %v363
    %2890 = vmatpush.msra.mxu0 %v362
    %2891 = vmatpush.msra.mxu0 %v361
    %2892 = vmatpush.msra.mxu0 %v360
    %2893 = vmatpush.msra.mxu0 %v359
    %2894 = vmatpush.msra.mxu0 %v358
    %2895 = vmatpush.msra.mxu0 %v357
    %2896 = vmatpush.msra.mxu0 %v356
    %2897 = vmatpush.msra.mxu0 %v355
    %2898 = vmatpush.msra.mxu0 %v354
    %2899 = vmatmul.f32.gmra.mxu0 %v2827
    %v2900 = vpop.f32.mrf.mxu0
    %v2901 = vadd.f32 %v2860, %v2900
    %2902 = vmatmul.f32.gmra.mxu0 %v2829
    %v2903 = vpop.f32.mrf.mxu0
    %v2904 = vadd.f32 %v2863, %v2903
    %2905 = vmatmul.f32.gmra.mxu0 %v2831
    %v2906 = vpop.f32.mrf.mxu0
    %v2907 = vadd.f32 %v2866, %v2906
    %2908 = vmatmul.f32.gmra.mxu0 %v2833
    %v2909 = vpop.f32.mrf.mxu0
    %v2910 = vadd.f32 %v2869, %v2909
    %2911 = vmatmul.f32.gmra.mxu0 %v2835
    %v2912 = vpop.f32.mrf.mxu0
    %v2913 = vadd.f32 %v2872, %v2912
    %2914 = vmatmul.f32.gmra.mxu0 %v2837
    %v2915 = vpop.f32.mrf.mxu0
    %v2916 = vadd.f32 %v2875, %v2915
    %2917 = vmatmul.f32.gmra.mxu0 %v2839
    %v2918 = vpop.f32.mrf.mxu0
    %v2919 = vadd.f32 %v2878, %v2918
    %2920 = vmatmul.f32.gmra.mxu0 %v2841
    %v2921 = vpop.f32.mrf.mxu0
    %v2922 = vadd.f32 %v2881, %v2921
    %2923 = vdwg.mxu0
    %s2924 = scalar_lea.vmem [#allocation5], 1792
    %v2925 = vld [vmem:[%s2924] sm:$0xff]
    %v2926 = vld [vmem:[%s2924 + $0x8] sm:$0xff]
    %v2927 = vld [vmem:[%s2924 + $0x10] sm:$0xff]
    %v2928 = vld [vmem:[%s2924 + $0x18] sm:$0xff]
    %v2929 = vld [vmem:[%s2924 + $0x20] sm:$0xff]
    %v2930 = vld [vmem:[%s2924 + $0x28] sm:$0xff]
    %v2931 = vld [vmem:[%s2924 + $0x30] sm:$0xff]
    %v2932 = vld [vmem:[%s2924 + $0x38] sm:$0xff]
    %v2933 = vld [vmem:[%s2924 + $0x40] sm:$0xff]
    %v2934 = vld [vmem:[%s2924 + $0x48] sm:$0xff]
    %v2935 = vld [vmem:[%s2924 + $0x50] sm:$0xff]
    %v2936 = vld [vmem:[%s2924 + $0x58] sm:$0xff]
    %v2937 = vld [vmem:[%s2924 + $0x60] sm:$0xff]
    %v2938 = vld [vmem:[%s2924 + $0x68] sm:$0xff]
    %v2939 = vld [vmem:[%s2924 + $0x70] sm:$0xff]
    %v2940 = vld [vmem:[%s2924 + $0x78] sm:$0xff]
    %2941 = vmatpush.msra.mxu0 %v2940
    %2942 = vmatpush.msra.mxu0 %v2939
    %2943 = vmatpush.msra.mxu0 %v2938
    %2944 = vmatpush.msra.mxu0 %v2937
    %2945 = vmatpush.msra.mxu0 %v2936
    %2946 = vmatpush.msra.mxu0 %v2935
    %2947 = vmatpush.msra.mxu0 %v2934
    %2948 = vmatpush.msra.mxu0 %v2933
    %2949 = vmatpush.msra.mxu0 %v2932
    %2950 = vmatpush.msra.mxu0 %v2931
    %2951 = vmatpush.msra.mxu0 %v2930
    %2952 = vmatpush.msra.mxu0 %v2929
    %2953 = vmatpush.msra.mxu0 %v2928
    %2954 = vmatpush.msra.mxu0 %v2927
    %2955 = vmatpush.msra.mxu0 %v2926
    %2956 = vmatpush.msra.mxu0 %v2925
    %2957 = vmatmul.f32.gmra.mxu0 %v2901
    %v2958 = vpop.f32.mrf.mxu0
    %v2959 = vadd.f32 0.0, %v2958
    %2960 = vmatmul.f32.gmra.mxu0 %v2904
    %v2961 = vpop.f32.mrf.mxu0
    %v2962 = vadd.f32 0.0, %v2961
    %2963 = vmatmul.f32.gmra.mxu0 %v2907
    %v2964 = vpop.f32.mrf.mxu0
    %v2965 = vadd.f32 0.0, %v2964
    %2966 = vmatmul.f32.gmra.mxu0 %v2910
    %v2967 = vpop.f32.mrf.mxu0
    %v2968 = vadd.f32 0.0, %v2967
    %2969 = vmatmul.f32.gmra.mxu0 %v2913
    %v2970 = vpop.f32.mrf.mxu0
    %v2971 = vadd.f32 0.0, %v2970
    %2972 = vmatmul.f32.gmra.mxu0 %v2916
    %v2973 = vpop.f32.mrf.mxu0
    %v2974 = vadd.f32 0.0, %v2973
    %2975 = vmatmul.f32.gmra.mxu0 %v2919
    %v2976 = vpop.f32.mrf.mxu0
    %v2977 = vadd.f32 0.0, %v2976
    %2978 = vmatmul.f32.gmra.mxu0 %v2922
    %v2979 = vpop.f32.mrf.mxu0
    %v2980 = vadd.f32 0.0, %v2979
    %2981 = vdwg.mxu0
    %v2982 = vadd.f32 %v2810, %v2959
    %v2983 = vadd.f32 %v2811, %v2962
    %v2984 = vadd.f32 %v2812, %v2965
    %v2985 = vadd.f32 %v2813, %v2968
    %v2986 = vadd.f32 %v2814, %v2971
    %v2987 = vadd.f32 %v2815, %v2974
    %v2988 = vadd.f32 %v2816, %v2977
    %v2989 = vadd.f32 %v2817, %v2980
    %v2990 = vld [vmem:[#allocation2 + $0x3c0] sm:$0xff]
    %v2991 = vld [vmem:[#allocation2 + $0x3c8] sm:$0xff]
    %v2992 = vld [vmem:[#allocation2 + $0x3d0] sm:$0xff]
    %v2993 = vld [vmem:[#allocation2 + $0x3d8] sm:$0xff]
    %v2994 = vld [vmem:[#allocation2 + $0x3e0] sm:$0xff]
    %v2995 = vld [vmem:[#allocation2 + $0x3e8] sm:$0xff]
    %v2996 = vld [vmem:[#allocation2 + $0x3f0] sm:$0xff]
    %v2997 = vld [vmem:[#allocation2 + $0x3f8] sm:$0xff]
    %v2998 = vunpack.c.l.bf16 %v2990
    %v2999 = vunpack.c.h.bf16 %v2990
    %v3000 = vunpack.c.l.bf16 %v2991
    %v3001 = vunpack.c.h.bf16 %v2991
    %v3002 = vunpack.c.l.bf16 %v2992
    %v3003 = vunpack.c.h.bf16 %v2992
    %v3004 = vunpack.c.l.bf16 %v2993
    %v3005 = vunpack.c.h.bf16 %v2993
    %v3006 = vunpack.c.l.bf16 %v2994
    %v3007 = vunpack.c.h.bf16 %v2994
    %v3008 = vunpack.c.l.bf16 %v2995
    %v3009 = vunpack.c.h.bf16 %v2995
    %v3010 = vunpack.c.l.bf16 %v2996
    %v3011 = vunpack.c.h.bf16 %v2996
    %v3012 = vunpack.c.l.bf16 %v2997
    %v3013 = vunpack.c.h.bf16 %v2997
    %3014 = vmatpush.msra.mxu0 %v353
    %3015 = vmatpush.msra.mxu0 %v352
    %3016 = vmatpush.msra.mxu0 %v351
    %3017 = vmatpush.msra.mxu0 %v350
    %3018 = vmatpush.msra.mxu0 %v349
    %3019 = vmatpush.msra.mxu0 %v348
    %3020 = vmatpush.msra.mxu0 %v347
    %3021 = vmatpush.msra.mxu0 %v346
    %3022 = vmatpush.msra.mxu0 %v345
    %3023 = vmatpush.msra.mxu0 %v344
    %3024 = vmatpush.msra.mxu0 %v343
    %3025 = vmatpush.msra.mxu0 %v342
    %3026 = vmatpush.msra.mxu0 %v341
    %3027 = vmatpush.msra.mxu0 %v340
    %3028 = vmatpush.msra.mxu0 %v339
    %3029 = vmatpush.msra.mxu0 %v338
    %3030 = vmatmul.f32.gmra.mxu0 %v2998
    %v3031 = vpop.f32.mrf.mxu0
    %v3032 = vadd.f32 0.0, %v3031
    %3033 = vmatmul.f32.gmra.mxu0 %v3000
    %v3034 = vpop.f32.mrf.mxu0
    %v3035 = vadd.f32 0.0, %v3034
    %3036 = vmatmul.f32.gmra.mxu0 %v3002
    %v3037 = vpop.f32.mrf.mxu0
    %v3038 = vadd.f32 0.0, %v3037
    %3039 = vmatmul.f32.gmra.mxu0 %v3004
    %v3040 = vpop.f32.mrf.mxu0
    %v3041 = vadd.f32 0.0, %v3040
    %3042 = vmatmul.f32.gmra.mxu0 %v3006
    %v3043 = vpop.f32.mrf.mxu0
    %v3044 = vadd.f32 0.0, %v3043
    %3045 = vmatmul.f32.gmra.mxu0 %v3008
    %v3046 = vpop.f32.mrf.mxu0
    %v3047 = vadd.f32 0.0, %v3046
    %3048 = vmatmul.f32.gmra.mxu0 %v3010
    %v3049 = vpop.f32.mrf.mxu0
    %v3050 = vadd.f32 0.0, %v3049
    %3051 = vmatmul.f32.gmra.mxu0 %v3012
    %v3052 = vpop.f32.mrf.mxu0
    %v3053 = vadd.f32 0.0, %v3052
    %3054 = vdwg.mxu0
    %3055 = vmatpush.msra.mxu0 %v369
    %3056 = vmatpush.msra.mxu0 %v368
    %3057 = vmatpush.msra.mxu0 %v367
    %3058 = vmatpush.msra.mxu0 %v366
    %3059 = vmatpush.msra.mxu0 %v365
    %3060 = vmatpush.msra.mxu0 %v364
    %3061 = vmatpush.msra.mxu0 %v363
    %3062 = vmatpush.msra.mxu0 %v362
    %3063 = vmatpush.msra.mxu0 %v361
    %3064 = vmatpush.msra.mxu0 %v360
    %3065 = vmatpush.msra.mxu0 %v359
    %3066 = vmatpush.msra.mxu0 %v358
    %3067 = vmatpush.msra.mxu0 %v357
    %3068 = vmatpush.msra.mxu0 %v356
    %3069 = vmatpush.msra.mxu0 %v355
    %3070 = vmatpush.msra.mxu0 %v354
    %3071 = vmatmul.f32.gmra.mxu0 %v2999
    %v3072 = vpop.f32.mrf.mxu0
    %v3073 = vadd.f32 %v3032, %v3072
    %3074 = vmatmul.f32.gmra.mxu0 %v3001
    %v3075 = vpop.f32.mrf.mxu0
    %v3076 = vadd.f32 %v3035, %v3075
    %3077 = vmatmul.f32.gmra.mxu0 %v3003
    %v3078 = vpop.f32.mrf.mxu0
    %v3079 = vadd.f32 %v3038, %v3078
    %3080 = vmatmul.f32.gmra.mxu0 %v3005
    %v3081 = vpop.f32.mrf.mxu0
    %v3082 = vadd.f32 %v3041, %v3081
    %3083 = vmatmul.f32.gmra.mxu0 %v3007
    %v3084 = vpop.f32.mrf.mxu0
    %v3085 = vadd.f32 %v3044, %v3084
    %3086 = vmatmul.f32.gmra.mxu0 %v3009
    %v3087 = vpop.f32.mrf.mxu0
    %v3088 = vadd.f32 %v3047, %v3087
    %3089 = vmatmul.f32.gmra.mxu0 %v3011
    %v3090 = vpop.f32.mrf.mxu0
    %v3091 = vadd.f32 %v3050, %v3090
    %3092 = vmatmul.f32.gmra.mxu0 %v3013
    %v3093 = vpop.f32.mrf.mxu0
    %v3094 = vadd.f32 %v3053, %v3093
    %3095 = vdwg.mxu0
    %s3096 = scalar_lea.vmem [#allocation5], 1920
    %v3097 = vld [vmem:[%s3096] sm:$0xff]
    %v3098 = vld [vmem:[%s3096 + $0x8] sm:$0xff]
    %v3099 = vld [vmem:[%s3096 + $0x10] sm:$0xff]
    %v3100 = vld [vmem:[%s3096 + $0x18] sm:$0xff]
    %v3101 = vld [vmem:[%s3096 + $0x20] sm:$0xff]
    %v3102 = vld [vmem:[%s3096 + $0x28] sm:$0xff]
    %v3103 = vld [vmem:[%s3096 + $0x30] sm:$0xff]
    %v3104 = vld [vmem:[%s3096 + $0x38] sm:$0xff]
    %v3105 = vld [vmem:[%s3096 + $0x40] sm:$0xff]
    %v3106 = vld [vmem:[%s3096 + $0x48] sm:$0xff]
    %v3107 = vld [vmem:[%s3096 + $0x50] sm:$0xff]
    %v3108 = vld [vmem:[%s3096 + $0x58] sm:$0xff]
    %v3109 = vld [vmem:[%s3096 + $0x60] sm:$0xff]
    %v3110 = vld [vmem:[%s3096 + $0x68] sm:$0xff]
    %v3111 = vld [vmem:[%s3096 + $0x70] sm:$0xff]
    %v3112 = vld [vmem:[%s3096 + $0x78] sm:$0xff]
    %3113 = vmatpush.msra.mxu0 %v3112
    %3114 = vmatpush.msra.mxu0 %v3111
    %3115 = vmatpush.msra.mxu0 %v3110
    %3116 = vmatpush.msra.mxu0 %v3109
    %3117 = vmatpush.msra.mxu0 %v3108
    %3118 = vmatpush.msra.mxu0 %v3107
    %3119 = vmatpush.msra.mxu0 %v3106
    %3120 = vmatpush.msra.mxu0 %v3105
    %3121 = vmatpush.msra.mxu0 %v3104
    %3122 = vmatpush.msra.mxu0 %v3103
    %3123 = vmatpush.msra.mxu0 %v3102
    %3124 = vmatpush.msra.mxu0 %v3101
    %3125 = vmatpush.msra.mxu0 %v3100
    %3126 = vmatpush.msra.mxu0 %v3099
    %3127 = vmatpush.msra.mxu0 %v3098
    %3128 = vmatpush.msra.mxu0 %v3097
    %3129 = vmatmul.f32.gmra.mxu0 %v3073
    %v3130 = vpop.f32.mrf.mxu0
    %v3131 = vadd.f32 0.0, %v3130
    %3132 = vmatmul.f32.gmra.mxu0 %v3076
    %v3133 = vpop.f32.mrf.mxu0
    %v3134 = vadd.f32 0.0, %v3133
    %3135 = vmatmul.f32.gmra.mxu0 %v3079
    %v3136 = vpop.f32.mrf.mxu0
    %v3137 = vadd.f32 0.0, %v3136
    %3138 = vmatmul.f32.gmra.mxu0 %v3082
    %v3139 = vpop.f32.mrf.mxu0
    %v3140 = vadd.f32 0.0, %v3139
    %3141 = vmatmul.f32.gmra.mxu0 %v3085
    %v3142 = vpop.f32.mrf.mxu0
    %v3143 = vadd.f32 0.0, %v3142
    %3144 = vmatmul.f32.gmra.mxu0 %v3088
    %v3145 = vpop.f32.mrf.mxu0
    %v3146 = vadd.f32 0.0, %v3145
    %3147 = vmatmul.f32.gmra.mxu0 %v3091
    %v3148 = vpop.f32.mrf.mxu0
    %v3149 = vadd.f32 0.0, %v3148
    %3150 = vmatmul.f32.gmra.mxu0 %v3094
    %v3151 = vpop.f32.mrf.mxu0
    %v3152 = vadd.f32 0.0, %v3151
    %3153 = vdwg.mxu0
    %v3154 = vadd.f32 %v2982, %v3131
    %v3155 = vadd.f32 %v2983, %v3134
    %v3156 = vadd.f32 %v2984, %v3137
    %v3157 = vadd.f32 %v2985, %v3140
    %v3158 = vadd.f32 %v2986, %v3143
    %v3159 = vadd.f32 %v2987, %v3146
    %v3160 = vadd.f32 %v2988, %v3149
    %v3161 = vadd.f32 %v2989, %v3152
    %v3162 = vld [vmem:[%s5] sm:$0x1]
    %v3164 = vperm.slane %v3162, 0
    %v3166 = vadd.f32 %v3154, %v3164
    %v3167 = vadd.f32 %v3155, %v3164
    %v3168 = vadd.f32 %v3156, %v3164
    %v3169 = vadd.f32 %v3157, %v3164
    %v3170 = vadd.f32 %v3158, %v3164
    %v3171 = vadd.f32 %v3159, %v3164
    %v3172 = vadd.f32 %v3160, %v3164
    %v3173 = vadd.f32 %v3161, %v3164
    %v3174 = vmax.f32 %v3166, 0.0
    %v3175 = vmax.f32 %v3167, 0.0
    %v3176 = vmax.f32 %v3168, 0.0
    %v3177 = vmax.f32 %v3169, 0.0
    %v3178 = vmax.f32 %v3170, 0.0
    %v3179 = vmax.f32 %v3171, 0.0
    %v3180 = vmax.f32 %v3172, 0.0
    %v3181 = vmax.f32 %v3173, 0.0
    %v3182 = vsub.f32 %v3178, %v3174
    %v3183 = vsub.f32 %v3179, %v3175
    %v3184 = vsub.f32 %v3180, %v3176
    %v3185 = vsub.f32 %v3181, %v3177
    %v3186 = vmul.f32 %v3182, %v3182
    %v3187 = vmul.f32 %v3183, %v3183
    %v3188 = vmul.f32 %v3184, %v3184
    %v3189 = vmul.f32 %v3185, %v3185
    %v3190 = vadd.f32 %v3186, %v3187
    %v3191 = vadd.f32 %v3190, %v3188
    %v3192 = vadd.f32 %v3191, %v3189
    %3193 = vadd.xlane.f32.xlu0 %v3192
    %v3194 = vpop.xlane.xlu0 %3193
    %v3195 = vrot.slane %v3194, 4
    %v3196 = vadd.f32 %v3194, %v3195
    %v3197 = vrot.slane %v3196, 2
    %v3198 = vadd.f32 %v3196, %v3197
    %v3199 = vrot.slane %v3198, 1
    %v3200 = vadd.f32 %v3198, %v3199
    %s3201 = vtos %v3200
    %v3202 = vstv %s3201
    %v3203 = vadd.f32 %v426, %v3202
    %v3204 = vld [vmem:[%s6] sm:$0xf]
    %v3205 = vld [vmem:[%s6 + $0x4] sm:$0xf]
    %v3206 = vunpack.c.l.bf16 %v3204
    %v3207 = vunpack.c.l.bf16 %v3205
    %vm3208 = vcmask 523264
    %v3210 = vsel %vm3208, %v3206, 0
    %v3213 = vsel %vm3208, %v3207, 0
    %3215 = vmatpush.msra.mxu0 0.0
    %3216 = vmatpush.msra.mxu0 0.0
    %3217 = vmatpush.msra.mxu0 0.0
    %3218 = vmatpush.msra.mxu0 0.0
    %3219 = vmatpush.msra.mxu0 0.0
    %3220 = vmatpush.msra.mxu0 0.0
    %3221 = vmatpush.msra.mxu0 0.0
    %3222 = vmatpush.msra.mxu0 0.0
    %3223 = vmatpush.msra.mxu0 %v3181
    %3224 = vmatpush.msra.mxu0 %v3180
    %3225 = vmatpush.msra.mxu0 %v3179
    %3226 = vmatpush.msra.mxu0 %v3178
    %3227 = vmatpush.msra.mxu0 %v3177
    %3228 = vmatpush.msra.mxu0 %v3176
    %3229 = vmatpush.msra.mxu0 %v3175
    %3230 = vmatpush.msra.mxu0 %v3174
    %3231 = vmatmul.f32.gmra.mxu0 %v3210
    %v3232 = vpop.f32.mrf.mxu0
    %v3233 = vadd.f32 0.0, %v3232
    %3234 = vmatmul.f32.gmra.mxu0 %v3213
    %v3235 = vpop.f32.mrf.mxu0
    %v3236 = vadd.f32 0.0, %v3235
    %3237 = vdwg.mxu0
    %v3238 = vld [vmem:[#allocation7] sm:$0xff]
    %v3239 = vld [vmem:[#allocation7 + $0x8] sm:$0xff]
    %v3240 = vld [vmem:[#allocation7 + $0x10] sm:$0xff]
    %v3241 = vld [vmem:[#allocation7 + $0x18] sm:$0xff]
    %v3242 = vld [vmem:[#allocation7 + $0x20] sm:$0xff]
    %v3243 = vld [vmem:[#allocation7 + $0x28] sm:$0xff]
    %v3244 = vld [vmem:[#allocation7 + $0x30] sm:$0xff]
    %v3245 = vld [vmem:[#allocation7 + $0x38] sm:$0xff]
    %v3246 = vld [vmem:[#allocation7 + $0x40] sm:$0xff]
    %v3247 = vld [vmem:[#allocation7 + $0x48] sm:$0xff]
    %v3248 = vld [vmem:[#allocation7 + $0x50] sm:$0xff]
    %v3249 = vld [vmem:[#allocation7 + $0x58] sm:$0xff]
    %v3250 = vld [vmem:[#allocation7 + $0x60] sm:$0xff]
    %v3251 = vld [vmem:[#allocation7 + $0x68] sm:$0xff]
    %v3252 = vld [vmem:[#allocation7 + $0x70] sm:$0xff]
    %v3253 = vld [vmem:[#allocation7 + $0x78] sm:$0xff]
    %v3254 = vld [vmem:[%s6 + $0x8] sm:$0xf]
    %v3255 = vld [vmem:[%s6 + $0xc] sm:$0xf]
    %v3256 = vunpack.c.l.bf16 %v3254
    %v3257 = vunpack.c.l.bf16 %v3255
    %v3259 = vsel %vm3208, %v3256, 0
    %v3262 = vsel %vm3208, %v3257, 0
    %3264 = vmatpush.msra.mxu0 0.0
    %3265 = vmatpush.msra.mxu0 0.0
    %3266 = vmatpush.msra.mxu0 0.0
    %3267 = vmatpush.msra.mxu0 0.0
    %3268 = vmatpush.msra.mxu0 0.0
    %3269 = vmatpush.msra.mxu0 0.0
    %3270 = vmatpush.msra.mxu0 0.0
    %3271 = vmatpush.msra.mxu0 0.0
    %3272 = vmatpush.msra.mxu0 %v3181
    %3273 = vmatpush.msra.mxu0 %v3180
    %3274 = vmatpush.msra.mxu0 %v3179
    %3275 = vmatpush.msra.mxu0 %v3178
    %3276 = vmatpush.msra.mxu0 %v3177
    %3277 = vmatpush.msra.mxu0 %v3176
    %3278 = vmatpush.msra.mxu0 %v3175
    %3279 = vmatpush.msra.mxu0 %v3174
    %3280 = vmatmul.f32.gmra.mxu0 %v3259
    %v3281 = vpop.f32.mrf.mxu0
    %v3282 = vadd.f32 0.0, %v3281
    %3283 = vmatmul.f32.gmra.mxu0 %v3262
    %v3284 = vpop.f32.mrf.mxu0
    %v3285 = vadd.f32 0.0, %v3284
    %3286 = vdwg.mxu0
    %s3287 = scalar_lea.vmem [#allocation7], 128
    %v3288 = vld [vmem:[%s3287] sm:$0xff]
    %v3289 = vld [vmem:[%s3287 + $0x8] sm:$0xff]
    %v3290 = vld [vmem:[%s3287 + $0x10] sm:$0xff]
    %v3291 = vld [vmem:[%s3287 + $0x18] sm:$0xff]
    %v3292 = vld [vmem:[%s3287 + $0x20] sm:$0xff]
    %v3293 = vld [vmem:[%s3287 + $0x28] sm:$0xff]
    %v3294 = vld [vmem:[%s3287 + $0x30] sm:$0xff]
    %v3295 = vld [vmem:[%s3287 + $0x38] sm:$0xff]
    %v3296 = vld [vmem:[%s3287 + $0x40] sm:$0xff]
    %v3297 = vld [vmem:[%s3287 + $0x48] sm:$0xff]
    %v3298 = vld [vmem:[%s3287 + $0x50] sm:$0xff]
    %v3299 = vld [vmem:[%s3287 + $0x58] sm:$0xff]
    %v3300 = vld [vmem:[%s3287 + $0x60] sm:$0xff]
    %v3301 = vld [vmem:[%s3287 + $0x68] sm:$0xff]
    %v3302 = vld [vmem:[%s3287 + $0x70] sm:$0xff]
    %v3303 = vld [vmem:[%s3287 + $0x78] sm:$0xff]
    %3304 = vmatpush.msra.mxu0 %v3303
    %3305 = vmatpush.msra.mxu0 %v3302
    %3306 = vmatpush.msra.mxu0 %v3301
    %3307 = vmatpush.msra.mxu0 %v3300
    %3308 = vmatpush.msra.mxu0 %v3299
    %3309 = vmatpush.msra.mxu0 %v3298
    %3310 = vmatpush.msra.mxu0 %v3297
    %3311 = vmatpush.msra.mxu0 %v3296
    %3312 = vmatpush.msra.mxu0 %v3295
    %3313 = vmatpush.msra.mxu0 %v3294
    %3314 = vmatpush.msra.mxu0 %v3293
    %3315 = vmatpush.msra.mxu0 %v3292
    %3316 = vmatpush.msra.mxu0 %v3291
    %3317 = vmatpush.msra.mxu0 %v3290
    %3318 = vmatpush.msra.mxu0 %v3289
    %3319 = vmatpush.msra.mxu0 %v3288
    %3320 = vmatmul.f32.gmra.mxu0 %v3282
    %v3321 = vpop.f32.mrf.mxu0
    %v3322 = vadd.f32 0.0, %v3321
    %3323 = vmatmul.f32.gmra.mxu0 %v3285
    %v3324 = vpop.f32.mrf.mxu0
    %v3325 = vadd.f32 0.0, %v3324
    %3326 = vdwg.mxu0
    %3327 = vmatpush.msra.mxu0 %v3253
    %3328 = vmatpush.msra.mxu0 %v3252
    %3329 = vmatpush.msra.mxu0 %v3251
    %3330 = vmatpush.msra.mxu0 %v3250
    %3331 = vmatpush.msra.mxu0 %v3249
    %3332 = vmatpush.msra.mxu0 %v3248
    %3333 = vmatpush.msra.mxu0 %v3247
    %3334 = vmatpush.msra.mxu0 %v3246
    %3335 = vmatpush.msra.mxu0 %v3245
    %3336 = vmatpush.msra.mxu0 %v3244
    %3337 = vmatpush.msra.mxu0 %v3243
    %3338 = vmatpush.msra.mxu0 %v3242
    %3339 = vmatpush.msra.mxu0 %v3241
    %3340 = vmatpush.msra.mxu0 %v3240
    %3341 = vmatpush.msra.mxu0 %v3239
    %3342 = vmatpush.msra.mxu0 %v3238
    %3343 = vmatmul.f32.gmra.mxu0 %v3233
    %v3344 = vpop.f32.mrf.mxu0
    %v3345 = vadd.f32 %v3322, %v3344
    %3346 = vmatmul.f32.gmra.mxu0 %v3236
    %v3347 = vpop.f32.mrf.mxu0
    %v3348 = vadd.f32 %v3325, %v3347
    %3349 = vdwg.mxu0
    %v3350 = vld [vmem:[%s6 + $0x10] sm:$0xf]
    %v3351 = vld [vmem:[%s6 + $0x14] sm:$0xf]
    %v3352 = vunpack.c.l.bf16 %v3350
    %v3353 = vunpack.c.l.bf16 %v3351
    %v3355 = vsel %vm3208, %v3352, 0
    %v3358 = vsel %vm3208, %v3353, 0
    %3360 = vmatpush.msra.mxu0 0.0
    %3361 = vmatpush.msra.mxu0 0.0
    %3362 = vmatpush.msra.mxu0 0.0
    %3363 = vmatpush.msra.mxu0 0.0
    %3364 = vmatpush.msra.mxu0 0.0
    %3365 = vmatpush.msra.mxu0 0.0
    %3366 = vmatpush.msra.mxu0 0.0
    %3367 = vmatpush.msra.mxu0 0.0
    %3368 = vmatpush.msra.mxu0 %v3181
    %3369 = vmatpush.msra.mxu0 %v3180
    %3370 = vmatpush.msra.mxu0 %v3179
    %3371 = vmatpush.msra.mxu0 %v3178
    %3372 = vmatpush.msra.mxu0 %v3177
    %3373 = vmatpush.msra.mxu0 %v3176
    %3374 = vmatpush.msra.mxu0 %v3175
    %3375 = vmatpush.msra.mxu0 %v3174
    %3376 = vmatmul.f32.gmra.mxu0 %v3355
    %v3377 = vpop.f32.mrf.mxu0
    %v3378 = vadd.f32 0.0, %v3377
    %3379 = vmatmul.f32.gmra.mxu0 %v3358
    %v3380 = vpop.f32.mrf.mxu0
    %v3381 = vadd.f32 0.0, %v3380
    %3382 = vdwg.mxu0
    %s3383 = scalar_lea.vmem [#allocation7], 256
    %v3384 = vld [vmem:[%s3383] sm:$0xff]
    %v3385 = vld [vmem:[%s3383 + $0x8] sm:$0xff]
    %v3386 = vld [vmem:[%s3383 + $0x10] sm:$0xff]
    %v3387 = vld [vmem:[%s3383 + $0x18] sm:$0xff]
    %v3388 = vld [vmem:[%s3383 + $0x20] sm:$0xff]
    %v3389 = vld [vmem:[%s3383 + $0x28] sm:$0xff]
    %v3390 = vld [vmem:[%s3383 + $0x30] sm:$0xff]
    %v3391 = vld [vmem:[%s3383 + $0x38] sm:$0xff]
    %v3392 = vld [vmem:[%s3383 + $0x40] sm:$0xff]
    %v3393 = vld [vmem:[%s3383 + $0x48] sm:$0xff]
    %v3394 = vld [vmem:[%s3383 + $0x50] sm:$0xff]
    %v3395 = vld [vmem:[%s3383 + $0x58] sm:$0xff]
    %v3396 = vld [vmem:[%s3383 + $0x60] sm:$0xff]
    %v3397 = vld [vmem:[%s3383 + $0x68] sm:$0xff]
    %v3398 = vld [vmem:[%s3383 + $0x70] sm:$0xff]
    %v3399 = vld [vmem:[%s3383 + $0x78] sm:$0xff]
    %3400 = vmatpush.msra.mxu0 %v3399
    %3401 = vmatpush.msra.mxu0 %v3398
    %3402 = vmatpush.msra.mxu0 %v3397
    %3403 = vmatpush.msra.mxu0 %v3396
    %3404 = vmatpush.msra.mxu0 %v3395
    %3405 = vmatpush.msra.mxu0 %v3394
    %3406 = vmatpush.msra.mxu0 %v3393
    %3407 = vmatpush.msra.mxu0 %v3392
    %3408 = vmatpush.msra.mxu0 %v3391
    %3409 = vmatpush.msra.mxu0 %v3390
    %3410 = vmatpush.msra.mxu0 %v3389
    %3411 = vmatpush.msra.mxu0 %v3388
    %3412 = vmatpush.msra.mxu0 %v3387
    %3413 = vmatpush.msra.mxu0 %v3386
    %3414 = vmatpush.msra.mxu0 %v3385
    %3415 = vmatpush.msra.mxu0 %v3384
    %3416 = vmatmul.f32.gmra.mxu0 %v3378
    %v3417 = vpop.f32.mrf.mxu0
    %v3418 = vadd.f32 0.0, %v3417
    %3419 = vmatmul.f32.gmra.mxu0 %v3381
    %v3420 = vpop.f32.mrf.mxu0
    %v3421 = vadd.f32 0.0, %v3420
    %3422 = vdwg.mxu0
    %v3423 = vadd.f32 %v3345, %v3418
    %v3424 = vadd.f32 %v3348, %v3421
    %v3425 = vld [vmem:[%s6 + $0x18] sm:$0xf]
    %v3426 = vld [vmem:[%s6 + $0x1c] sm:$0xf]
    %v3427 = vunpack.c.l.bf16 %v3425
    %v3428 = vunpack.c.l.bf16 %v3426
    %v3430 = vsel %vm3208, %v3427, 0
    %v3433 = vsel %vm3208, %v3428, 0
    %3435 = vmatpush.msra.mxu0 0.0
    %3436 = vmatpush.msra.mxu0 0.0
    %3437 = vmatpush.msra.mxu0 0.0
    %3438 = vmatpush.msra.mxu0 0.0
    %3439 = vmatpush.msra.mxu0 0.0
    %3440 = vmatpush.msra.mxu0 0.0
    %3441 = vmatpush.msra.mxu0 0.0
    %3442 = vmatpush.msra.mxu0 0.0
    %3443 = vmatpush.msra.mxu0 %v3181
    %3444 = vmatpush.msra.mxu0 %v3180
    %3445 = vmatpush.msra.mxu0 %v3179
    %3446 = vmatpush.msra.mxu0 %v3178
    %3447 = vmatpush.msra.mxu0 %v3177
    %3448 = vmatpush.msra.mxu0 %v3176
    %3449 = vmatpush.msra.mxu0 %v3175
    %3450 = vmatpush.msra.mxu0 %v3174
    %3451 = vmatmul.f32.gmra.mxu0 %v3430
    %v3452 = vpop.f32.mrf.mxu0
    %v3453 = vadd.f32 0.0, %v3452
    %3454 = vmatmul.f32.gmra.mxu0 %v3433
    %v3455 = vpop.f32.mrf.mxu0
    %v3456 = vadd.f32 0.0, %v3455
    %3457 = vdwg.mxu0
    %s3458 = scalar_lea.vmem [#allocation7], 384
    %v3459 = vld [vmem:[%s3458] sm:$0xff]
    %v3460 = vld [vmem:[%s3458 + $0x8] sm:$0xff]
    %v3461 = vld [vmem:[%s3458 + $0x10] sm:$0xff]
    %v3462 = vld [vmem:[%s3458 + $0x18] sm:$0xff]
    %v3463 = vld [vmem:[%s3458 + $0x20] sm:$0xff]
    %v3464 = vld [vmem:[%s3458 + $0x28] sm:$0xff]
    %v3465 = vld [vmem:[%s3458 + $0x30] sm:$0xff]
    %v3466 = vld [vmem:[%s3458 + $0x38] sm:$0xff]
    %v3467 = vld [vmem:[%s3458 + $0x40] sm:$0xff]
    %v3468 = vld [vmem:[%s3458 + $0x48] sm:$0xff]
    %v3469 = vld [vmem:[%s3458 + $0x50] sm:$0xff]
    %v3470 = vld [vmem:[%s3458 + $0x58] sm:$0xff]
    %v3471 = vld [vmem:[%s3458 + $0x60] sm:$0xff]
    %v3472 = vld [vmem:[%s3458 + $0x68] sm:$0xff]
    %v3473 = vld [vmem:[%s3458 + $0x70] sm:$0xff]
    %v3474 = vld [vmem:[%s3458 + $0x78] sm:$0xff]
    %3475 = vmatpush.msra.mxu0 %v3474
    %3476 = vmatpush.msra.mxu0 %v3473
    %3477 = vmatpush.msra.mxu0 %v3472
    %3478 = vmatpush.msra.mxu0 %v3471
    %3479 = vmatpush.msra.mxu0 %v3470
    %3480 = vmatpush.msra.mxu0 %v3469
    %3481 = vmatpush.msra.mxu0 %v3468
    %3482 = vmatpush.msra.mxu0 %v3467
    %3483 = vmatpush.msra.mxu0 %v3466
    %3484 = vmatpush.msra.mxu0 %v3465
    %3485 = vmatpush.msra.mxu0 %v3464
    %3486 = vmatpush.msra.mxu0 %v3463
    %3487 = vmatpush.msra.mxu0 %v3462
    %3488 = vmatpush.msra.mxu0 %v3461
    %3489 = vmatpush.msra.mxu0 %v3460
    %3490 = vmatpush.msra.mxu0 %v3459
    %3491 = vmatmul.f32.gmra.mxu0 %v3453
    %v3492 = vpop.f32.mrf.mxu0
    %v3493 = vadd.f32 0.0, %v3492
    %3494 = vmatmul.f32.gmra.mxu0 %v3456
    %v3495 = vpop.f32.mrf.mxu0
    %v3496 = vadd.f32 0.0, %v3495
    %3497 = vdwg.mxu0
    %v3498 = vadd.f32 %v3423, %v3493
    %v3499 = vadd.f32 %v3424, %v3496
    %v3500 = vld [vmem:[%s6 + $0x20] sm:$0xf]
    %v3501 = vld [vmem:[%s6 + $0x24] sm:$0xf]
    %v3502 = vunpack.c.l.bf16 %v3500
    %v3503 = vunpack.c.l.bf16 %v3501
    %v3505 = vsel %vm3208, %v3502, 0
    %v3508 = vsel %vm3208, %v3503, 0
    %3510 = vmatpush.msra.mxu0 0.0
    %3511 = vmatpush.msra.mxu0 0.0
    %3512 = vmatpush.msra.mxu0 0.0
    %3513 = vmatpush.msra.mxu0 0.0
    %3514 = vmatpush.msra.mxu0 0.0
    %3515 = vmatpush.msra.mxu0 0.0
    %3516 = vmatpush.msra.mxu0 0.0
    %3517 = vmatpush.msra.mxu0 0.0
    %3518 = vmatpush.msra.mxu0 %v3181
    %3519 = vmatpush.msra.mxu0 %v3180
    %3520 = vmatpush.msra.mxu0 %v3179
    %3521 = vmatpush.msra.mxu0 %v3178
    %3522 = vmatpush.msra.mxu0 %v3177
    %3523 = vmatpush.msra.mxu0 %v3176
    %3524 = vmatpush.msra.mxu0 %v3175
    %3525 = vmatpush.msra.mxu0 %v3174
    %3526 = vmatmul.f32.gmra.mxu0 %v3505
    %v3527 = vpop.f32.mrf.mxu0
    %v3528 = vadd.f32 0.0, %v3527
    %3529 = vmatmul.f32.gmra.mxu0 %v3508
    %v3530 = vpop.f32.mrf.mxu0
    %v3531 = vadd.f32 0.0, %v3530
    %3532 = vdwg.mxu0
    %s3533 = scalar_lea.vmem [#allocation7], 512
    %v3534 = vld [vmem:[%s3533] sm:$0xff]
    %v3535 = vld [vmem:[%s3533 + $0x8] sm:$0xff]
    %v3536 = vld [vmem:[%s3533 + $0x10] sm:$0xff]
    %v3537 = vld [vmem:[%s3533 + $0x18] sm:$0xff]
    %v3538 = vld [vmem:[%s3533 + $0x20] sm:$0xff]
    %v3539 = vld [vmem:[%s3533 + $0x28] sm:$0xff]
    %v3540 = vld [vmem:[%s3533 + $0x30] sm:$0xff]
    %v3541 = vld [vmem:[%s3533 + $0x38] sm:$0xff]
    %v3542 = vld [vmem:[%s3533 + $0x40] sm:$0xff]
    %v3543 = vld [vmem:[%s3533 + $0x48] sm:$0xff]
    %v3544 = vld [vmem:[%s3533 + $0x50] sm:$0xff]
    %v3545 = vld [vmem:[%s3533 + $0x58] sm:$0xff]
    %v3546 = vld [vmem:[%s3533 + $0x60] sm:$0xff]
    %v3547 = vld [vmem:[%s3533 + $0x68] sm:$0xff]
    %v3548 = vld [vmem:[%s3533 + $0x70] sm:$0xff]
    %v3549 = vld [vmem:[%s3533 + $0x78] sm:$0xff]
    %3550 = vmatpush.msra.mxu0 %v3549
    %3551 = vmatpush.msra.mxu0 %v3548
    %3552 = vmatpush.msra.mxu0 %v3547
    %3553 = vmatpush.msra.mxu0 %v3546
    %3554 = vmatpush.msra.mxu0 %v3545
    %3555 = vmatpush.msra.mxu0 %v3544
    %3556 = vmatpush.msra.mxu0 %v3543
    %3557 = vmatpush.msra.mxu0 %v3542
    %3558 = vmatpush.msra.mxu0 %v3541
    %3559 = vmatpush.msra.mxu0 %v3540
    %3560 = vmatpush.msra.mxu0 %v3539
    %3561 = vmatpush.msra.mxu0 %v3538
    %3562 = vmatpush.msra.mxu0 %v3537
    %3563 = vmatpush.msra.mxu0 %v3536
    %3564 = vmatpush.msra.mxu0 %v3535
    %3565 = vmatpush.msra.mxu0 %v3534
    %3566 = vmatmul.f32.gmra.mxu0 %v3528
    %v3567 = vpop.f32.mrf.mxu0
    %v3568 = vadd.f32 0.0, %v3567
    %3569 = vmatmul.f32.gmra.mxu0 %v3531
    %v3570 = vpop.f32.mrf.mxu0
    %v3571 = vadd.f32 0.0, %v3570
    %3572 = vdwg.mxu0
    %v3573 = vadd.f32 %v3498, %v3568
    %v3574 = vadd.f32 %v3499, %v3571
    %v3575 = vld [vmem:[%s6 + $0x28] sm:$0xf]
    %v3576 = vld [vmem:[%s6 + $0x2c] sm:$0xf]
    %v3577 = vunpack.c.l.bf16 %v3575
    %v3578 = vunpack.c.l.bf16 %v3576
    %v3580 = vsel %vm3208, %v3577, 0
    %v3583 = vsel %vm3208, %v3578, 0
    %3585 = vmatpush.msra.mxu0 0.0
    %3586 = vmatpush.msra.mxu0 0.0
    %3587 = vmatpush.msra.mxu0 0.0
    %3588 = vmatpush.msra.mxu0 0.0
    %3589 = vmatpush.msra.mxu0 0.0
    %3590 = vmatpush.msra.mxu0 0.0
    %3591 = vmatpush.msra.mxu0 0.0
    %3592 = vmatpush.msra.mxu0 0.0
    %3593 = vmatpush.msra.mxu0 %v3181
    %3594 = vmatpush.msra.mxu0 %v3180
    %3595 = vmatpush.msra.mxu0 %v3179
    %3596 = vmatpush.msra.mxu0 %v3178
    %3597 = vmatpush.msra.mxu0 %v3177
    %3598 = vmatpush.msra.mxu0 %v3176
    %3599 = vmatpush.msra.mxu0 %v3175
    %3600 = vmatpush.msra.mxu0 %v3174
    %3601 = vmatmul.f32.gmra.mxu0 %v3580
    %v3602 = vpop.f32.mrf.mxu0
    %v3603 = vadd.f32 0.0, %v3602
    %3604 = vmatmul.f32.gmra.mxu0 %v3583
    %v3605 = vpop.f32.mrf.mxu0
    %v3606 = vadd.f32 0.0, %v3605
    %3607 = vdwg.mxu0
    %s3608 = scalar_lea.vmem [#allocation7], 640
    %v3609 = vld [vmem:[%s3608] sm:$0xff]
    %v3610 = vld [vmem:[%s3608 + $0x8] sm:$0xff]
    %v3611 = vld [vmem:[%s3608 + $0x10] sm:$0xff]
    %v3612 = vld [vmem:[%s3608 + $0x18] sm:$0xff]
    %v3613 = vld [vmem:[%s3608 + $0x20] sm:$0xff]
    %v3614 = vld [vmem:[%s3608 + $0x28] sm:$0xff]
    %v3615 = vld [vmem:[%s3608 + $0x30] sm:$0xff]
    %v3616 = vld [vmem:[%s3608 + $0x38] sm:$0xff]
    %v3617 = vld [vmem:[%s3608 + $0x40] sm:$0xff]
    %v3618 = vld [vmem:[%s3608 + $0x48] sm:$0xff]
    %v3619 = vld [vmem:[%s3608 + $0x50] sm:$0xff]
    %v3620 = vld [vmem:[%s3608 + $0x58] sm:$0xff]
    %v3621 = vld [vmem:[%s3608 + $0x60] sm:$0xff]
    %v3622 = vld [vmem:[%s3608 + $0x68] sm:$0xff]
    %v3623 = vld [vmem:[%s3608 + $0x70] sm:$0xff]
    %v3624 = vld [vmem:[%s3608 + $0x78] sm:$0xff]
    %3625 = vmatpush.msra.mxu0 %v3624
    %3626 = vmatpush.msra.mxu0 %v3623
    %3627 = vmatpush.msra.mxu0 %v3622
    %3628 = vmatpush.msra.mxu0 %v3621
    %3629 = vmatpush.msra.mxu0 %v3620
    %3630 = vmatpush.msra.mxu0 %v3619
    %3631 = vmatpush.msra.mxu0 %v3618
    %3632 = vmatpush.msra.mxu0 %v3617
    %3633 = vmatpush.msra.mxu0 %v3616
    %3634 = vmatpush.msra.mxu0 %v3615
    %3635 = vmatpush.msra.mxu0 %v3614
    %3636 = vmatpush.msra.mxu0 %v3613
    %3637 = vmatpush.msra.mxu0 %v3612
    %3638 = vmatpush.msra.mxu0 %v3611
    %3639 = vmatpush.msra.mxu0 %v3610
    %3640 = vmatpush.msra.mxu0 %v3609
    %3641 = vmatmul.f32.gmra.mxu0 %v3603
    %v3642 = vpop.f32.mrf.mxu0
    %v3643 = vadd.f32 0.0, %v3642
    %3644 = vmatmul.f32.gmra.mxu0 %v3606
    %v3645 = vpop.f32.mrf.mxu0
    %v3646 = vadd.f32 0.0, %v3645
    %3647 = vdwg.mxu0
    %v3648 = vadd.f32 %v3573, %v3643
    %v3649 = vadd.f32 %v3574, %v3646
    %v3650 = vld [vmem:[%s6 + $0x30] sm:$0xf]
    %v3651 = vld [vmem:[%s6 + $0x34] sm:$0xf]
    %v3652 = vunpack.c.l.bf16 %v3650
    %v3653 = vunpack.c.l.bf16 %v3651
    %v3655 = vsel %vm3208, %v3652, 0
    %v3658 = vsel %vm3208, %v3653, 0
    %3660 = vmatpush.msra.mxu0 0.0
    %3661 = vmatpush.msra.mxu0 0.0
    %3662 = vmatpush.msra.mxu0 0.0
    %3663 = vmatpush.msra.mxu0 0.0
    %3664 = vmatpush.msra.mxu0 0.0
    %3665 = vmatpush.msra.mxu0 0.0
    %3666 = vmatpush.msra.mxu0 0.0
    %3667 = vmatpush.msra.mxu0 0.0
    %3668 = vmatpush.msra.mxu0 %v3181
    %3669 = vmatpush.msra.mxu0 %v3180
    %3670 = vmatpush.msra.mxu0 %v3179
    %3671 = vmatpush.msra.mxu0 %v3178
    %3672 = vmatpush.msra.mxu0 %v3177
    %3673 = vmatpush.msra.mxu0 %v3176
    %3674 = vmatpush.msra.mxu0 %v3175
    %3675 = vmatpush.msra.mxu0 %v3174
    %3676 = vmatmul.f32.gmra.mxu0 %v3655
    %v3677 = vpop.f32.mrf.mxu0
    %v3678 = vadd.f32 0.0, %v3677
    %3679 = vmatmul.f32.gmra.mxu0 %v3658
    %v3680 = vpop.f32.mrf.mxu0
    %v3681 = vadd.f32 0.0, %v3680
    %3682 = vdwg.mxu0
    %s3683 = scalar_lea.vmem [#allocation7], 768
    %v3684 = vld [vmem:[%s3683] sm:$0xff]
    %v3685 = vld [vmem:[%s3683 + $0x8] sm:$0xff]
    %v3686 = vld [vmem:[%s3683 + $0x10] sm:$0xff]
    %v3687 = vld [vmem:[%s3683 + $0x18] sm:$0xff]
    %v3688 = vld [vmem:[%s3683 + $0x20] sm:$0xff]
    %v3689 = vld [vmem:[%s3683 + $0x28] sm:$0xff]
    %v3690 = vld [vmem:[%s3683 + $0x30] sm:$0xff]
    %v3691 = vld [vmem:[%s3683 + $0x38] sm:$0xff]
    %v3692 = vld [vmem:[%s3683 + $0x40] sm:$0xff]
    %v3693 = vld [vmem:[%s3683 + $0x48] sm:$0xff]
    %v3694 = vld [vmem:[%s3683 + $0x50] sm:$0xff]
    %v3695 = vld [vmem:[%s3683 + $0x58] sm:$0xff]
    %v3696 = vld [vmem:[%s3683 + $0x60] sm:$0xff]
    %v3697 = vld [vmem:[%s3683 + $0x68] sm:$0xff]
    %v3698 = vld [vmem:[%s3683 + $0x70] sm:$0xff]
    %v3699 = vld [vmem:[%s3683 + $0x78] sm:$0xff]
    %3700 = vmatpush.msra.mxu0 %v3699
    %3701 = vmatpush.msra.mxu0 %v3698
    %3702 = vmatpush.msra.mxu0 %v3697
    %3703 = vmatpush.msra.mxu0 %v3696
    %3704 = vmatpush.msra.mxu0 %v3695
    %3705 = vmatpush.msra.mxu0 %v3694
    %3706 = vmatpush.msra.mxu0 %v3693
    %3707 = vmatpush.msra.mxu0 %v3692
    %3708 = vmatpush.msra.mxu0 %v3691
    %3709 = vmatpush.msra.mxu0 %v3690
    %3710 = vmatpush.msra.mxu0 %v3689
    %3711 = vmatpush.msra.mxu0 %v3688
    %3712 = vmatpush.msra.mxu0 %v3687
    %3713 = vmatpush.msra.mxu0 %v3686
    %3714 = vmatpush.msra.mxu0 %v3685
    %3715 = vmatpush.msra.mxu0 %v3684
    %3716 = vmatmul.f32.gmra.mxu0 %v3678
    %v3717 = vpop.f32.mrf.mxu0
    %v3718 = vadd.f32 0.0, %v3717
    %3719 = vmatmul.f32.gmra.mxu0 %v3681
    %v3720 = vpop.f32.mrf.mxu0
    %v3721 = vadd.f32 0.0, %v3720
    %3722 = vdwg.mxu0
    %v3723 = vadd.f32 %v3648, %v3718
    %v3724 = vadd.f32 %v3649, %v3721
    %v3725 = vld [vmem:[%s6 + $0x38] sm:$0xf]
    %v3726 = vld [vmem:[%s6 + $0x3c] sm:$0xf]
    %v3727 = vunpack.c.l.bf16 %v3725
    %v3728 = vunpack.c.l.bf16 %v3726
    %v3730 = vsel %vm3208, %v3727, 0
    %v3733 = vsel %vm3208, %v3728, 0
    %3735 = vmatpush.msra.mxu0 0.0
    %3736 = vmatpush.msra.mxu0 0.0
    %3737 = vmatpush.msra.mxu0 0.0
    %3738 = vmatpush.msra.mxu0 0.0
    %3739 = vmatpush.msra.mxu0 0.0
    %3740 = vmatpush.msra.mxu0 0.0
    %3741 = vmatpush.msra.mxu0 0.0
    %3742 = vmatpush.msra.mxu0 0.0
    %3743 = vmatpush.msra.mxu0 %v3181
    %3744 = vmatpush.msra.mxu0 %v3180
    %3745 = vmatpush.msra.mxu0 %v3179
    %3746 = vmatpush.msra.mxu0 %v3178
    %3747 = vmatpush.msra.mxu0 %v3177
    %3748 = vmatpush.msra.mxu0 %v3176
    %3749 = vmatpush.msra.mxu0 %v3175
    %3750 = vmatpush.msra.mxu0 %v3174
    %3751 = vmatmul.f32.gmra.mxu0 %v3730
    %v3752 = vpop.f32.mrf.mxu0
    %v3753 = vadd.f32 0.0, %v3752
    %3754 = vmatmul.f32.gmra.mxu0 %v3733
    %v3755 = vpop.f32.mrf.mxu0
    %v3756 = vadd.f32 0.0, %v3755
    %3757 = vdwg.mxu0
    %s3758 = scalar_lea.vmem [#allocation7], 896
    %v3759 = vld [vmem:[%s3758] sm:$0xff]
    %v3760 = vld [vmem:[%s3758 + $0x8] sm:$0xff]
    %v3761 = vld [vmem:[%s3758 + $0x10] sm:$0xff]
    %v3762 = vld [vmem:[%s3758 + $0x18] sm:$0xff]
    %v3763 = vld [vmem:[%s3758 + $0x20] sm:$0xff]
    %v3764 = vld [vmem:[%s3758 + $0x28] sm:$0xff]
    %v3765 = vld [vmem:[%s3758 + $0x30] sm:$0xff]
    %v3766 = vld [vmem:[%s3758 + $0x38] sm:$0xff]
    %v3767 = vld [vmem:[%s3758 + $0x40] sm:$0xff]
    %v3768 = vld [vmem:[%s3758 + $0x48] sm:$0xff]
    %v3769 = vld [vmem:[%s3758 + $0x50] sm:$0xff]
    %v3770 = vld [vmem:[%s3758 + $0x58] sm:$0xff]
    %v3771 = vld [vmem:[%s3758 + $0x60] sm:$0xff]
    %v3772 = vld [vmem:[%s3758 + $0x68] sm:$0xff]
    %v3773 = vld [vmem:[%s3758 + $0x70] sm:$0xff]
    %v3774 = vld [vmem:[%s3758 + $0x78] sm:$0xff]
    %3775 = vmatpush.msra.mxu0 %v3774
    %3776 = vmatpush.msra.mxu0 %v3773
    %3777 = vmatpush.msra.mxu0 %v3772
    %3778 = vmatpush.msra.mxu0 %v3771
    %3779 = vmatpush.msra.mxu0 %v3770
    %3780 = vmatpush.msra.mxu0 %v3769
    %3781 = vmatpush.msra.mxu0 %v3768
    %3782 = vmatpush.msra.mxu0 %v3767
    %3783 = vmatpush.msra.mxu0 %v3766
    %3784 = vmatpush.msra.mxu0 %v3765
    %3785 = vmatpush.msra.mxu0 %v3764
    %3786 = vmatpush.msra.mxu0 %v3763
    %3787 = vmatpush.msra.mxu0 %v3762
    %3788 = vmatpush.msra.mxu0 %v3761
    %3789 = vmatpush.msra.mxu0 %v3760
    %3790 = vmatpush.msra.mxu0 %v3759
    %3791 = vmatmul.f32.gmra.mxu0 %v3753
    %v3792 = vpop.f32.mrf.mxu0
    %v3793 = vadd.f32 0.0, %v3792
    %3794 = vmatmul.f32.gmra.mxu0 %v3756
    %v3795 = vpop.f32.mrf.mxu0
    %v3796 = vadd.f32 0.0, %v3795
    %3797 = vdwg.mxu0
    %v3798 = vadd.f32 %v3723, %v3793
    %v3799 = vadd.f32 %v3724, %v3796
    %v3800 = vld [vmem:[%s6 + $0x40] sm:$0xf]
    %v3801 = vld [vmem:[%s6 + $0x44] sm:$0xf]
    %v3802 = vunpack.c.l.bf16 %v3800
    %v3803 = vunpack.c.l.bf16 %v3801
    %v3805 = vsel %vm3208, %v3802, 0
    %v3808 = vsel %vm3208, %v3803, 0
    %3810 = vmatpush.msra.mxu0 0.0
    %3811 = vmatpush.msra.mxu0 0.0
    %3812 = vmatpush.msra.mxu0 0.0
    %3813 = vmatpush.msra.mxu0 0.0
    %3814 = vmatpush.msra.mxu0 0.0
    %3815 = vmatpush.msra.mxu0 0.0
    %3816 = vmatpush.msra.mxu0 0.0
    %3817 = vmatpush.msra.mxu0 0.0
    %3818 = vmatpush.msra.mxu0 %v3181
    %3819 = vmatpush.msra.mxu0 %v3180
    %3820 = vmatpush.msra.mxu0 %v3179
    %3821 = vmatpush.msra.mxu0 %v3178
    %3822 = vmatpush.msra.mxu0 %v3177
    %3823 = vmatpush.msra.mxu0 %v3176
    %3824 = vmatpush.msra.mxu0 %v3175
    %3825 = vmatpush.msra.mxu0 %v3174
    %3826 = vmatmul.f32.gmra.mxu0 %v3805
    %v3827 = vpop.f32.mrf.mxu0
    %v3828 = vadd.f32 0.0, %v3827
    %3829 = vmatmul.f32.gmra.mxu0 %v3808
    %v3830 = vpop.f32.mrf.mxu0
    %v3831 = vadd.f32 0.0, %v3830
    %3832 = vdwg.mxu0
    %s3833 = scalar_lea.vmem [#allocation7], 1024
    %v3834 = vld [vmem:[%s3833] sm:$0xff]
    %v3835 = vld [vmem:[%s3833 + $0x8] sm:$0xff]
    %v3836 = vld [vmem:[%s3833 + $0x10] sm:$0xff]
    %v3837 = vld [vmem:[%s3833 + $0x18] sm:$0xff]
    %v3838 = vld [vmem:[%s3833 + $0x20] sm:$0xff]
    %v3839 = vld [vmem:[%s3833 + $0x28] sm:$0xff]
    %v3840 = vld [vmem:[%s3833 + $0x30] sm:$0xff]
    %v3841 = vld [vmem:[%s3833 + $0x38] sm:$0xff]
    %v3842 = vld [vmem:[%s3833 + $0x40] sm:$0xff]
    %v3843 = vld [vmem:[%s3833 + $0x48] sm:$0xff]
    %v3844 = vld [vmem:[%s3833 + $0x50] sm:$0xff]
    %v3845 = vld [vmem:[%s3833 + $0x58] sm:$0xff]
    %v3846 = vld [vmem:[%s3833 + $0x60] sm:$0xff]
    %v3847 = vld [vmem:[%s3833 + $0x68] sm:$0xff]
    %v3848 = vld [vmem:[%s3833 + $0x70] sm:$0xff]
    %v3849 = vld [vmem:[%s3833 + $0x78] sm:$0xff]
    %3850 = vmatpush.msra.mxu0 %v3849
    %3851 = vmatpush.msra.mxu0 %v3848
    %3852 = vmatpush.msra.mxu0 %v3847
    %3853 = vmatpush.msra.mxu0 %v3846
    %3854 = vmatpush.msra.mxu0 %v3845
    %3855 = vmatpush.msra.mxu0 %v3844
    %3856 = vmatpush.msra.mxu0 %v3843
    %3857 = vmatpush.msra.mxu0 %v3842
    %3858 = vmatpush.msra.mxu0 %v3841
    %3859 = vmatpush.msra.mxu0 %v3840
    %3860 = vmatpush.msra.mxu0 %v3839
    %3861 = vmatpush.msra.mxu0 %v3838
    %3862 = vmatpush.msra.mxu0 %v3837
    %3863 = vmatpush.msra.mxu0 %v3836
    %3864 = vmatpush.msra.mxu0 %v3835
    %3865 = vmatpush.msra.mxu0 %v3834
    %3866 = vmatmul.f32.gmra.mxu0 %v3828
    %v3867 = vpop.f32.mrf.mxu0
    %v3868 = vadd.f32 0.0, %v3867
    %3869 = vmatmul.f32.gmra.mxu0 %v3831
    %v3870 = vpop.f32.mrf.mxu0
    %v3871 = vadd.f32 0.0, %v3870
    %3872 = vdwg.mxu0
    %v3873 = vadd.f32 %v3798, %v3868
    %v3874 = vadd.f32 %v3799, %v3871
    %v3875 = vld [vmem:[%s6 + $0x48] sm:$0xf]
    %v3876 = vld [vmem:[%s6 + $0x4c] sm:$0xf]
    %v3877 = vunpack.c.l.bf16 %v3875
    %v3878 = vunpack.c.l.bf16 %v3876
    %v3880 = vsel %vm3208, %v3877, 0
    %v3883 = vsel %vm3208, %v3878, 0
    %3885 = vmatpush.msra.mxu0 0.0
    %3886 = vmatpush.msra.mxu0 0.0
    %3887 = vmatpush.msra.mxu0 0.0
    %3888 = vmatpush.msra.mxu0 0.0
    %3889 = vmatpush.msra.mxu0 0.0
    %3890 = vmatpush.msra.mxu0 0.0
    %3891 = vmatpush.msra.mxu0 0.0
    %3892 = vmatpush.msra.mxu0 0.0
    %3893 = vmatpush.msra.mxu0 %v3181
    %3894 = vmatpush.msra.mxu0 %v3180
    %3895 = vmatpush.msra.mxu0 %v3179
    %3896 = vmatpush.msra.mxu0 %v3178
    %3897 = vmatpush.msra.mxu0 %v3177
    %3898 = vmatpush.msra.mxu0 %v3176
    %3899 = vmatpush.msra.mxu0 %v3175
    %3900 = vmatpush.msra.mxu0 %v3174
    %3901 = vmatmul.f32.gmra.mxu0 %v3880
    %v3902 = vpop.f32.mrf.mxu0
    %v3903 = vadd.f32 0.0, %v3902
    %3904 = vmatmul.f32.gmra.mxu0 %v3883
    %v3905 = vpop.f32.mrf.mxu0
    %v3906 = vadd.f32 0.0, %v3905
    %3907 = vdwg.mxu0
    %s3908 = scalar_lea.vmem [#allocation7], 1152
    %v3909 = vld [vmem:[%s3908] sm:$0xff]
    %v3910 = vld [vmem:[%s3908 + $0x8] sm:$0xff]
    %v3911 = vld [vmem:[%s3908 + $0x10] sm:$0xff]
    %v3912 = vld [vmem:[%s3908 + $0x18] sm:$0xff]
    %v3913 = vld [vmem:[%s3908 + $0x20] sm:$0xff]
    %v3914 = vld [vmem:[%s3908 + $0x28] sm:$0xff]
    %v3915 = vld [vmem:[%s3908 + $0x30] sm:$0xff]
    %v3916 = vld [vmem:[%s3908 + $0x38] sm:$0xff]
    %v3917 = vld [vmem:[%s3908 + $0x40] sm:$0xff]
    %v3918 = vld [vmem:[%s3908 + $0x48] sm:$0xff]
    %v3919 = vld [vmem:[%s3908 + $0x50] sm:$0xff]
    %v3920 = vld [vmem:[%s3908 + $0x58] sm:$0xff]
    %v3921 = vld [vmem:[%s3908 + $0x60] sm:$0xff]
    %v3922 = vld [vmem:[%s3908 + $0x68] sm:$0xff]
    %v3923 = vld [vmem:[%s3908 + $0x70] sm:$0xff]
    %v3924 = vld [vmem:[%s3908 + $0x78] sm:$0xff]
    %3925 = vmatpush.msra.mxu0 %v3924
    %3926 = vmatpush.msra.mxu0 %v3923
    %3927 = vmatpush.msra.mxu0 %v3922
    %3928 = vmatpush.msra.mxu0 %v3921
    %3929 = vmatpush.msra.mxu0 %v3920
    %3930 = vmatpush.msra.mxu0 %v3919
    %3931 = vmatpush.msra.mxu0 %v3918
    %3932 = vmatpush.msra.mxu0 %v3917
    %3933 = vmatpush.msra.mxu0 %v3916
    %3934 = vmatpush.msra.mxu0 %v3915
    %3935 = vmatpush.msra.mxu0 %v3914
    %3936 = vmatpush.msra.mxu0 %v3913
    %3937 = vmatpush.msra.mxu0 %v3912
    %3938 = vmatpush.msra.mxu0 %v3911
    %3939 = vmatpush.msra.mxu0 %v3910
    %3940 = vmatpush.msra.mxu0 %v3909
    %3941 = vmatmul.f32.gmra.mxu0 %v3903
    %v3942 = vpop.f32.mrf.mxu0
    %v3943 = vadd.f32 0.0, %v3942
    %3944 = vmatmul.f32.gmra.mxu0 %v3906
    %v3945 = vpop.f32.mrf.mxu0
    %v3946 = vadd.f32 0.0, %v3945
    %3947 = vdwg.mxu0
    %v3948 = vadd.f32 %v3873, %v3943
    %v3949 = vadd.f32 %v3874, %v3946
    %v3950 = vld [vmem:[%s6 + $0x50] sm:$0xf]
    %v3951 = vld [vmem:[%s6 + $0x54] sm:$0xf]
    %v3952 = vunpack.c.l.bf16 %v3950
    %v3953 = vunpack.c.l.bf16 %v3951
    %v3955 = vsel %vm3208, %v3952, 0
    %v3958 = vsel %vm3208, %v3953, 0
    %3960 = vmatpush.msra.mxu0 0.0
    %3961 = vmatpush.msra.mxu0 0.0
    %3962 = vmatpush.msra.mxu0 0.0
    %3963 = vmatpush.msra.mxu0 0.0
    %3964 = vmatpush.msra.mxu0 0.0
    %3965 = vmatpush.msra.mxu0 0.0
    %3966 = vmatpush.msra.mxu0 0.0
    %3967 = vmatpush.msra.mxu0 0.0
    %3968 = vmatpush.msra.mxu0 %v3181
    %3969 = vmatpush.msra.mxu0 %v3180
    %3970 = vmatpush.msra.mxu0 %v3179
    %3971 = vmatpush.msra.mxu0 %v3178
    %3972 = vmatpush.msra.mxu0 %v3177
    %3973 = vmatpush.msra.mxu0 %v3176
    %3974 = vmatpush.msra.mxu0 %v3175
    %3975 = vmatpush.msra.mxu0 %v3174
    %3976 = vmatmul.f32.gmra.mxu0 %v3955
    %v3977 = vpop.f32.mrf.mxu0
    %v3978 = vadd.f32 0.0, %v3977
    %3979 = vmatmul.f32.gmra.mxu0 %v3958
    %v3980 = vpop.f32.mrf.mxu0
    %v3981 = vadd.f32 0.0, %v3980
    %3982 = vdwg.mxu0
    %s3983 = scalar_lea.vmem [#allocation7], 1280
    %v3984 = vld [vmem:[%s3983] sm:$0xff]
    %v3985 = vld [vmem:[%s3983 + $0x8] sm:$0xff]
    %v3986 = vld [vmem:[%s3983 + $0x10] sm:$0xff]
    %v3987 = vld [vmem:[%s3983 + $0x18] sm:$0xff]
    %v3988 = vld [vmem:[%s3983 + $0x20] sm:$0xff]
    %v3989 = vld [vmem:[%s3983 + $0x28] sm:$0xff]
    %v3990 = vld [vmem:[%s3983 + $0x30] sm:$0xff]
    %v3991 = vld [vmem:[%s3983 + $0x38] sm:$0xff]
    %v3992 = vld [vmem:[%s3983 + $0x40] sm:$0xff]
    %v3993 = vld [vmem:[%s3983 + $0x48] sm:$0xff]
    %v3994 = vld [vmem:[%s3983 + $0x50] sm:$0xff]
    %v3995 = vld [vmem:[%s3983 + $0x58] sm:$0xff]
    %v3996 = vld [vmem:[%s3983 + $0x60] sm:$0xff]
    %v3997 = vld [vmem:[%s3983 + $0x68] sm:$0xff]
    %v3998 = vld [vmem:[%s3983 + $0x70] sm:$0xff]
    %v3999 = vld [vmem:[%s3983 + $0x78] sm:$0xff]
    %4000 = vmatpush.msra.mxu0 %v3999
    %4001 = vmatpush.msra.mxu0 %v3998
    %4002 = vmatpush.msra.mxu0 %v3997
    %4003 = vmatpush.msra.mxu0 %v3996
    %4004 = vmatpush.msra.mxu0 %v3995
    %4005 = vmatpush.msra.mxu0 %v3994
    %4006 = vmatpush.msra.mxu0 %v3993
    %4007 = vmatpush.msra.mxu0 %v3992
    %4008 = vmatpush.msra.mxu0 %v3991
    %4009 = vmatpush.msra.mxu0 %v3990
    %4010 = vmatpush.msra.mxu0 %v3989
    %4011 = vmatpush.msra.mxu0 %v3988
    %4012 = vmatpush.msra.mxu0 %v3987
    %4013 = vmatpush.msra.mxu0 %v3986
    %4014 = vmatpush.msra.mxu0 %v3985
    %4015 = vmatpush.msra.mxu0 %v3984
    %4016 = vmatmul.f32.gmra.mxu0 %v3978
    %v4017 = vpop.f32.mrf.mxu0
    %v4018 = vadd.f32 0.0, %v4017
    %4019 = vmatmul.f32.gmra.mxu0 %v3981
    %v4020 = vpop.f32.mrf.mxu0
    %v4021 = vadd.f32 0.0, %v4020
    %4022 = vdwg.mxu0
    %v4023 = vadd.f32 %v3948, %v4018
    %v4024 = vadd.f32 %v3949, %v4021
    %v4025 = vld [vmem:[%s6 + $0x58] sm:$0xf]
    %v4026 = vld [vmem:[%s6 + $0x5c] sm:$0xf]
    %v4027 = vunpack.c.l.bf16 %v4025
    %v4028 = vunpack.c.l.bf16 %v4026
    %v4030 = vsel %vm3208, %v4027, 0
    %v4033 = vsel %vm3208, %v4028, 0
    %4035 = vmatpush.msra.mxu0 0.0
    %4036 = vmatpush.msra.mxu0 0.0
    %4037 = vmatpush.msra.mxu0 0.0
    %4038 = vmatpush.msra.mxu0 0.0
    %4039 = vmatpush.msra.mxu0 0.0
    %4040 = vmatpush.msra.mxu0 0.0
    %4041 = vmatpush.msra.mxu0 0.0
    %4042 = vmatpush.msra.mxu0 0.0
    %4043 = vmatpush.msra.mxu0 %v3181
    %4044 = vmatpush.msra.mxu0 %v3180
    %4045 = vmatpush.msra.mxu0 %v3179
    %4046 = vmatpush.msra.mxu0 %v3178
    %4047 = vmatpush.msra.mxu0 %v3177
    %4048 = vmatpush.msra.mxu0 %v3176
    %4049 = vmatpush.msra.mxu0 %v3175
    %4050 = vmatpush.msra.mxu0 %v3174
    %4051 = vmatmul.f32.gmra.mxu0 %v4030
    %v4052 = vpop.f32.mrf.mxu0
    %v4053 = vadd.f32 0.0, %v4052
    %4054 = vmatmul.f32.gmra.mxu0 %v4033
    %v4055 = vpop.f32.mrf.mxu0
    %v4056 = vadd.f32 0.0, %v4055
    %4057 = vdwg.mxu0
    %s4058 = scalar_lea.vmem [#allocation7], 1408
    %v4059 = vld [vmem:[%s4058] sm:$0xff]
    %v4060 = vld [vmem:[%s4058 + $0x8] sm:$0xff]
    %v4061 = vld [vmem:[%s4058 + $0x10] sm:$0xff]
    %v4062 = vld [vmem:[%s4058 + $0x18] sm:$0xff]
    %v4063 = vld [vmem:[%s4058 + $0x20] sm:$0xff]
    %v4064 = vld [vmem:[%s4058 + $0x28] sm:$0xff]
    %v4065 = vld [vmem:[%s4058 + $0x30] sm:$0xff]
    %v4066 = vld [vmem:[%s4058 + $0x38] sm:$0xff]
    %v4067 = vld [vmem:[%s4058 + $0x40] sm:$0xff]
    %v4068 = vld [vmem:[%s4058 + $0x48] sm:$0xff]
    %v4069 = vld [vmem:[%s4058 + $0x50] sm:$0xff]
    %v4070 = vld [vmem:[%s4058 + $0x58] sm:$0xff]
    %v4071 = vld [vmem:[%s4058 + $0x60] sm:$0xff]
    %v4072 = vld [vmem:[%s4058 + $0x68] sm:$0xff]
    %v4073 = vld [vmem:[%s4058 + $0x70] sm:$0xff]
    %v4074 = vld [vmem:[%s4058 + $0x78] sm:$0xff]
    %4075 = vmatpush.msra.mxu0 %v4074
    %4076 = vmatpush.msra.mxu0 %v4073
    %4077 = vmatpush.msra.mxu0 %v4072
    %4078 = vmatpush.msra.mxu0 %v4071
    %4079 = vmatpush.msra.mxu0 %v4070
    %4080 = vmatpush.msra.mxu0 %v4069
    %4081 = vmatpush.msra.mxu0 %v4068
    %4082 = vmatpush.msra.mxu0 %v4067
    %4083 = vmatpush.msra.mxu0 %v4066
    %4084 = vmatpush.msra.mxu0 %v4065
    %4085 = vmatpush.msra.mxu0 %v4064
    %4086 = vmatpush.msra.mxu0 %v4063
    %4087 = vmatpush.msra.mxu0 %v4062
    %4088 = vmatpush.msra.mxu0 %v4061
    %4089 = vmatpush.msra.mxu0 %v4060
    %4090 = vmatpush.msra.mxu0 %v4059
    %4091 = vmatmul.f32.gmra.mxu0 %v4053
    %v4092 = vpop.f32.mrf.mxu0
    %v4093 = vadd.f32 0.0, %v4092
    %4094 = vmatmul.f32.gmra.mxu0 %v4056
    %v4095 = vpop.f32.mrf.mxu0
    %v4096 = vadd.f32 0.0, %v4095
    %4097 = vdwg.mxu0
    %v4098 = vadd.f32 %v4023, %v4093
    %v4099 = vadd.f32 %v4024, %v4096
    %v4100 = vld [vmem:[%s6 + $0x60] sm:$0xf]
    %v4101 = vld [vmem:[%s6 + $0x64] sm:$0xf]
    %v4102 = vunpack.c.l.bf16 %v4100
    %v4103 = vunpack.c.l.bf16 %v4101
    %v4105 = vsel %vm3208, %v4102, 0
    %v4108 = vsel %vm3208, %v4103, 0
    %4110 = vmatpush.msra.mxu0 0.0
    %4111 = vmatpush.msra.mxu0 0.0
    %4112 = vmatpush.msra.mxu0 0.0
    %4113 = vmatpush.msra.mxu0 0.0
    %4114 = vmatpush.msra.mxu0 0.0
    %4115 = vmatpush.msra.mxu0 0.0
    %4116 = vmatpush.msra.mxu0 0.0
    %4117 = vmatpush.msra.mxu0 0.0
    %4118 = vmatpush.msra.mxu0 %v3181
    %4119 = vmatpush.msra.mxu0 %v3180
    %4120 = vmatpush.msra.mxu0 %v3179
    %4121 = vmatpush.msra.mxu0 %v3178
    %4122 = vmatpush.msra.mxu0 %v3177
    %4123 = vmatpush.msra.mxu0 %v3176
    %4124 = vmatpush.msra.mxu0 %v3175
    %4125 = vmatpush.msra.mxu0 %v3174
    %4126 = vmatmul.f32.gmra.mxu0 %v4105
    %v4127 = vpop.f32.mrf.mxu0
    %v4128 = vadd.f32 0.0, %v4127
    %4129 = vmatmul.f32.gmra.mxu0 %v4108
    %v4130 = vpop.f32.mrf.mxu0
    %v4131 = vadd.f32 0.0, %v4130
    %4132 = vdwg.mxu0
    %s4133 = scalar_lea.vmem [#allocation7], 1536
    %v4134 = vld [vmem:[%s4133] sm:$0xff]
    %v4135 = vld [vmem:[%s4133 + $0x8] sm:$0xff]
    %v4136 = vld [vmem:[%s4133 + $0x10] sm:$0xff]
    %v4137 = vld [vmem:[%s4133 + $0x18] sm:$0xff]
    %v4138 = vld [vmem:[%s4133 + $0x20] sm:$0xff]
    %v4139 = vld [vmem:[%s4133 + $0x28] sm:$0xff]
    %v4140 = vld [vmem:[%s4133 + $0x30] sm:$0xff]
    %v4141 = vld [vmem:[%s4133 + $0x38] sm:$0xff]
    %v4142 = vld [vmem:[%s4133 + $0x40] sm:$0xff]
    %v4143 = vld [vmem:[%s4133 + $0x48] sm:$0xff]
    %v4144 = vld [vmem:[%s4133 + $0x50] sm:$0xff]
    %v4145 = vld [vmem:[%s4133 + $0x58] sm:$0xff]
    %v4146 = vld [vmem:[%s4133 + $0x60] sm:$0xff]
    %v4147 = vld [vmem:[%s4133 + $0x68] sm:$0xff]
    %v4148 = vld [vmem:[%s4133 + $0x70] sm:$0xff]
    %v4149 = vld [vmem:[%s4133 + $0x78] sm:$0xff]
    %4150 = vmatpush.msra.mxu0 %v4149
    %4151 = vmatpush.msra.mxu0 %v4148
    %4152 = vmatpush.msra.mxu0 %v4147
    %4153 = vmatpush.msra.mxu0 %v4146
    %4154 = vmatpush.msra.mxu0 %v4145
    %4155 = vmatpush.msra.mxu0 %v4144
    %4156 = vmatpush.msra.mxu0 %v4143
    %4157 = vmatpush.msra.mxu0 %v4142
    %4158 = vmatpush.msra.mxu0 %v4141
    %4159 = vmatpush.msra.mxu0 %v4140
    %4160 = vmatpush.msra.mxu0 %v4139
    %4161 = vmatpush.msra.mxu0 %v4138
    %4162 = vmatpush.msra.mxu0 %v4137
    %4163 = vmatpush.msra.mxu0 %v4136
    %4164 = vmatpush.msra.mxu0 %v4135
    %4165 = vmatpush.msra.mxu0 %v4134
    %4166 = vmatmul.f32.gmra.mxu0 %v4128
    %v4167 = vpop.f32.mrf.mxu0
    %v4168 = vadd.f32 0.0, %v4167
    %4169 = vmatmul.f32.gmra.mxu0 %v4131
    %v4170 = vpop.f32.mrf.mxu0
    %v4171 = vadd.f32 0.0, %v4170
    %4172 = vdwg.mxu0
    %v4173 = vadd.f32 %v4098, %v4168
    %v4174 = vadd.f32 %v4099, %v4171
    %v4175 = vld [vmem:[%s6 + $0x68] sm:$0xf]
    %v4176 = vld [vmem:[%s6 + $0x6c] sm:$0xf]
    %v4177 = vunpack.c.l.bf16 %v4175
    %v4178 = vunpack.c.l.bf16 %v4176
    %v4180 = vsel %vm3208, %v4177, 0
    %v4183 = vsel %vm3208, %v4178, 0
    %4185 = vmatpush.msra.mxu0 0.0
    %4186 = vmatpush.msra.mxu0 0.0
    %4187 = vmatpush.msra.mxu0 0.0
    %4188 = vmatpush.msra.mxu0 0.0
    %4189 = vmatpush.msra.mxu0 0.0
    %4190 = vmatpush.msra.mxu0 0.0
    %4191 = vmatpush.msra.mxu0 0.0
    %4192 = vmatpush.msra.mxu0 0.0
    %4193 = vmatpush.msra.mxu0 %v3181
    %4194 = vmatpush.msra.mxu0 %v3180
    %4195 = vmatpush.msra.mxu0 %v3179
    %4196 = vmatpush.msra.mxu0 %v3178
    %4197 = vmatpush.msra.mxu0 %v3177
    %4198 = vmatpush.msra.mxu0 %v3176
    %4199 = vmatpush.msra.mxu0 %v3175
    %4200 = vmatpush.msra.mxu0 %v3174
    %4201 = vmatmul.f32.gmra.mxu0 %v4180
    %v4202 = vpop.f32.mrf.mxu0
    %v4203 = vadd.f32 0.0, %v4202
    %4204 = vmatmul.f32.gmra.mxu0 %v4183
    %v4205 = vpop.f32.mrf.mxu0
    %v4206 = vadd.f32 0.0, %v4205
    %4207 = vdwg.mxu0
    %s4208 = scalar_lea.vmem [#allocation7], 1664
    %v4209 = vld [vmem:[%s4208] sm:$0xff]
    %v4210 = vld [vmem:[%s4208 + $0x8] sm:$0xff]
    %v4211 = vld [vmem:[%s4208 + $0x10] sm:$0xff]
    %v4212 = vld [vmem:[%s4208 + $0x18] sm:$0xff]
    %v4213 = vld [vmem:[%s4208 + $0x20] sm:$0xff]
    %v4214 = vld [vmem:[%s4208 + $0x28] sm:$0xff]
    %v4215 = vld [vmem:[%s4208 + $0x30] sm:$0xff]
    %v4216 = vld [vmem:[%s4208 + $0x38] sm:$0xff]
    %v4217 = vld [vmem:[%s4208 + $0x40] sm:$0xff]
    %v4218 = vld [vmem:[%s4208 + $0x48] sm:$0xff]
    %v4219 = vld [vmem:[%s4208 + $0x50] sm:$0xff]
    %v4220 = vld [vmem:[%s4208 + $0x58] sm:$0xff]
    %v4221 = vld [vmem:[%s4208 + $0x60] sm:$0xff]
    %v4222 = vld [vmem:[%s4208 + $0x68] sm:$0xff]
    %v4223 = vld [vmem:[%s4208 + $0x70] sm:$0xff]
    %v4224 = vld [vmem:[%s4208 + $0x78] sm:$0xff]
    %4225 = vmatpush.msra.mxu0 %v4224
    %4226 = vmatpush.msra.mxu0 %v4223
    %4227 = vmatpush.msra.mxu0 %v4222
    %4228 = vmatpush.msra.mxu0 %v4221
    %4229 = vmatpush.msra.mxu0 %v4220
    %4230 = vmatpush.msra.mxu0 %v4219
    %4231 = vmatpush.msra.mxu0 %v4218
    %4232 = vmatpush.msra.mxu0 %v4217
    %4233 = vmatpush.msra.mxu0 %v4216
    %4234 = vmatpush.msra.mxu0 %v4215
    %4235 = vmatpush.msra.mxu0 %v4214
    %4236 = vmatpush.msra.mxu0 %v4213
    %4237 = vmatpush.msra.mxu0 %v4212
    %4238 = vmatpush.msra.mxu0 %v4211
    %4239 = vmatpush.msra.mxu0 %v4210
    %4240 = vmatpush.msra.mxu0 %v4209
    %4241 = vmatmul.f32.gmra.mxu0 %v4203
    %v4242 = vpop.f32.mrf.mxu0
    %v4243 = vadd.f32 0.0, %v4242
    %4244 = vmatmul.f32.gmra.mxu0 %v4206
    %v4245 = vpop.f32.mrf.mxu0
    %v4246 = vadd.f32 0.0, %v4245
    %4247 = vdwg.mxu0
    %v4248 = vadd.f32 %v4173, %v4243
    %v4249 = vadd.f32 %v4174, %v4246
    %v4250 = vld [vmem:[%s6 + $0x70] sm:$0xf]
    %v4251 = vld [vmem:[%s6 + $0x74] sm:$0xf]
    %v4252 = vunpack.c.l.bf16 %v4250
    %v4253 = vunpack.c.l.bf16 %v4251
    %v4255 = vsel %vm3208, %v4252, 0
    %v4258 = vsel %vm3208, %v4253, 0
    %4260 = vmatpush.msra.mxu0 0.0
    %4261 = vmatpush.msra.mxu0 0.0
    %4262 = vmatpush.msra.mxu0 0.0
    %4263 = vmatpush.msra.mxu0 0.0
    %4264 = vmatpush.msra.mxu0 0.0
    %4265 = vmatpush.msra.mxu0 0.0
    %4266 = vmatpush.msra.mxu0 0.0
    %4267 = vmatpush.msra.mxu0 0.0
    %4268 = vmatpush.msra.mxu0 %v3181
    %4269 = vmatpush.msra.mxu0 %v3180
    %4270 = vmatpush.msra.mxu0 %v3179
    %4271 = vmatpush.msra.mxu0 %v3178
    %4272 = vmatpush.msra.mxu0 %v3177
    %4273 = vmatpush.msra.mxu0 %v3176
    %4274 = vmatpush.msra.mxu0 %v3175
    %4275 = vmatpush.msra.mxu0 %v3174
    %4276 = vmatmul.f32.gmra.mxu0 %v4255
    %v4277 = vpop.f32.mrf.mxu0
    %v4278 = vadd.f32 0.0, %v4277
    %4279 = vmatmul.f32.gmra.mxu0 %v4258
    %v4280 = vpop.f32.mrf.mxu0
    %v4281 = vadd.f32 0.0, %v4280
    %4282 = vdwg.mxu0
    %s4283 = scalar_lea.vmem [#allocation7], 1792
    %v4284 = vld [vmem:[%s4283] sm:$0xff]
    %v4285 = vld [vmem:[%s4283 + $0x8] sm:$0xff]
    %v4286 = vld [vmem:[%s4283 + $0x10] sm:$0xff]
    %v4287 = vld [vmem:[%s4283 + $0x18] sm:$0xff]
    %v4288 = vld [vmem:[%s4283 + $0x20] sm:$0xff]
    %v4289 = vld [vmem:[%s4283 + $0x28] sm:$0xff]
    %v4290 = vld [vmem:[%s4283 + $0x30] sm:$0xff]
    %v4291 = vld [vmem:[%s4283 + $0x38] sm:$0xff]
    %v4292 = vld [vmem:[%s4283 + $0x40] sm:$0xff]
    %v4293 = vld [vmem:[%s4283 + $0x48] sm:$0xff]
    %v4294 = vld [vmem:[%s4283 + $0x50] sm:$0xff]
    %v4295 = vld [vmem:[%s4283 + $0x58] sm:$0xff]
    %v4296 = vld [vmem:[%s4283 + $0x60] sm:$0xff]
    %v4297 = vld [vmem:[%s4283 + $0x68] sm:$0xff]
    %v4298 = vld [vmem:[%s4283 + $0x70] sm:$0xff]
    %v4299 = vld [vmem:[%s4283 + $0x78] sm:$0xff]
    %4300 = vmatpush.msra.mxu0 %v4299
    %4301 = vmatpush.msra.mxu0 %v4298
    %4302 = vmatpush.msra.mxu0 %v4297
    %4303 = vmatpush.msra.mxu0 %v4296
    %4304 = vmatpush.msra.mxu0 %v4295
    %4305 = vmatpush.msra.mxu0 %v4294
    %4306 = vmatpush.msra.mxu0 %v4293
    %4307 = vmatpush.msra.mxu0 %v4292
    %4308 = vmatpush.msra.mxu0 %v4291
    %4309 = vmatpush.msra.mxu0 %v4290
    %4310 = vmatpush.msra.mxu0 %v4289
    %4311 = vmatpush.msra.mxu0 %v4288
    %4312 = vmatpush.msra.mxu0 %v4287
    %4313 = vmatpush.msra.mxu0 %v4286
    %4314 = vmatpush.msra.mxu0 %v4285
    %4315 = vmatpush.msra.mxu0 %v4284
    %4316 = vmatmul.f32.gmra.mxu0 %v4278
    %v4317 = vpop.f32.mrf.mxu0
    %v4318 = vadd.f32 0.0, %v4317
    %4319 = vmatmul.f32.gmra.mxu0 %v4281
    %v4320 = vpop.f32.mrf.mxu0
    %v4321 = vadd.f32 0.0, %v4320
    %4322 = vdwg.mxu0
    %v4323 = vadd.f32 %v4248, %v4318
    %v4324 = vadd.f32 %v4249, %v4321
    %v4325 = vld [vmem:[%s6 + $0x78] sm:$0xf]
    %v4326 = vld [vmem:[%s6 + $0x7c] sm:$0xf]
    %v4327 = vunpack.c.l.bf16 %v4325
    %v4328 = vunpack.c.l.bf16 %v4326
    %v4330 = vsel %vm3208, %v4327, 0
    %v4333 = vsel %vm3208, %v4328, 0
    %4335 = vmatpush.msra.mxu0 0.0
    %4336 = vmatpush.msra.mxu0 0.0
    %4337 = vmatpush.msra.mxu0 0.0
    %4338 = vmatpush.msra.mxu0 0.0
    %4339 = vmatpush.msra.mxu0 0.0
    %4340 = vmatpush.msra.mxu0 0.0
    %4341 = vmatpush.msra.mxu0 0.0
    %4342 = vmatpush.msra.mxu0 0.0
    %4343 = vmatpush.msra.mxu0 %v3181
    %4344 = vmatpush.msra.mxu0 %v3180
    %4345 = vmatpush.msra.mxu0 %v3179
    %4346 = vmatpush.msra.mxu0 %v3178
    %4347 = vmatpush.msra.mxu0 %v3177
    %4348 = vmatpush.msra.mxu0 %v3176
    %4349 = vmatpush.msra.mxu0 %v3175
    %4350 = vmatpush.msra.mxu0 %v3174
    %4351 = vmatmul.f32.gmra.mxu0 %v4330
    %v4352 = vpop.f32.mrf.mxu0
    %v4353 = vadd.f32 0.0, %v4352
    %4354 = vmatmul.f32.gmra.mxu0 %v4333
    %v4355 = vpop.f32.mrf.mxu0
    %v4356 = vadd.f32 0.0, %v4355
    %4357 = vdwg.mxu0
    %s4358 = scalar_lea.vmem [#allocation7], 1920
    %v4359 = vld [vmem:[%s4358] sm:$0xff]
    %v4360 = vld [vmem:[%s4358 + $0x8] sm:$0xff]
    %v4361 = vld [vmem:[%s4358 + $0x10] sm:$0xff]
    %v4362 = vld [vmem:[%s4358 + $0x18] sm:$0xff]
    %v4363 = vld [vmem:[%s4358 + $0x20] sm:$0xff]
    %v4364 = vld [vmem:[%s4358 + $0x28] sm:$0xff]
    %v4365 = vld [vmem:[%s4358 + $0x30] sm:$0xff]
    %v4366 = vld [vmem:[%s4358 + $0x38] sm:$0xff]
    %v4367 = vld [vmem:[%s4358 + $0x40] sm:$0xff]
    %v4368 = vld [vmem:[%s4358 + $0x48] sm:$0xff]
    %v4369 = vld [vmem:[%s4358 + $0x50] sm:$0xff]
    %v4370 = vld [vmem:[%s4358 + $0x58] sm:$0xff]
    %v4371 = vld [vmem:[%s4358 + $0x60] sm:$0xff]
    %v4372 = vld [vmem:[%s4358 + $0x68] sm:$0xff]
    %v4373 = vld [vmem:[%s4358 + $0x70] sm:$0xff]
    %v4374 = vld [vmem:[%s4358 + $0x78] sm:$0xff]
    %4375 = vmatpush.msra.mxu0 %v4374
    %4376 = vmatpush.msra.mxu0 %v4373
    %4377 = vmatpush.msra.mxu0 %v4372
    %4378 = vmatpush.msra.mxu0 %v4371
    %4379 = vmatpush.msra.mxu0 %v4370
    %4380 = vmatpush.msra.mxu0 %v4369
    %4381 = vmatpush.msra.mxu0 %v4368
    %4382 = vmatpush.msra.mxu0 %v4367
    %4383 = vmatpush.msra.mxu0 %v4366
    %4384 = vmatpush.msra.mxu0 %v4365
    %4385 = vmatpush.msra.mxu0 %v4364
    %4386 = vmatpush.msra.mxu0 %v4363
    %4387 = vmatpush.msra.mxu0 %v4362
    %4388 = vmatpush.msra.mxu0 %v4361
    %4389 = vmatpush.msra.mxu0 %v4360
    %4390 = vmatpush.msra.mxu0 %v4359
    %4391 = vmatmul.f32.gmra.mxu0 %v4353
    %v4392 = vpop.f32.mrf.mxu0
    %v4393 = vadd.f32 0.0, %v4392
    %4394 = vmatmul.f32.gmra.mxu0 %v4356
    %v4395 = vpop.f32.mrf.mxu0
    %v4396 = vadd.f32 0.0, %v4395
    %4397 = vdwg.mxu0
    %v4398 = vadd.f32 %v4323, %v4393
    %v4399 = vadd.f32 %v4324, %v4396
    %v4400 = vld [vmem:[%s8] sm:$0x1]
    %v4402 = vperm.slane %v4400, 0
    %v4404 = vadd.f32 %v4398, %v4402
    %v4405 = vadd.f32 %v4399, %v4402
    %v4406 = vmax.f32 %v4404, 0.0
    %v4407 = vmax.f32 %v4405, 0.0
    %v4408 = vsub.f32 %v4407, %v4406
    %v4409 = vmul.f32 %v4408, %v4408
    %4410 = vadd.xlane.f32.xlu0 %v4409
    %v4411 = vpop.xlane.xlu0 %4410
    %v4412 = vrot.slane %v4411, 4
    %v4413 = vadd.f32 %v4411, %v4412
    %v4414 = vrot.slane %v4413, 2
    %v4415 = vadd.f32 %v4413, %v4414
    %v4416 = vrot.slane %v4415, 1
    %v4417 = vadd.f32 %v4415, %v4416
    %s4418 = vtos %v4417
    %v4419 = vstv %s4418
    %v4420 = vadd.f32 %v3203, %v4419
    %v4421 = vld [vmem:[%s9] sm:$0x3]
    %v4422 = vld [vmem:[%s10] sm:$0x3]
    %v4423 = vadd.f32 %v4422, 1.0
    %v4424 = vmul.f32 %v4421, %v4421
    %v4425 = vsub.f32 %v4423, %v4424
    %v4426 = vmul.f32 %v4422, 1.442695
    %v4427 = vpow.pop %v4426
    %v4428 = vsub.f32 %v4425, %v4427
    %vm4429 = vcmask 254976
    %v4430 = vsel %vm4429, %v4428, 0.0
    %4431 = vadd.xlane.f32.xlu0 %v4430
    %v4432 = vpop.xlane.xlu0 %4431
    %v4433 = vrot.slane %v4432, 4
    %v4434 = vadd.f32 %v4432, %v4433
    %v4435 = vrot.slane %v4434, 2
    %v4436 = vadd.f32 %v4434, %v4435
    %v4437 = vrot.slane %v4436, 1
    %v4438 = vadd.f32 %v4436, %v4437
    %s4439 = vtos %v4438
    %v4440 = vstv %s4439
    %v4441 = vmul.f32 %v4440, -0.5
    %v4442 = vadd.f32 %v4420, %v4441
    %vm4443 = vcmask 0
    %4444 = vst.msk [vmem:[#allocation8] sm:$0x1] %vm4443, %v4442
    // Predicated region
    $region58: #{tpu_custom_call.1} parent=1 // pred_check
      _
    $region59: #{tpu_custom_call.1} parent=1 // pred_check_branch
      %4446 = sbr.rel (0) target = $region61
    $region60: #{tpu_custom_call.1} parent=1 // pred_region
      %4448 = vsyncadd [#allocation4], 0
      %s4450 = sshll.u32 [#allocation8], 4
      %s4451 = int_to_ptr.vmem [resolvable:$true] %s4450
      %s4452 = sshll.u32 %s11, 4
      %s4453 = int_to_ptr.hbm [resolvable:$true] %s4452
      %4455 = dma.vmem_to_hbm [thread:$0]  %s4451, 16, %s4453, [#allocation4]
    $region61: #{tpu_custom_call.1} parent=1 // pred_fallthru
      _
    // Predicated region
    $region62: #{tpu_custom_call.1} parent=1 // pred_check
      _
    $region63: #{tpu_custom_call.1} parent=1 // pred_check_branch
      %4457 = sbr.rel (0) target = $region65
    $region64: #{tpu_custom_call.1} parent=1 // pred_region
      %4459 = dma.done [#allocation4], 16
    $region65: #{tpu_custom_call.1} parent=1 // pred_fallthru
      _
    %4460 = vsyncpa [#allocation3], 1
    %4461 = vsyncpa [#allocation6], 1
    %4462 = vsyncpa [#allocation4], 1

</llo_original>
